<compile_context>
chip_gen: v6e
topology: v6e:2x2x1
jax: 0.10.0
libtpu: 0.0.40
codegen_flags: <defaults>
</compile_context>

<pallas_src>
import jax
import jax.numpy as jnp
import numpy as np
from jax import lax
from jax.experimental import pallas as pl
from jax.experimental.pallas import tpu as pltpu

C_IN = 64
C_HALF = 32


def _make_kernel(Nb, H, W, Wp, Wout):
    f32 = jnp.float32

    def kernel(x_ref, w_ref, p_ref, o_ref, xs_ref, pool_ref):
        # x_ref:    (Nb, H+2, Wp, 64) bf16  zero-padded NHWC block (pad 1 in H,
        #           left-pad 1 / right-pad Wp-W-1 zeros in W)
        # w_ref:    (6, 64, 32)  f32   rows 0..2 = conv1 H-taps, rows 3..5 =
        #                              conv2 W-taps with BN2 folded in
        # p_ref:    (4, 32)      f32   [b1, bn1_scale, bn1_shift, b2_folded]
        # o_ref:    (Nb, H*Wout, 64) f32  ch 0..31 = branch1, 32..63 = branch2
        # xs_ref:   (Nb, H+2, Wp, 64) f32 scratch (f32 copy of the x block)
        # pool_ref: (Nb*H, Wp, 32)    f32 scratch (branch-1 pre-pool activations)

        # One aligned bf16 -> f32 pass; all later slices / strided reads are on
        # (8,128)-tiled f32 data.
        xs_ref[...] = x_ref[...].astype(f32)

        # ---- branch 1: Conv2d(64->32, k=(3,1), 'same') over the full padded
        # width (extra pad columns are computed and simply never read).
        M1 = Nb * H * Wp

        def tap1(dh):   # leading-dim slice -> layout-preserving collapse
            return xs_ref[:, pl.ds(dh, H), :, :].reshape(M1, C_IN)

        y1 = jnp.dot(tap1(0), w_ref[0], preferred_element_type=f32)
        y1 = y1 + jnp.dot(tap1(1), w_ref[1], preferred_element_type=f32)
        y1 = y1 + jnp.dot(tap1(2), w_ref[2], preferred_element_type=f32)
        y1 = jnp.maximum(y1 + p_ref[0:1, :], 0.0)      # conv1 bias + ReLU
        y1 = y1 * p_ref[1:2, :] + p_ref[2:3, :]        # BatchNorm2d (inference)

        # ---- MaxPool2d k=(1,3), stride=(1,2), pad=(0,1): one aligned store of
        # the full-width activations, -inf only on the pool-pad columns, three
        # stride-2 sublane reads, two vectorized maxes.
        pool_ref[...] = y1.reshape(Nb * H, Wp, C_HALF)
        neg_inf = jnp.full((Nb * H, 1, C_HALF), -jnp.inf, f32)
        pool_ref[:, 0:1, :] = neg_inf                  # left -inf pad (w = -1)
        if W % 2 == 1:                                 # right -inf pad (w = W)
            pool_ref[:, W + 1:W + 2, :] = neg_inf
        left = pool_ref[:, pl.ds(0, Wout, 2), :]       # y1 at w = 2*wo - 1
        center = pool_ref[:, pl.ds(1, Wout, 2), :]     # y1 at w = 2*wo
        right = pool_ref[:, pl.ds(2, Wout, 2), :]      # y1 at w = 2*wo + 1
        out1 = jnp.maximum(jnp.maximum(left, center), right)   # (Nb*H, Wout, 32)

        # ---- branch 2: Conv2d(64->32, k=(1,3), stride=(1,2)) on the W-padded
        # input; BN folded into weights/bias, then ReLU.  Taps are stride-2 reads.
        M2 = Nb * H * Wout

        def tap2(dw):
            return xs_ref[:, pl.ds(1, H), pl.ds(dw, Wout, 2), :].reshape(M2, C_IN)

        y2 = jnp.dot(tap2(0), w_ref[3], preferred_element_type=f32)
        y2 = y2 + jnp.dot(tap2(1), w_ref[4], preferred_element_type=f32)
        y2 = y2 + jnp.dot(tap2(2), w_ref[5], preferred_element_type=f32)
        y2 = jnp.maximum(y2 + p_ref[3:4, :], 0.0)      # folded bias + ReLU

        # ---- single lane-denser store: both branches concatenated on channels.
        cat = jnp.concatenate([out1.reshape(M2, C_HALF), y2], axis=-1)
        o_ref[...] = cat.reshape(Nb, H * Wout, 2 * C_HALF)

    return kernel


def pre_block(x_nchw, params, *, min_steps=4, vmem_budget_bytes=8 * 1024 * 1024):
    """Pallas implementation of _Pre_Block.forward.  x_nchw: (N, 64, H, W)."""
    w1, b1, scale1, shift1, w2, b2, scale2, shift2 = params
    N, C, H, W = x_nchw.shape
    assert C == C_IN
    Wout = (W - 1) // 2 + 1
    Wp = ((W + 2 + 7) // 8) * 8          # padded width, multiple of 8 (f32 tile)

    # Per-image VMEM footprint: bf16 x block + f32 copy + pool scratch + out.
    per_image = ((H + 2) * Wp * C_IN * (2 + 4)
                 + H * Wp * C_HALF * 4
                 + H * Wout * 2 * C_HALF * 4)
    nb_cap = max(1, min(max(1, N // min_steps), vmem_budget_bytes // per_image))
    Nb = 1
    for d in range(1, N + 1):            # largest divisor of N within the cap
        if N % d == 0 and d <= nb_cap:
            Nb = d
    grid = (N // Nb,)

    # NCHW -> NHWC, zero-pad (H: 1,1; W: 1, Wp-W-1), ship to the kernel as bf16.
    # TODO(synk): if the surrounding model can stay NHWC end-to-end, the two
    # wrapper transposes (here and on the output) should be removed entirely.
    x = jnp.transpose(x_nchw, (0, 2, 3, 1))
    xpad = jnp.pad(x, ((0, 0), (1, 1), (1, Wp - W - 1), (0, 0))).astype(jnp.bfloat16)

    # Fold BN2 into conv2 (conv -> BN -> ReLU): w2' = w2*s2, b2' = b2*s2 + t2.
    w2f = w2 * scale2[None, None, :]
    b2f = b2 * scale2 + shift2
    wcat = jnp.concatenate([w1, w2f], axis=0).astype(jnp.float32)        # (6,64,32)
    pcat = jnp.stack([b1, scale1, shift1, b2f], 0).astype(jnp.float32)   # (4,32)

    x_spec = pl.BlockSpec((Nb, H + 2, Wp, C_IN), lambda n: (n, 0, 0, 0))
    w_spec = pl.BlockSpec((6, C_IN, C_HALF), lambda n: (0, 0, 0))
    p_spec = pl.BlockSpec((4, C_HALF), lambda n: (0, 0))
    out_spec = pl.BlockSpec((Nb, H * Wout, 2 * C_HALF), lambda n: (n, 0, 0))

    flops = 2 * C_IN * C_HALF * 3 * N * H * (Wp + Wout)
    bytes_accessed = (2 * N * (H + 2) * Wp * C_IN          # bf16 input
                      + 4 * N * H * Wout * 2 * C_HALF      # f32 output
                      + 4 * (6 * C_IN * C_HALF + 4 * C_HALF))

    out = pl.pallas_call(
        _make_kernel(Nb, H, W, Wp, Wout),
        out_shape=jax.ShapeDtypeStruct((N, H * Wout, 2 * C_HALF), jnp.float32),
        grid=grid,
        in_specs=[x_spec, w_spec, p_spec],
        out_specs=out_spec,
        scratch_shapes=[pltpu.VMEM((Nb, H + 2, Wp, C_IN), jnp.float32),
                        pltpu.VMEM((Nb * H, Wp, C_HALF), jnp.float32)],
        compiler_params=pltpu.CompilerParams(
            dimension_semantics=("parallel",),
            vmem_limit_bytes=32 * 1024 * 1024),
        cost_estimate=pl.CostEstimate(flops=flops, transcendentals=0,
                                      bytes_accessed=bytes_accessed),
    )(xpad, wcat, pcat)

    out = out.reshape(N, H, Wout, 2 * C_HALF)
    return jnp.transpose(out, (0, 3, 1, 2))   # back to NCHW


def reference(x, params):
    """Pure-JAX (XLA) reference reproducing the PyTorch forward in f32."""
    w1, b1, scale1, shift1, w2, b2, scale2, shift2 = params
    W1 = jnp.transpose(w1, (2, 1, 0))[:, :, :, None]   # OIHW (32,64,3,1)
    W2 = jnp.transpose(w2, (2, 1, 0))[:, :, None, :]   # OIHW (32,64,1,3)
    dn = ('NCHW', 'OIHW', 'NCHW')
    hp = lax.Precision.HIGHEST

    y1 = lax.conv_general_dilated(x, W1, (1, 1), ((1, 1), (0, 0)),
                                  dimension_numbers=dn, precision=hp)
    y1 = y1 + b1[None, :, None, None]
    y1 = jnp.maximum(y1, 0.0)
    y1 = y1 * scale1[None, :, None, None] + shift1[None, :, None, None]
    y1 = lax.reduce_window(y1, -jnp.inf, lax.max, (1, 1, 1, 3), (1, 1, 1, 2),
                           ((0, 0), (0, 0), (0, 0), (1, 1)))

    x2 = jnp.pad(x, ((0, 0), (0, 0), (0, 0), (1, 1)))
    y2 = lax.conv_general_dilated(x2, W2, (1, 2), 'VALID',
                                  dimension_numbers=dn, precision=hp)
    y2 = y2 + b2[None, :, None, None]
    y2 = y2 * scale2[None, :, None, None] + shift2[None, :, None, None]
    y2 = jnp.maximum(y2, 0.0)
    return jnp.concatenate([y1, y2], axis=1)


if __name__ == "__main__":
    key = jax.random.PRNGKey(0)
    ks = jax.random.split(key, 16)
    N, H, W = 2, 16, 16
    x = jax.random.normal(ks[0], (N, C_IN, H, W), jnp.float32)

    # conv1 / bn1 params (deterministic synthetic init)
    w1 = 0.05 * jax.random.normal(ks[1], (3, C_IN, C_HALF), jnp.float32)   # [kh, ci, co]
    b1 = 0.05 * jax.random.normal(ks[2], (C_HALF,), jnp.float32)
    g1 = 1.0 + 0.1 * jax.random.normal(ks[3], (C_HALF,), jnp.float32)
    be1 = 0.1 * jax.random.normal(ks[4], (C_HALF,), jnp.float32)
    m1 = 0.1 * jax.random.normal(ks[5], (C_HALF,), jnp.float32)
    v1 = 0.5 + jax.random.uniform(ks[6], (C_HALF,), jnp.float32)

    # conv2 / bn2 params
    w2 = 0.05 * jax.random.normal(ks[7], (3, C_IN, C_HALF), jnp.float32)   # [kw, ci, co]
    b2 = 0.05 * jax.random.normal(ks[8], (C_HALF,), jnp.float32)
    g2 = 1.0 + 0.1 * jax.random.normal(ks[9], (C_HALF,), jnp.float32)
    be2 = 0.1 * jax.random.normal(ks[10], (C_HALF,), jnp.float32)
    m2 = 0.1 * jax.random.normal(ks[11], (C_HALF,), jnp.float32)
    v2 = 0.5 + jax.random.uniform(ks[12], (C_HALF,), jnp.float32)

    # TODO(synk): BatchNorm2d is implemented in inference mode only (running
    # stats folded into per-channel scale/shift); training-mode batch
    # statistics are not computed in the kernel.
    eps = 1e-5
    scale1 = g1 / jnp.sqrt(v1 + eps)
    shift1 = be1 - m1 * scale1
    scale2 = g2 / jnp.sqrt(v2 + eps)
    shift2 = be2 - m2 * scale2
    params = (w1, b1, scale1, shift1, w2, b2, scale2, shift2)

    out = jax.block_until_ready(pre_block(x, params))
    assert out.shape == (N, 2 * C_HALF, H, (W - 1) // 2 + 1), out.shape

    ref = jax.block_until_ready(reference(x, params))
    # Tolerance covers the bf16 quantization of the x block (HBM-bytes
    # optimization) and the default TPU matmul precision used in the kernel.
    np.testing.assert_allclose(np.asarray(out), np.asarray(ref),
                               rtol=2e-2, atol=2e-2)
    print("KERNEL_OK")
</pallas_src>

<mosaic_0001>
module attributes {stable_mosaic.version = 11 : i64} {
  func.func @kernel(%arg0: i32, %arg1: memref<1x18x24x64xbf16, #tpu.memory_space<vmem>>, %arg2: memref<6x64x32xf32, #tpu.memory_space<vmem>>, %arg3: memref<4x32xf32, #tpu.memory_space<vmem>>, %arg4: memref<1x128x64xf32, #tpu.memory_space<vmem>>, %arg5: memref<1x18x24x64xf32, #tpu.memory_space<vmem>>, %arg6: memref<16x24x32xf32, #tpu.memory_space<vmem>>) attributes {dimension_semantics = [#tpu.dimension_semantics<parallel>], iteration_bounds = array<i64: 2>, scalar_prefetch = 0 : i64, scratch_operands = 2 : i64, tpu.core_type = #tpu.core_type<tc>, window_params = [{transform_indices = @transform_0, window_bounds = array<i64: 1, 18, 24, 64>}, {pipeline_mode = #tpu.pipeline_mode<synchronous>, transform_indices = @transform_1, window_bounds = array<i64: 6, 64, 32>}, {pipeline_mode = #tpu.pipeline_mode<synchronous>, transform_indices = @transform_2, window_bounds = array<i64: 4, 32>}, {transform_indices = @transform_3, window_bounds = array<i64: 1, 128, 64>}]} {
    %c0 = arith.constant 0 : index
    %c0_0 = arith.constant 0 : index
    %c0_1 = arith.constant 0 : index
    %c0_2 = arith.constant 0 : index
    %0 = vector.load %arg1[%c0, %c0_0, %c0_1, %c0_2] : memref<1x18x24x64xbf16, #tpu.memory_space<vmem>>, vector<1x18x24x64xbf16>
    %1 = arith.extf %0 : vector<1x18x24x64xbf16> to vector<1x18x24x64xf32>
    %c0_3 = arith.constant 0 : index
    %c0_4 = arith.constant 0 : index
    %c0_5 = arith.constant 0 : index
    %c0_6 = arith.constant 0 : index
    %2 = vector.load %arg5[%c0_3, %c0_4, %c0_5, %c0_6] : memref<1x18x24x64xf32, #tpu.memory_space<vmem>>, vector<1x18x24x64xf32>
    tpu.vector_store %arg5[%c0_3, %c0_4, %c0_5, %c0_6], %1 {strides = array<i32>} : memref<1x18x24x64xf32, #tpu.memory_space<vmem>>, vector<1x18x24x64xf32>,
    %c0_7 = arith.constant 0 : index
    %c0_8 = arith.constant 0 : index
    %c0_9 = arith.constant 0 : index
    %c0_10 = arith.constant 0 : index
    %3 = vector.load %arg5[%c0_7, %c0_8, %c0_9, %c0_10] : memref<1x18x24x64xf32, #tpu.memory_space<vmem>>, vector<1x16x24x64xf32>
    %4 = vector.shape_cast %3 : vector<1x16x24x64xf32> to vector<384x64xf32>
    %c0_11 = arith.constant 0 : index
    %c0_12 = arith.constant 0 : index
    %c0_13 = arith.constant 0 : index
    %5 = vector.load %arg2[%c0_11, %c0_12, %c0_13] : memref<6x64x32xf32, #tpu.memory_space<vmem>>, vector<1x64x32xf32>
    %6 = vector.shape_cast %5 : vector<1x64x32xf32> to vector<64x32xf32>
    %cst = arith.constant dense<0.000000e+00> : vector<384x32xf32>
    %7 = tpu.matmul %4, %6, %cst {dimension_numbers = #tpu.dot_dimension_numbers<[1], [0], [0], [1], [0, 0, 1, 1], [], []>} : vector<384x64xf32>, vector<64x32xf32>, vector<384x32xf32> -> vector<384x32xf32>
    %c0_14 = arith.constant 0 : index
    %c1 = arith.constant 1 : index
    %c0_15 = arith.constant 0 : index
    %c0_16 = arith.constant 0 : index
    %8 = vector.load %arg5[%c0_14, %c1, %c0_15, %c0_16] : memref<1x18x24x64xf32, #tpu.memory_space<vmem>>, vector<1x16x24x64xf32>
    %9 = vector.shape_cast %8 : vector<1x16x24x64xf32> to vector<384x64xf32>
    %c1_17 = arith.constant 1 : index
    %c0_18 = arith.constant 0 : index
    %c0_19 = arith.constant 0 : index
    %10 = vector.load %arg2[%c1_17, %c0_18, %c0_19] : memref<6x64x32xf32, #tpu.memory_space<vmem>>, vector<1x64x32xf32>
    %11 = vector.shape_cast %10 : vector<1x64x32xf32> to vector<64x32xf32>
    %cst_20 = arith.constant dense<0.000000e+00> : vector<384x32xf32>
    %12 = tpu.matmul %9, %11, %cst_20 {dimension_numbers = #tpu.dot_dimension_numbers<[1], [0], [0], [1], [0, 0, 1, 1], [], []>} : vector<384x64xf32>, vector<64x32xf32>, vector<384x32xf32> -> vector<384x32xf32>
    %13 = arith.addf %7, %12 : vector<384x32xf32>
    %c0_21 = arith.constant 0 : index
    %c2 = arith.constant 2 : index
    %c0_22 = arith.constant 0 : index
    %c0_23 = arith.constant 0 : index
    %14 = vector.load %arg5[%c0_21, %c2, %c0_22, %c0_23] : memref<1x18x24x64xf32, #tpu.memory_space<vmem>>, vector<1x16x24x64xf32>
    %15 = vector.shape_cast %14 : vector<1x16x24x64xf32> to vector<384x64xf32>
    %c2_24 = arith.constant 2 : index
    %c0_25 = arith.constant 0 : index
    %c0_26 = arith.constant 0 : index
    %16 = vector.load %arg2[%c2_24, %c0_25, %c0_26] : memref<6x64x32xf32, #tpu.memory_space<vmem>>, vector<1x64x32xf32>
    %17 = vector.shape_cast %16 : vector<1x64x32xf32> to vector<64x32xf32>
    %cst_27 = arith.constant dense<0.000000e+00> : vector<384x32xf32>
    %18 = tpu.matmul %15, %17, %cst_27 {dimension_numbers = #tpu.dot_dimension_numbers<[1], [0], [0], [1], [0, 0, 1, 1], [], []>} : vector<384x64xf32>, vector<64x32xf32>, vector<384x32xf32> -> vector<384x32xf32>
    %19 = arith.addf %13, %18 : vector<384x32xf32>
    %c0_28 = arith.constant 0 : index
    %c0_29 = arith.constant 0 : index
    %20 = vector.load %arg3[%c0_28, %c0_29] : memref<4x32xf32, #tpu.memory_space<vmem>>, vector<1x32xf32>
    %21 = vector.broadcast %20 : vector<1x32xf32> to vector<384x32xf32>
    %22 = arith.addf %19, %21 : vector<384x32xf32>
    %cst_30 = arith.constant 0.000000e+00 : f32
    %23 = vector.broadcast %cst_30 : f32 to vector<384x32xf32>
    %24 = arith.maximumf %22, %23 : vector<384x32xf32>
    %c1_31 = arith.constant 1 : index
    %c0_32 = arith.constant 0 : index
    %25 = vector.load %arg3[%c1_31, %c0_32] : memref<4x32xf32, #tpu.memory_space<vmem>>, vector<1x32xf32>
    %26 = vector.broadcast %25 : vector<1x32xf32> to vector<384x32xf32>
    %27 = arith.mulf %24, %26 : vector<384x32xf32>
    %c2_33 = arith.constant 2 : index
    %c0_34 = arith.constant 0 : index
    %28 = vector.load %arg3[%c2_33, %c0_34] : memref<4x32xf32, #tpu.memory_space<vmem>>, vector<1x32xf32>
    %29 = vector.broadcast %28 : vector<1x32xf32> to vector<384x32xf32>
    %30 = arith.addf %27, %29 : vector<384x32xf32>
    %31 = vector.shape_cast %30 : vector<384x32xf32> to vector<16x24x32xf32>
    %c0_35 = arith.constant 0 : index
    %c0_36 = arith.constant 0 : index
    %c0_37 = arith.constant 0 : index
    %32 = vector.load %arg6[%c0_35, %c0_36, %c0_37] : memref<16x24x32xf32, #tpu.memory_space<vmem>>, vector<16x24x32xf32>
    tpu.vector_store %arg6[%c0_35, %c0_36, %c0_37], %31 {strides = array<i32>} : memref<16x24x32xf32, #tpu.memory_space<vmem>>, vector<16x24x32xf32>,
    %cst_38 = arith.constant 0xFF800000 : f32
    %33 = vector.broadcast %cst_38 : f32 to vector<16x1x32xf32>
    %c0_39 = arith.constant 0 : index
    %c0_40 = arith.constant 0 : index
    %c0_41 = arith.constant 0 : index
    %34 = vector.load %arg6[%c0_39, %c0_40, %c0_41] : memref<16x24x32xf32, #tpu.memory_space<vmem>>, vector<16x1x32xf32>
    tpu.vector_store %arg6[%c0_39, %c0_40, %c0_41], %33 {strides = array<i32>} : memref<16x24x32xf32, #tpu.memory_space<vmem>>, vector<16x1x32xf32>,
    %c0_42 = arith.constant 0 : index
    %c0_43 = arith.constant 0 : index
    %c0_44 = arith.constant 0 : index
    %35 = tpu.strided_load %arg6[%c0_42, %c0_43, %c0_44] {strides = array<i32: 1, 2, 1>} : memref<16x24x32xf32, #tpu.memory_space<vmem>>, vector<16x8x32xf32>
    %c0_45 = arith.constant 0 : index
    %c1_46 = arith.constant 1 : index
    %c0_47 = arith.constant 0 : index
    %36 = tpu.strided_load %arg6[%c0_45, %c1_46, %c0_47] {strides = array<i32: 1, 2, 1>} : memref<16x24x32xf32, #tpu.memory_space<vmem>>, vector<16x8x32xf32>
    %c0_48 = arith.constant 0 : index
    %c2_49 = arith.constant 2 : index
    %c0_50 = arith.constant 0 : index
    %37 = tpu.strided_load %arg6[%c0_48, %c2_49, %c0_50] {strides = array<i32: 1, 2, 1>} : memref<16x24x32xf32, #tpu.memory_space<vmem>>, vector<16x8x32xf32>
    %38 = arith.maximumf %35, %36 : vector<16x8x32xf32>
    %39 = arith.maximumf %38, %37 : vector<16x8x32xf32>
    %c0_51 = arith.constant 0 : index
    %c1_52 = arith.constant 1 : index
    %c0_53 = arith.constant 0 : index
    %c0_54 = arith.constant 0 : index
    %40 = tpu.strided_load %arg5[%c0_51, %c1_52, %c0_53, %c0_54] {strides = array<i32: 1, 1, 2, 1>} : memref<1x18x24x64xf32, #tpu.memory_space<vmem>>, vector<1x16x8x64xf32>
    %41 = vector.shape_cast %40 : vector<1x16x8x64xf32> to vector<128x64xf32>
    %c3 = arith.constant 3 : index
    %c0_55 = arith.constant 0 : index
    %c0_56 = arith.constant 0 : index
    %42 = vector.load %arg2[%c3, %c0_55, %c0_56] : memref<6x64x32xf32, #tpu.memory_space<vmem>>, vector<1x64x32xf32>
    %43 = vector.shape_cast %42 : vector<1x64x32xf32> to vector<64x32xf32>
    %cst_57 = arith.constant dense<0.000000e+00> : vector<128x32xf32>
    %44 = tpu.matmul %41, %43, %cst_57 {dimension_numbers = #tpu.dot_dimension_numbers<[1], [0], [0], [1], [0, 0, 1, 1], [], []>} : vector<128x64xf32>, vector<64x32xf32>, vector<128x32xf32> -> vector<128x32xf32>
    %c0_58 = arith.constant 0 : index
    %c1_59 = arith.constant 1 : index
    %c1_60 = arith.constant 1 : index
    %c0_61 = arith.constant 0 : index
    %45 = tpu.strided_load %arg5[%c0_58, %c1_59, %c1_60, %c0_61] {strides = array<i32: 1, 1, 2, 1>} : memref<1x18x24x64xf32, #tpu.memory_space<vmem>>, vector<1x16x8x64xf32>
    %46 = vector.shape_cast %45 : vector<1x16x8x64xf32> to vector<128x64xf32>
    %c4 = arith.constant 4 : index
    %c0_62 = arith.constant 0 : index
    %c0_63 = arith.constant 0 : index
    %47 = vector.load %arg2[%c4, %c0_62, %c0_63] : memref<6x64x32xf32, #tpu.memory_space<vmem>>, vector<1x64x32xf32>
    %48 = vector.shape_cast %47 : vector<1x64x32xf32> to vector<64x32xf32>
    %cst_64 = arith.constant dense<0.000000e+00> : vector<128x32xf32>
    %49 = tpu.matmul %46, %48, %cst_64 {dimension_numbers = #tpu.dot_dimension_numbers<[1], [0], [0], [1], [0, 0, 1, 1], [], []>} : vector<128x64xf32>, vector<64x32xf32>, vector<128x32xf32> -> vector<128x32xf32>
    %50 = arith.addf %44, %49 : vector<128x32xf32>
    %c0_65 = arith.constant 0 : index
    %c1_66 = arith.constant 1 : index
    %c2_67 = arith.constant 2 : index
    %c0_68 = arith.constant 0 : index
    %51 = tpu.strided_load %arg5[%c0_65, %c1_66, %c2_67, %c0_68] {strides = array<i32: 1, 1, 2, 1>} : memref<1x18x24x64xf32, #tpu.memory_space<vmem>>, vector<1x16x8x64xf32>
    %52 = vector.shape_cast %51 : vector<1x16x8x64xf32> to vector<128x64xf32>
    %c5 = arith.constant 5 : index
    %c0_69 = arith.constant 0 : index
    %c0_70 = arith.constant 0 : index
    %53 = vector.load %arg2[%c5, %c0_69, %c0_70] : memref<6x64x32xf32, #tpu.memory_space<vmem>>, vector<1x64x32xf32>
    %54 = vector.shape_cast %53 : vector<1x64x32xf32> to vector<64x32xf32>
    %cst_71 = arith.constant dense<0.000000e+00> : vector<128x32xf32>
    %55 = tpu.matmul %52, %54, %cst_71 {dimension_numbers = #tpu.dot_dimension_numbers<[1], [0], [0], [1], [0, 0, 1, 1], [], []>} : vector<128x64xf32>, vector<64x32xf32>, vector<128x32xf32> -> vector<128x32xf32>
    %56 = arith.addf %50, %55 : vector<128x32xf32>
    %c3_72 = arith.constant 3 : index
    %c0_73 = arith.constant 0 : index
    %57 = vector.load %arg3[%c3_72, %c0_73] : memref<4x32xf32, #tpu.memory_space<vmem>>, vector<1x32xf32>
    %58 = vector.broadcast %57 : vector<1x32xf32> to vector<128x32xf32>
    %59 = arith.addf %56, %58 : vector<128x32xf32>
    %cst_74 = arith.constant 0.000000e+00 : f32
    %60 = vector.broadcast %cst_74 : f32 to vector<128x32xf32>
    %61 = arith.maximumf %59, %60 : vector<128x32xf32>
    %62 = vector.shape_cast %39 : vector<16x8x32xf32> to vector<128x32xf32>
    %63 = tpu.concatenate %62, %61 in 1 : vector<128x32xf32>, vector<128x32xf32> -> vector<128x64xf32>
    %64 = vector.shape_cast %63 : vector<128x64xf32> to vector<1x128x64xf32>
    %c0_75 = arith.constant 0 : index
    %c0_76 = arith.constant 0 : index
    %c0_77 = arith.constant 0 : index
    %65 = vector.load %arg4[%c0_75, %c0_76, %c0_77] : memref<1x128x64xf32, #tpu.memory_space<vmem>>, vector<1x128x64xf32>
    tpu.vector_store %arg4[%c0_75, %c0_76, %c0_77], %64 {strides = array<i32>} : memref<1x128x64xf32, #tpu.memory_space<vmem>>, vector<1x128x64xf32>,
    return
  }
  func.func @transform_0(%arg0: i32) -> (i32, i32, i32, i32) {
    %c0_i32 = arith.constant 0 : i32
    %c0_i32_0 = arith.constant 0 : i32
    %c0_i32_1 = arith.constant 0 : i32
    %c0_i32_2 = arith.constant 0 : i32
    return %arg0, %c0_i32, %c0_i32_0, %c0_i32_1 : i32, i32, i32, i32
  }
  func.func @transform_1(%arg0: i32) -> (i32, i32, i32) {
    %c0_i32 = arith.constant 0 : i32
    %c0_i32_0 = arith.constant 0 : i32
    %c0_i32_1 = arith.constant 0 : i32
    %c0_i32_2 = arith.constant 0 : i32
    return %c0_i32, %c0_i32_0, %c0_i32_1 : i32, i32, i32
  }
  func.func @transform_2(%arg0: i32) -> (i32, i32) {
    %c0_i32 = arith.constant 0 : i32
    %c0_i32_0 = arith.constant 0 : i32
    %c0_i32_1 = arith.constant 0 : i32
    return %c0_i32, %c0_i32_0 : i32, i32
  }
  func.func @transform_3(%arg0: i32) -> (i32, i32, i32) {
    %c0_i32 = arith.constant 0 : i32
    %c0_i32_0 = arith.constant 0 : i32
    %c0_i32_1 = arith.constant 0 : i32
    return %arg0, %c0_i32, %c0_i32_0 : i32, i32, i32
  }
}

</mosaic_0001>

<llo_original>
// kernel: tpu_custom_call.1
$region0: #{tpu_custom_call.1}
  #allocation0 [shape = 'u32[]', space=smem, size = 0x4, offset = 0x4, fixed_abs, tag = 'smem constant byte address 0x4 - core index']
  #allocation1 [shape = 'u32[144,128]{1,0:T(1,128)}', space=vmem, size = 0x12000, scoped, tag = 'internal scratch']
  #allocation2 [shape = 'f32[1,18,24,64]{3,2,1,0:T(8,128)}', space=vmem, size = 0x36000, scoped, tag = 'scratch operand']
  #allocation3 [shape = 'f32[16,24,32]{2,1,0:T(8,128)}', space=vmem, size = 0x30000, scoped, tag = 'scratch operand']
  %s0 = inlined_call_operand.vmem [shape: bf16[2,18,24,64], index: 0, kind: input, shape index: {}]
  %s1 = inlined_call_operand.vmem [shape: f32[6,64,32], index: 1, kind: input, shape index: {}]
  %s2 = inlined_call_operand.vmem [shape: f32[4,32], index: 2, kind: input, shape index: {}]
  %s3 = inlined_call_operand.vmem [shape: f32[2,128,64], index: 3, kind: output, shape index: {}]
  %s4 = sld [smem:[#allocation0]]
  $region45: #{tpu_custom_call.1} parent=0
    _
  %s6 = ssub.s32 1, %s4
  %s7 = scalar_select 0, %s6, %s4
  loop: start=0, step=1, limit=4
  $region2: #{tpu_custom_call.1} parent=0 // loop_pre_header
    _
  $region3: #{tpu_custom_call.1} parent=0 // loop_header
    %s9 = sphi 0, %s13
    %p10 = scmp.ge.s32.totalorder %s9, 4
    %s19 = sphi 0, %s21
    %s22 = sphi 0, %s19
    %s23 = sphi 0, %s22
    %s39 = sphi 0, %s23
    %s43 = sphi 0, %s43
    %s45 = sphi 0, %s43
    %s46 = sphi 0, %s45
    %s60 = sphi 0, %s46
    %s64 = sphi 0, %s64
    %s66 = sphi 0, %s64
    %s67 = sphi 0, %s66
    %s81 = sphi 0, %s67
    %s87 = sphi 0, %s89
    %s90 = sphi 0, %s87
    %s91 = sphi 0, %s90
    %s107 = sphi 0, %s91
  $region4: #{tpu_custom_call.1} parent=0 // loop_header_branch
    %12 = sbr.rel (%p10) target = $region8
  $region5: #{tpu_custom_call.1} parent=0 // loop_body
    %s14 = ssub.s32 %s9, 1
    %s15 = ssub.s32 %s9, 2
    %s16 = sadd.s32 %s9, 1
    %s17 = ssub.s32 %s9, %s16
    %p18 = scmp.eq.s32.totalorder %s17, 0
    %s20 = sadd.s32 %s19, 1
    %s21 = scalar_select %p18, %s19, %s20
    %p24 = pneg %p18
    %p25 = scmp.eq.s32.totalorder %s9, 1
    %p26 = por %p24, %p25
    %p27 = scmp.ne.s32.totalorder %s19, %s22
    %p28 = scmp.eq.s32.totalorder %s9, 0
    %p29 = por %p27, %p28
    %p30 = scmp.ne.s32.totalorder %s19, %s22
    %p31 = scmp.eq.s32.totalorder %s14, 1
    %p32 = por %p30, %p31
    %p33 = scmp.ne.s32.totalorder %s22, %s23
    %p34 = scmp.eq.s32.totalorder %s14, 0
    %p35 = por %p33, %p34
    %p36 = scmp.ne.s32.totalorder %s22, %s23
    %p37 = scmp.eq.s32.totalorder %s15, 1
    %p38 = por %p36, %p37
    %p40 = scmp.ne.s32.totalorder %s23, %s39
    %p41 = scmp.eq.s32.totalorder %s15, 0
    %p42 = por %p40, %p41
    %s44 = sadd.s32 %s43, 1
    %p47 = scmp.eq.s32.totalorder %s9, 1
    %p48 = scmp.ne.s32.totalorder %s43, %s45
    %p49 = scmp.eq.s32.totalorder %s9, 0
    %p50 = por %p48, %p49
    %p51 = scmp.ne.s32.totalorder %s43, %s45
    %p52 = scmp.eq.s32.totalorder %s14, 1
    %p53 = por %p51, %p52
    %p54 = scmp.ne.s32.totalorder %s45, %s46
    %p55 = scmp.eq.s32.totalorder %s14, 0
    %p56 = por %p54, %p55
    %p57 = scmp.ne.s32.totalorder %s45, %s46
    %p58 = scmp.eq.s32.totalorder %s15, 1
    %p59 = por %p57, %p58
    %p61 = scmp.ne.s32.totalorder %s46, %s60
    %p62 = scmp.eq.s32.totalorder %s15, 0
    %p63 = por %p61, %p62
    %s65 = sadd.s32 %s64, 1
    %p68 = scmp.eq.s32.totalorder %s9, 1
    %p69 = scmp.ne.s32.totalorder %s64, %s66
    %p70 = scmp.eq.s32.totalorder %s9, 0
    %p71 = por %p69, %p70
    %p72 = scmp.ne.s32.totalorder %s64, %s66
    %p73 = scmp.eq.s32.totalorder %s14, 1
    %p74 = por %p72, %p73
    %p75 = scmp.ne.s32.totalorder %s66, %s67
    %p76 = scmp.eq.s32.totalorder %s14, 0
    %p77 = por %p75, %p76
    %p78 = scmp.ne.s32.totalorder %s66, %s67
    %p79 = scmp.eq.s32.totalorder %s15, 1
    %p80 = por %p78, %p79
    %p82 = scmp.ne.s32.totalorder %s67, %s81
    %p83 = scmp.eq.s32.totalorder %s15, 0
    %p84 = por %p82, %p83
    %s85 = ssub.s32 %s9, %s16
    %p86 = scmp.eq.s32.totalorder %s85, 0
    %s88 = sadd.s32 %s87, 1
    %s89 = scalar_select %p86, %s87, %s88
    %p92 = pneg %p86
    %p93 = scmp.eq.s32.totalorder %s9, 1
    %p94 = por %p92, %p93
    %p95 = scmp.ne.s32.totalorder %s87, %s90
    %p96 = scmp.eq.s32.totalorder %s9, 0
    %p97 = por %p95, %p96
    %p98 = scmp.ne.s32.totalorder %s87, %s90
    %p99 = scmp.eq.s32.totalorder %s14, 1
    %p100 = por %p98, %p99
    %p101 = scmp.ne.s32.totalorder %s90, %s91
    %p102 = scmp.eq.s32.totalorder %s14, 0
    %p103 = por %p101, %p102
    %p104 = scmp.ne.s32.totalorder %s90, %s91
    %p105 = scmp.eq.s32.totalorder %s15, 1
    %p106 = por %p104, %p105
    %p108 = scmp.ne.s32.totalorder %s91, %s107
    %p109 = scmp.eq.s32.totalorder %s15, 0
    %p110 = por %p108, %p109
    %p111 = scmp.le.s32.totalorder 1, %s9
    %p112 = scmp.lt.s32.totalorder %s9, 3
    %p113 = pnand %p111, %p112
    %p114 = pneg %p113
    // Predicated region
    $region9: #{tpu_custom_call.1} parent=5 // pred_check
      _
    $region10: #{tpu_custom_call.1} parent=5 // pred_check_branch
      %116 = sbr.rel (%p113) target = $region12
    $region11: #{tpu_custom_call.1} parent=5 // pred_region
      %s117 = ssub.s32 %s9, 1
      // Predicated region
      $region13: #{tpu_custom_call.1} parent=11 // pred_check
        %p118 = pneg %p56
      $region14: #{tpu_custom_call.1} parent=11 // pred_check_branch
        %120 = sbr.rel (%p118) target = $region16
      $region15: #{tpu_custom_call.1} parent=11 // pred_region
        _
      $region16: #{tpu_custom_call.1} parent=11 // pred_fallthru
        _
      // Predicated region
      $region17: #{tpu_custom_call.1} parent=11 // pred_check
        %p121 = pneg %p77
      $region18: #{tpu_custom_call.1} parent=11 // pred_check_branch
        %123 = sbr.rel (%p121) target = $region20
      $region19: #{tpu_custom_call.1} parent=11 // pred_region
        _
      $region20: #{tpu_custom_call.1} parent=11 // pred_fallthru
        _
    $region12: #{tpu_custom_call.1} parent=5 // pred_fallthru
      _
    %p124 = scmp.lt.s32.totalorder %s9, 2
    // Predicated region
    $region21: #{tpu_custom_call.1} parent=5 // pred_check
      %p125 = pneg %p124
    $region22: #{tpu_custom_call.1} parent=5 // pred_check_branch
      %127 = sbr.rel (%p125) target = $region24
    $region23: #{tpu_custom_call.1} parent=5 // pred_region
      // Predicated region
      $region25: #{tpu_custom_call.1} parent=23 // pred_check
        %p128 = pneg %p29
      $region26: #{tpu_custom_call.1} parent=23 // pred_check_branch
        %130 = sbr.rel (%p128) target = $region28
      $region27: #{tpu_custom_call.1} parent=23 // pred_region
        %p131 = scmp.lt.s32.totalorder %s9, 1
        %s132 = scalar_select %p131, %s9, 1
        %s133 = smul.addr %s132, 54
        %s134 = smul.addr %s133, 4
        %s135 = scalar_lea.vmem %s0, %s134
      $region28: #{tpu_custom_call.1} parent=23 // pred_fallthru
        _
    $region24: #{tpu_custom_call.1} parent=5 // pred_fallthru
      _
    %p136 = scmp.le.s32.totalorder 1, %s9
    %p137 = scmp.lt.s32.totalorder %s9, 3
    %p138 = pnand %p136, %p137
    %p139 = pneg %p138
    // Predicated region
    $region29: #{tpu_custom_call.1} parent=5 // pred_check
      _
    $region30: #{tpu_custom_call.1} parent=5 // pred_check_branch
      %141 = sbr.rel (%p138) target = $region32
    $region31: #{tpu_custom_call.1} parent=5 // pred_region
      %s142 = ssub.s32 %s9, 1
      %p143 = scmp.lt.s32.totalorder %s14, 1
      %s144 = scalar_select %p143, %s14, 1
      %s145 = smul.addr %s144, 54
      %s146 = smul.addr %s145, 4
      %s147 = scalar_lea.vmem %s0, %s146
      %p148 = pneg %p35
      %p149 = pneg %p32
      %p150 = pneg %p56
      %p151 = pneg %p53
      %p152 = pneg %p77
      %p153 = pneg %p74
      %p154 = pneg %p103
      %p155 = pneg %p100
      %p156 = scmp.lt.s32.totalorder %s14, 1
      %s157 = scalar_select %p156, %s14, 1
      %s158 = smul.addr %s157, 16
      %s159 = smul.addr %s158, 8
      %s160 = scalar_lea.vmem %s3, %s159
      %p161 = scmp.lt.s32.totalorder %s14, 1
      %s162 = scalar_select %p161, %s14, 1
      %s163 = smul.addr %s162, 54
      %s164 = smul.addr %s163, 4
      %s165 = scalar_lea.vmem %s0, %s164
      %p166 = scmp.lt.s32.totalorder %s14, 1
      %s167 = scalar_select %p166, %s14, 1
      %s168 = smul.addr %s167, 16
      %s169 = smul.addr %s168, 8
      %s170 = scalar_lea.vmem %s3, %s169
      %v171 = vld [vmem:[%s165] sm:$0xf]
      %v172 = vld [vmem:[%s165 + $0x4] sm:$0xf]
      %v173 = vld [vmem:[%s165 + $0x8] sm:$0xf]
      %v174 = vld [vmem:[%s165 + $0xc] sm:$0xf]
      %v175 = vld [vmem:[%s165 + $0x10] sm:$0xf]
      %v176 = vld [vmem:[%s165 + $0x14] sm:$0xf]
      %v177 = vld [vmem:[%s165 + $0x18] sm:$0xf]
      %v178 = vld [vmem:[%s165 + $0x1c] sm:$0xf]
      %v179 = vld [vmem:[%s165 + $0x20] sm:$0xf]
      %v180 = vld [vmem:[%s165 + $0x24] sm:$0xf]
      %v181 = vld [vmem:[%s165 + $0x28] sm:$0xf]
      %v182 = vld [vmem:[%s165 + $0x2c] sm:$0xf]
      %v183 = vld [vmem:[%s165 + $0x30] sm:$0xf]
      %v184 = vld [vmem:[%s165 + $0x34] sm:$0xf]
      %v185 = vld [vmem:[%s165 + $0x38] sm:$0xf]
      %v186 = vld [vmem:[%s165 + $0x3c] sm:$0xf]
      %v187 = vld [vmem:[%s165 + $0x40] sm:$0xf]
      %v188 = vld [vmem:[%s165 + $0x44] sm:$0xf]
      %v189 = vld [vmem:[%s165 + $0x48] sm:$0xf]
      %v190 = vld [vmem:[%s165 + $0x4c] sm:$0xf]
      %v191 = vld [vmem:[%s165 + $0x50] sm:$0xf]
      %v192 = vld [vmem:[%s165 + $0x54] sm:$0xf]
      %v193 = vld [vmem:[%s165 + $0x58] sm:$0xf]
      %v194 = vld [vmem:[%s165 + $0x5c] sm:$0xf]
      %v195 = vld [vmem:[%s165 + $0x60] sm:$0xf]
      %v196 = vld [vmem:[%s165 + $0x64] sm:$0xf]
      %v197 = vld [vmem:[%s165 + $0x68] sm:$0xf]
      %v198 = vld [vmem:[%s165 + $0x6c] sm:$0xf]
      %v199 = vld [vmem:[%s165 + $0x70] sm:$0xf]
      %v200 = vld [vmem:[%s165 + $0x74] sm:$0xf]
      %v201 = vld [vmem:[%s165 + $0x78] sm:$0xf]
      %v202 = vld [vmem:[%s165 + $0x7c] sm:$0xf]
      %v203 = vld [vmem:[%s165 + $0x80] sm:$0xf]
      %v204 = vld [vmem:[%s165 + $0x84] sm:$0xf]
      %v205 = vld [vmem:[%s165 + $0x88] sm:$0xf]
      %v206 = vld [vmem:[%s165 + $0x8c] sm:$0xf]
      %v207 = vld [vmem:[%s165 + $0x90] sm:$0xf]
      %v208 = vld [vmem:[%s165 + $0x94] sm:$0xf]
      %v209 = vld [vmem:[%s165 + $0x98] sm:$0xf]
      %v210 = vld [vmem:[%s165 + $0x9c] sm:$0xf]
      %v211 = vld [vmem:[%s165 + $0xa0] sm:$0xf]
      %v212 = vld [vmem:[%s165 + $0xa4] sm:$0xf]
      %v213 = vld [vmem:[%s165 + $0xa8] sm:$0xf]
      %v214 = vld [vmem:[%s165 + $0xac] sm:$0xf]
      %v215 = vld [vmem:[%s165 + $0xb0] sm:$0xf]
      %v216 = vld [vmem:[%s165 + $0xb4] sm:$0xf]
      %v217 = vld [vmem:[%s165 + $0xb8] sm:$0xf]
      %v218 = vld [vmem:[%s165 + $0xbc] sm:$0xf]
      %v219 = vld [vmem:[%s165 + $0xc0] sm:$0xf]
      %v220 = vld [vmem:[%s165 + $0xc4] sm:$0xf]
      %v221 = vld [vmem:[%s165 + $0xc8] sm:$0xf]
      %v222 = vld [vmem:[%s165 + $0xcc] sm:$0xf]
      %v223 = vld [vmem:[%s165 + $0xd0] sm:$0xf]
      %v224 = vld [vmem:[%s165 + $0xd4] sm:$0xf]
      %v225 = vunpack.c.l.bf16 %v171
      %v226 = vunpack.c.l.bf16 %v172
      %v227 = vunpack.c.l.bf16 %v173
      %v228 = vunpack.c.l.bf16 %v174
      %v229 = vunpack.c.l.bf16 %v175
      %v230 = vunpack.c.l.bf16 %v176
      %v231 = vunpack.c.l.bf16 %v177
      %v232 = vunpack.c.l.bf16 %v178
      %v233 = vunpack.c.l.bf16 %v179
      %v234 = vunpack.c.l.bf16 %v180
      %v235 = vunpack.c.l.bf16 %v181
      %v236 = vunpack.c.l.bf16 %v182
      %v237 = vunpack.c.l.bf16 %v183
      %v238 = vunpack.c.l.bf16 %v184
      %v239 = vunpack.c.l.bf16 %v185
      %v240 = vunpack.c.l.bf16 %v186
      %v241 = vunpack.c.l.bf16 %v187
      %v242 = vunpack.c.l.bf16 %v188
      %v243 = vunpack.c.l.bf16 %v189
      %v244 = vunpack.c.l.bf16 %v190
      %v245 = vunpack.c.l.bf16 %v191
      %v246 = vunpack.c.l.bf16 %v192
      %v247 = vunpack.c.l.bf16 %v193
      %v248 = vunpack.c.l.bf16 %v194
      %v249 = vunpack.c.l.bf16 %v195
      %v250 = vunpack.c.l.bf16 %v196
      %v251 = vunpack.c.l.bf16 %v197
      %v252 = vunpack.c.l.bf16 %v198
      %v253 = vunpack.c.l.bf16 %v199
      %v254 = vunpack.c.l.bf16 %v200
      %v255 = vunpack.c.l.bf16 %v201
      %v256 = vunpack.c.l.bf16 %v202
      %v257 = vunpack.c.l.bf16 %v203
      %v258 = vunpack.c.l.bf16 %v204
      %v259 = vunpack.c.l.bf16 %v205
      %v260 = vunpack.c.l.bf16 %v206
      %v261 = vunpack.c.l.bf16 %v207
      %v262 = vunpack.c.l.bf16 %v208
      %v263 = vunpack.c.l.bf16 %v209
      %v264 = vunpack.c.l.bf16 %v210
      %v265 = vunpack.c.l.bf16 %v211
      %v266 = vunpack.c.l.bf16 %v212
      %v267 = vunpack.c.l.bf16 %v213
      %v268 = vunpack.c.l.bf16 %v214
      %v269 = vunpack.c.l.bf16 %v215
      %v270 = vunpack.c.l.bf16 %v216
      %v271 = vunpack.c.l.bf16 %v217
      %v272 = vunpack.c.l.bf16 %v218
      %v273 = vunpack.c.l.bf16 %v219
      %v274 = vunpack.c.l.bf16 %v220
      %v275 = vunpack.c.l.bf16 %v221
      %v276 = vunpack.c.l.bf16 %v222
      %v277 = vunpack.c.l.bf16 %v223
      %v278 = vunpack.c.l.bf16 %v224
      %vm279 = vcmask 523264
      %280 = vst.msk [vmem:[#allocation2] sm:$0xff] %vm279, %v225
      %281 = vst.msk [vmem:[#allocation2 + $0x8] sm:$0xff] %vm279, %v226
      %282 = vst.msk [vmem:[#allocation2 + $0x10] sm:$0xff] %vm279, %v227
      %283 = vst.msk [vmem:[#allocation2 + $0x18] sm:$0xff] %vm279, %v228
      %284 = vst.msk [vmem:[#allocation2 + $0x20] sm:$0xff] %vm279, %v229
      %285 = vst.msk [vmem:[#allocation2 + $0x28] sm:$0xff] %vm279, %v230
      %286 = vst.msk [vmem:[#allocation2 + $0x30] sm:$0xff] %vm279, %v231
      %287 = vst.msk [vmem:[#allocation2 + $0x38] sm:$0xff] %vm279, %v232
      %288 = vst.msk [vmem:[#allocation2 + $0x40] sm:$0xff] %vm279, %v233
      %289 = vst.msk [vmem:[#allocation2 + $0x48] sm:$0xff] %vm279, %v234
      %290 = vst.msk [vmem:[#allocation2 + $0x50] sm:$0xff] %vm279, %v235
      %291 = vst.msk [vmem:[#allocation2 + $0x58] sm:$0xff] %vm279, %v236
      %292 = vst.msk [vmem:[#allocation2 + $0x60] sm:$0xff] %vm279, %v237
      %293 = vst.msk [vmem:[#allocation2 + $0x68] sm:$0xff] %vm279, %v238
      %294 = vst.msk [vmem:[#allocation2 + $0x70] sm:$0xff] %vm279, %v239
      %295 = vst.msk [vmem:[#allocation2 + $0x78] sm:$0xff] %vm279, %v240
      %296 = vst.msk [vmem:[#allocation2 + $0x80] sm:$0xff] %vm279, %v241
      %297 = vst.msk [vmem:[#allocation2 + $0x88] sm:$0xff] %vm279, %v242
      %298 = vst.msk [vmem:[#allocation2 + $0x90] sm:$0xff] %vm279, %v243
      %299 = vst.msk [vmem:[#allocation2 + $0x98] sm:$0xff] %vm279, %v244
      %300 = vst.msk [vmem:[#allocation2 + $0xa0] sm:$0xff] %vm279, %v245
      %301 = vst.msk [vmem:[#allocation2 + $0xa8] sm:$0xff] %vm279, %v246
      %302 = vst.msk [vmem:[#allocation2 + $0xb0] sm:$0xff] %vm279, %v247
      %303 = vst.msk [vmem:[#allocation2 + $0xb8] sm:$0xff] %vm279, %v248
      %304 = vst.msk [vmem:[#allocation2 + $0xc0] sm:$0xff] %vm279, %v249
      %305 = vst.msk [vmem:[#allocation2 + $0xc8] sm:$0xff] %vm279, %v250
      %306 = vst.msk [vmem:[#allocation2 + $0xd0] sm:$0xff] %vm279, %v251
      %307 = vst.msk [vmem:[#allocation2 + $0xd8] sm:$0xff] %vm279, %v252
      %308 = vst.msk [vmem:[#allocation2 + $0xe0] sm:$0xff] %vm279, %v253
      %309 = vst.msk [vmem:[#allocation2 + $0xe8] sm:$0xff] %vm279, %v254
      %310 = vst.msk [vmem:[#allocation2 + $0xf0] sm:$0xff] %vm279, %v255
      %311 = vst.msk [vmem:[#allocation2 + $0xf8] sm:$0xff] %vm279, %v256
      %312 = vst.msk [vmem:[#allocation2 + $0x100] sm:$0xff] %vm279, %v257
      %313 = vst.msk [vmem:[#allocation2 + $0x108] sm:$0xff] %vm279, %v258
      %314 = vst.msk [vmem:[#allocation2 + $0x110] sm:$0xff] %vm279, %v259
      %315 = vst.msk [vmem:[#allocation2 + $0x118] sm:$0xff] %vm279, %v260
      %316 = vst.msk [vmem:[#allocation2 + $0x120] sm:$0xff] %vm279, %v261
      %317 = vst.msk [vmem:[#allocation2 + $0x128] sm:$0xff] %vm279, %v262
      %318 = vst.msk [vmem:[#allocation2 + $0x130] sm:$0xff] %vm279, %v263
      %319 = vst.msk [vmem:[#allocation2 + $0x138] sm:$0xff] %vm279, %v264
      %320 = vst.msk [vmem:[#allocation2 + $0x140] sm:$0xff] %vm279, %v265
      %321 = vst.msk [vmem:[#allocation2 + $0x148] sm:$0xff] %vm279, %v266
      %322 = vst.msk [vmem:[#allocation2 + $0x150] sm:$0xff] %vm279, %v267
      %323 = vst.msk [vmem:[#allocation2 + $0x158] sm:$0xff] %vm279, %v268
      %324 = vst.msk [vmem:[#allocation2 + $0x160] sm:$0xff] %vm279, %v269
      %325 = vst.msk [vmem:[#allocation2 + $0x168] sm:$0xff] %vm279, %v270
      %326 = vst.msk [vmem:[#allocation2 + $0x170] sm:$0xff] %vm279, %v271
      %327 = vst.msk [vmem:[#allocation2 + $0x178] sm:$0xff] %vm279, %v272
      %328 = vst.msk [vmem:[#allocation2 + $0x180] sm:$0xff] %vm279, %v273
      %329 = vst.msk [vmem:[#allocation2 + $0x188] sm:$0xff] %vm279, %v274
      %330 = vst.msk [vmem:[#allocation2 + $0x190] sm:$0xff] %vm279, %v275
      %331 = vst.msk [vmem:[#allocation2 + $0x198] sm:$0xff] %vm279, %v276
      %332 = vst.msk [vmem:[#allocation2 + $0x1a0] sm:$0xff] %vm279, %v277
      %333 = vst.msk [vmem:[#allocation2 + $0x1a8] sm:$0xff] %vm279, %v278
      %v334 = vld [vmem:[#allocation2] sm:$0xff]
      %v335 = vld [vmem:[#allocation2 + $0x8] sm:$0xff]
      %v336 = vld [vmem:[#allocation2 + $0x10] sm:$0xff]
      %v337 = vld [vmem:[#allocation2 + $0x18] sm:$0xff]
      %v338 = vld [vmem:[#allocation2 + $0x20] sm:$0xff]
      %v339 = vld [vmem:[#allocation2 + $0x28] sm:$0xff]
      %v340 = vld [vmem:[#allocation2 + $0x30] sm:$0xff]
      %v341 = vld [vmem:[#allocation2 + $0x38] sm:$0xff]
      %v342 = vld [vmem:[#allocation2 + $0x40] sm:$0xff]
      %v343 = vld [vmem:[#allocation2 + $0x48] sm:$0xff]
      %v344 = vld [vmem:[#allocation2 + $0x50] sm:$0xff]
      %v345 = vld [vmem:[#allocation2 + $0x58] sm:$0xff]
      %v346 = vld [vmem:[#allocation2 + $0x60] sm:$0xff]
      %v347 = vld [vmem:[#allocation2 + $0x68] sm:$0xff]
      %v348 = vld [vmem:[#allocation2 + $0x70] sm:$0xff]
      %v349 = vld [vmem:[#allocation2 + $0x78] sm:$0xff]
      %v350 = vld [vmem:[#allocation2 + $0x80] sm:$0xff]
      %v351 = vld [vmem:[#allocation2 + $0x88] sm:$0xff]
      %v352 = vld [vmem:[#allocation2 + $0x90] sm:$0xff]
      %v353 = vld [vmem:[#allocation2 + $0x98] sm:$0xff]
      %v354 = vld [vmem:[#allocation2 + $0xa0] sm:$0xff]
      %v355 = vld [vmem:[#allocation2 + $0xa8] sm:$0xff]
      %v356 = vld [vmem:[#allocation2 + $0xb0] sm:$0xff]
      %v357 = vld [vmem:[#allocation2 + $0xb8] sm:$0xff]
      %v358 = vld [vmem:[#allocation2 + $0xc0] sm:$0xff]
      %v359 = vld [vmem:[#allocation2 + $0xc8] sm:$0xff]
      %v360 = vld [vmem:[#allocation2 + $0xd0] sm:$0xff]
      %v361 = vld [vmem:[#allocation2 + $0xd8] sm:$0xff]
      %v362 = vld [vmem:[#allocation2 + $0xe0] sm:$0xff]
      %v363 = vld [vmem:[#allocation2 + $0xe8] sm:$0xff]
      %v364 = vld [vmem:[#allocation2 + $0xf0] sm:$0xff]
      %v365 = vld [vmem:[#allocation2 + $0xf8] sm:$0xff]
      %v366 = vld [vmem:[#allocation2 + $0x100] sm:$0xff]
      %v367 = vld [vmem:[#allocation2 + $0x108] sm:$0xff]
      %v368 = vld [vmem:[#allocation2 + $0x110] sm:$0xff]
      %v369 = vld [vmem:[#allocation2 + $0x118] sm:$0xff]
      %v370 = vld [vmem:[#allocation2 + $0x120] sm:$0xff]
      %v371 = vld [vmem:[#allocation2 + $0x128] sm:$0xff]
      %v372 = vld [vmem:[#allocation2 + $0x130] sm:$0xff]
      %v373 = vld [vmem:[#allocation2 + $0x138] sm:$0xff]
      %v374 = vld [vmem:[#allocation2 + $0x140] sm:$0xff]
      %v375 = vld [vmem:[#allocation2 + $0x148] sm:$0xff]
      %v376 = vld [vmem:[#allocation2 + $0x150] sm:$0xff]
      %v377 = vld [vmem:[#allocation2 + $0x158] sm:$0xff]
      %v378 = vld [vmem:[#allocation2 + $0x160] sm:$0xff]
      %v379 = vld [vmem:[#allocation2 + $0x168] sm:$0xff]
      %v380 = vld [vmem:[#allocation2 + $0x170] sm:$0xff]
      %v381 = vld [vmem:[#allocation2 + $0x178] sm:$0xff]
      %v382 = vld [vmem:[%s1] sm:$0xff]
      %v383 = vld [vmem:[%s1 + $0x8] sm:$0xff]
      %v384 = vld [vmem:[%s1 + $0x10] sm:$0xff]
      %v385 = vld [vmem:[%s1 + $0x18] sm:$0xff]
      %v386 = vld [vmem:[%s1 + $0x20] sm:$0xff]
      %v387 = vld [vmem:[%s1 + $0x28] sm:$0xff]
      %v388 = vld [vmem:[%s1 + $0x30] sm:$0xff]
      %v389 = vld [vmem:[%s1 + $0x38] sm:$0xff]
      %s390 = scalar_lea.vmem [#allocation2], 24
      %v391 = vld [vmem:[%s390] sm:$0xff]
      %v392 = vld [vmem:[%s390 + $0x8] sm:$0xff]
      %v393 = vld [vmem:[%s390 + $0x10] sm:$0xff]
      %v394 = vld [vmem:[%s390 + $0x18] sm:$0xff]
      %v395 = vld [vmem:[%s390 + $0x20] sm:$0xff]
      %v396 = vld [vmem:[%s390 + $0x28] sm:$0xff]
      %v397 = vld [vmem:[%s390 + $0x30] sm:$0xff]
      %v398 = vld [vmem:[%s390 + $0x38] sm:$0xff]
      %v399 = vld [vmem:[%s390 + $0x40] sm:$0xff]
      %v400 = vld [vmem:[%s390 + $0x48] sm:$0xff]
      %v401 = vld [vmem:[%s390 + $0x50] sm:$0xff]
      %v402 = vld [vmem:[%s390 + $0x58] sm:$0xff]
      %v403 = vld [vmem:[%s390 + $0x60] sm:$0xff]
      %v404 = vld [vmem:[%s390 + $0x68] sm:$0xff]
      %v405 = vld [vmem:[%s390 + $0x70] sm:$0xff]
      %v406 = vld [vmem:[%s390 + $0x78] sm:$0xff]
      %v407 = vld [vmem:[%s390 + $0x80] sm:$0xff]
      %v408 = vld [vmem:[%s390 + $0x88] sm:$0xff]
      %v409 = vld [vmem:[%s390 + $0x90] sm:$0xff]
      %v410 = vld [vmem:[%s390 + $0x98] sm:$0xff]
      %v411 = vld [vmem:[%s390 + $0xa0] sm:$0xff]
      %v412 = vld [vmem:[%s390 + $0xa8] sm:$0xff]
      %v413 = vld [vmem:[%s390 + $0xb0] sm:$0xff]
      %v414 = vld [vmem:[%s390 + $0xb8] sm:$0xff]
      %v415 = vld [vmem:[%s390 + $0xc0] sm:$0xff]
      %v416 = vld [vmem:[%s390 + $0xc8] sm:$0xff]
      %v417 = vld [vmem:[%s390 + $0xd0] sm:$0xff]
      %v418 = vld [vmem:[%s390 + $0xd8] sm:$0xff]
      %v419 = vld [vmem:[%s390 + $0xe0] sm:$0xff]
      %v420 = vld [vmem:[%s390 + $0xe8] sm:$0xff]
      %v421 = vld [vmem:[%s390 + $0xf0] sm:$0xff]
      %v422 = vld [vmem:[%s390 + $0xf8] sm:$0xff]
      %v423 = vld [vmem:[%s390 + $0x100] sm:$0xff]
      %v424 = vld [vmem:[%s390 + $0x108] sm:$0xff]
      %v425 = vld [vmem:[%s390 + $0x110] sm:$0xff]
      %v426 = vld [vmem:[%s390 + $0x118] sm:$0xff]
      %v427 = vld [vmem:[%s390 + $0x120] sm:$0xff]
      %v428 = vld [vmem:[%s390 + $0x128] sm:$0xff]
      %v429 = vld [vmem:[%s390 + $0x130] sm:$0xff]
      %v430 = vld [vmem:[%s390 + $0x138] sm:$0xff]
      %v431 = vld [vmem:[%s390 + $0x140] sm:$0xff]
      %v432 = vld [vmem:[%s390 + $0x148] sm:$0xff]
      %v433 = vld [vmem:[%s390 + $0x150] sm:$0xff]
      %v434 = vld [vmem:[%s390 + $0x158] sm:$0xff]
      %v435 = vld [vmem:[%s390 + $0x160] sm:$0xff]
      %v436 = vld [vmem:[%s390 + $0x168] sm:$0xff]
      %v437 = vld [vmem:[%s390 + $0x170] sm:$0xff]
      %v438 = vld [vmem:[%s390 + $0x178] sm:$0xff]
      %s439 = scalar_lea.vmem %s1, 64
      %v440 = vld [vmem:[%s439] sm:$0xff]
      %v441 = vld [vmem:[%s439 + $0x8] sm:$0xff]
      %v442 = vld [vmem:[%s439 + $0x10] sm:$0xff]
      %v443 = vld [vmem:[%s439 + $0x18] sm:$0xff]
      %v444 = vld [vmem:[%s439 + $0x20] sm:$0xff]
      %v445 = vld [vmem:[%s439 + $0x28] sm:$0xff]
      %v446 = vld [vmem:[%s439 + $0x30] sm:$0xff]
      %v447 = vld [vmem:[%s439 + $0x38] sm:$0xff]
      %v449 = vsel %vm279, %v391, 0
      %v452 = vsel %vm279, %v392, 0
      %v455 = vsel %vm279, %v393, 0
      %v458 = vsel %vm279, %v394, 0
      %v461 = vsel %vm279, %v395, 0
      %v464 = vsel %vm279, %v396, 0
      %v467 = vsel %vm279, %v397, 0
      %v470 = vsel %vm279, %v398, 0
      %v473 = vsel %vm279, %v399, 0
      %v476 = vsel %vm279, %v400, 0
      %v479 = vsel %vm279, %v401, 0
      %v482 = vsel %vm279, %v402, 0
      %v485 = vsel %vm279, %v403, 0
      %v488 = vsel %vm279, %v404, 0
      %v491 = vsel %vm279, %v405, 0
      %v494 = vsel %vm279, %v406, 0
      %v497 = vsel %vm279, %v407, 0
      %v500 = vsel %vm279, %v408, 0
      %v503 = vsel %vm279, %v409, 0
      %v506 = vsel %vm279, %v410, 0
      %v509 = vsel %vm279, %v411, 0
      %v512 = vsel %vm279, %v412, 0
      %v515 = vsel %vm279, %v413, 0
      %v518 = vsel %vm279, %v414, 0
      %v521 = vsel %vm279, %v415, 0
      %v524 = vsel %vm279, %v416, 0
      %v527 = vsel %vm279, %v417, 0
      %v530 = vsel %vm279, %v418, 0
      %v533 = vsel %vm279, %v419, 0
      %v536 = vsel %vm279, %v420, 0
      %v539 = vsel %vm279, %v421, 0
      %v542 = vsel %vm279, %v422, 0
      %v545 = vsel %vm279, %v423, 0
      %v548 = vsel %vm279, %v424, 0
      %v551 = vsel %vm279, %v425, 0
      %v554 = vsel %vm279, %v426, 0
      %v557 = vsel %vm279, %v427, 0
      %v560 = vsel %vm279, %v428, 0
      %v563 = vsel %vm279, %v429, 0
      %v566 = vsel %vm279, %v430, 0
      %v569 = vsel %vm279, %v431, 0
      %v572 = vsel %vm279, %v432, 0
      %v575 = vsel %vm279, %v433, 0
      %v578 = vsel %vm279, %v434, 0
      %v581 = vsel %vm279, %v435, 0
      %v584 = vsel %vm279, %v436, 0
      %v587 = vsel %vm279, %v437, 0
      %v590 = vsel %vm279, %v438, 0
      %592 = vmatprep.subr.mxu0 0.0
      %593 = vmatpush1.msra.mxu0 0.0
      %594 = vmatprep.subr.mxu0 0.0
      %595 = vmatpush1.msra.mxu0 0.0
      %596 = vmatprep.subr.mxu0 0.0
      %597 = vmatpush1.msra.mxu0 0.0
      %598 = vmatprep.subr.mxu0 0.0
      %599 = vmatpush1.msra.mxu0 0.0
      %600 = vmatprep.subr.mxu0 0.0
      %601 = vmatpush1.msra.mxu0 0.0
      %602 = vmatprep.subr.mxu0 0.0
      %603 = vmatpush1.msra.mxu0 0.0
      %604 = vmatprep.subr.mxu0 0.0
      %605 = vmatpush1.msra.mxu0 0.0
      %606 = vmatprep.subr.mxu0 0.0
      %607 = vmatpush1.msra.mxu0 0.0
      %608 = vmatprep.subr.mxu0 0.0
      %609 = vmatpush1.msra.mxu0 %v447
      %610 = vmatprep.subr.mxu0 0.0
      %611 = vmatpush1.msra.mxu0 %v446
      %612 = vmatprep.subr.mxu0 0.0
      %613 = vmatpush1.msra.mxu0 %v445
      %614 = vmatprep.subr.mxu0 0.0
      %615 = vmatpush1.msra.mxu0 %v444
      %616 = vmatprep.subr.mxu0 0.0
      %617 = vmatpush1.msra.mxu0 %v443
      %618 = vmatprep.subr.mxu0 0.0
      %619 = vmatpush1.msra.mxu0 %v442
      %620 = vmatprep.subr.mxu0 0.0
      %621 = vmatpush1.msra.mxu0 %v441
      %622 = vmatprep.subr.mxu0 0.0
      %623 = vmatpush1.msra.mxu0 %v440
      %624 = vmatprep.subr.mxu0 0.0
      %625 = vmatpush2.msra.mxu0 0.0
      %626 = vmatprep.subr.mxu0 0.0
      %627 = vmatpush2.msra.mxu0 0.0
      %628 = vmatprep.subr.mxu0 0.0
      %629 = vmatpush2.msra.mxu0 0.0
      %630 = vmatprep.subr.mxu0 0.0
      %631 = vmatpush2.msra.mxu0 0.0
      %632 = vmatprep.subr.mxu0 0.0
      %633 = vmatpush2.msra.mxu0 0.0
      %634 = vmatprep.subr.mxu0 0.0
      %635 = vmatpush2.msra.mxu0 0.0
      %636 = vmatprep.subr.mxu0 0.0
      %637 = vmatpush2.msra.mxu0 0.0
      %638 = vmatprep.subr.mxu0 0.0
      %639 = vmatpush2.msra.mxu0 0.0
      %640 = vmatprep.subr.mxu0 0.0
      %641 = vmatpush2.msra.mxu0 0.0
      %642 = vmatprep.subr.mxu0 0.0
      %643 = vmatpush2.msra.mxu0 0.0
      %644 = vmatprep.subr.mxu0 0.0
      %645 = vmatpush2.msra.mxu0 0.0
      %646 = vmatprep.subr.mxu0 0.0
      %647 = vmatpush2.msra.mxu0 0.0
      %648 = vmatprep.subr.mxu0 0.0
      %649 = vmatpush2.msra.mxu0 0.0
      %650 = vmatprep.subr.mxu0 0.0
      %651 = vmatpush2.msra.mxu0 0.0
      %652 = vmatprep.subr.mxu0 0.0
      %653 = vmatpush2.msra.mxu0 0.0
      %654 = vmatprep.subr.mxu0 0.0
      %655 = vmatpush2.msra.mxu0 0.0
      %656 = vmatprep.mubr.f32.mxu0 0.0
      %657 = vmatmul.mubr.f32.gmra.mxu0 %v449
      %v658 = vpop.f32.mrf.mxu0
      %v659 = vadd.f32 0.0, %v658
      %v660 = vpop.f32.mrf.mxu0
      %661 = vmatprep.mubr.f32.mxu0 0.0
      %662 = vmatmul.mubr.f32.gmra.mxu0 %v452
      %v663 = vpop.f32.mrf.mxu0
      %v664 = vadd.f32 0.0, %v663
      %v665 = vpop.f32.mrf.mxu0
      %666 = vmatprep.mubr.f32.mxu0 0.0
      %667 = vmatmul.mubr.f32.gmra.mxu0 %v455
      %v668 = vpop.f32.mrf.mxu0
      %v669 = vadd.f32 0.0, %v668
      %v670 = vpop.f32.mrf.mxu0
      %671 = vmatprep.mubr.f32.mxu0 0.0
      %672 = vmatmul.mubr.f32.gmra.mxu0 %v458
      %v673 = vpop.f32.mrf.mxu0
      %v674 = vadd.f32 0.0, %v673
      %v675 = vpop.f32.mrf.mxu0
      %676 = vmatprep.mubr.f32.mxu0 0.0
      %677 = vmatmul.mubr.f32.gmra.mxu0 %v461
      %v678 = vpop.f32.mrf.mxu0
      %v679 = vadd.f32 0.0, %v678
      %v680 = vpop.f32.mrf.mxu0
      %681 = vmatprep.mubr.f32.mxu0 0.0
      %682 = vmatmul.mubr.f32.gmra.mxu0 %v464
      %v683 = vpop.f32.mrf.mxu0
      %v684 = vadd.f32 0.0, %v683
      %v685 = vpop.f32.mrf.mxu0
      %686 = vmatprep.mubr.f32.mxu0 0.0
      %687 = vmatmul.mubr.f32.gmra.mxu0 %v467
      %v688 = vpop.f32.mrf.mxu0
      %v689 = vadd.f32 0.0, %v688
      %v690 = vpop.f32.mrf.mxu0
      %691 = vmatprep.mubr.f32.mxu0 0.0
      %692 = vmatmul.mubr.f32.gmra.mxu0 %v470
      %v693 = vpop.f32.mrf.mxu0
      %v694 = vadd.f32 0.0, %v693
      %v695 = vpop.f32.mrf.mxu0
      %696 = vmatprep.mubr.f32.mxu0 0.0
      %697 = vmatmul.mubr.f32.gmra.mxu0 %v473
      %v698 = vpop.f32.mrf.mxu0
      %v699 = vadd.f32 0.0, %v698
      %v700 = vpop.f32.mrf.mxu0
      %701 = vmatprep.mubr.f32.mxu0 0.0
      %702 = vmatmul.mubr.f32.gmra.mxu0 %v476
      %v703 = vpop.f32.mrf.mxu0
      %v704 = vadd.f32 0.0, %v703
      %v705 = vpop.f32.mrf.mxu0
      %706 = vmatprep.mubr.f32.mxu0 0.0
      %707 = vmatmul.mubr.f32.gmra.mxu0 %v479
      %v708 = vpop.f32.mrf.mxu0
      %v709 = vadd.f32 0.0, %v708
      %v710 = vpop.f32.mrf.mxu0
      %711 = vmatprep.mubr.f32.mxu0 0.0
      %712 = vmatmul.mubr.f32.gmra.mxu0 %v482
      %v713 = vpop.f32.mrf.mxu0
      %v714 = vadd.f32 0.0, %v713
      %v715 = vpop.f32.mrf.mxu0
      %716 = vmatprep.mubr.f32.mxu0 0.0
      %717 = vmatmul.mubr.f32.gmra.mxu0 %v485
      %v718 = vpop.f32.mrf.mxu0
      %v719 = vadd.f32 0.0, %v718
      %v720 = vpop.f32.mrf.mxu0
      %721 = vmatprep.mubr.f32.mxu0 0.0
      %722 = vmatmul.mubr.f32.gmra.mxu0 %v488
      %v723 = vpop.f32.mrf.mxu0
      %v724 = vadd.f32 0.0, %v723
      %v725 = vpop.f32.mrf.mxu0
      %726 = vmatprep.mubr.f32.mxu0 0.0
      %727 = vmatmul.mubr.f32.gmra.mxu0 %v491
      %v728 = vpop.f32.mrf.mxu0
      %v729 = vadd.f32 0.0, %v728
      %v730 = vpop.f32.mrf.mxu0
      %731 = vmatprep.mubr.f32.mxu0 0.0
      %732 = vmatmul.mubr.f32.gmra.mxu0 %v494
      %v733 = vpop.f32.mrf.mxu0
      %v734 = vadd.f32 0.0, %v733
      %v735 = vpop.f32.mrf.mxu0
      %736 = vmatprep.mubr.f32.mxu0 0.0
      %737 = vmatmul.mubr.f32.gmra.mxu0 %v497
      %v738 = vpop.f32.mrf.mxu0
      %v739 = vadd.f32 0.0, %v738
      %v740 = vpop.f32.mrf.mxu0
      %741 = vmatprep.mubr.f32.mxu0 0.0
      %742 = vmatmul.mubr.f32.gmra.mxu0 %v500
      %v743 = vpop.f32.mrf.mxu0
      %v744 = vadd.f32 0.0, %v743
      %v745 = vpop.f32.mrf.mxu0
      %746 = vmatprep.mubr.f32.mxu0 0.0
      %747 = vmatmul.mubr.f32.gmra.mxu0 %v503
      %v748 = vpop.f32.mrf.mxu0
      %v749 = vadd.f32 0.0, %v748
      %v750 = vpop.f32.mrf.mxu0
      %751 = vmatprep.mubr.f32.mxu0 0.0
      %752 = vmatmul.mubr.f32.gmra.mxu0 %v506
      %v753 = vpop.f32.mrf.mxu0
      %v754 = vadd.f32 0.0, %v753
      %v755 = vpop.f32.mrf.mxu0
      %756 = vmatprep.mubr.f32.mxu0 0.0
      %757 = vmatmul.mubr.f32.gmra.mxu0 %v509
      %v758 = vpop.f32.mrf.mxu0
      %v759 = vadd.f32 0.0, %v758
      %v760 = vpop.f32.mrf.mxu0
      %761 = vmatprep.mubr.f32.mxu0 0.0
      %762 = vmatmul.mubr.f32.gmra.mxu0 %v512
      %v763 = vpop.f32.mrf.mxu0
      %v764 = vadd.f32 0.0, %v763
      %v765 = vpop.f32.mrf.mxu0
      %766 = vmatprep.mubr.f32.mxu0 0.0
      %767 = vmatmul.mubr.f32.gmra.mxu0 %v515
      %v768 = vpop.f32.mrf.mxu0
      %v769 = vadd.f32 0.0, %v768
      %v770 = vpop.f32.mrf.mxu0
      %771 = vmatprep.mubr.f32.mxu0 0.0
      %772 = vmatmul.mubr.f32.gmra.mxu0 %v518
      %v773 = vpop.f32.mrf.mxu0
      %v774 = vadd.f32 0.0, %v773
      %v775 = vpop.f32.mrf.mxu0
      %776 = vmatprep.mubr.f32.mxu0 0.0
      %777 = vmatmul.mubr.f32.gmra.mxu0 %v521
      %v778 = vpop.f32.mrf.mxu0
      %v779 = vadd.f32 0.0, %v778
      %v780 = vpop.f32.mrf.mxu0
      %781 = vmatprep.mubr.f32.mxu0 0.0
      %782 = vmatmul.mubr.f32.gmra.mxu0 %v524
      %v783 = vpop.f32.mrf.mxu0
      %v784 = vadd.f32 0.0, %v783
      %v785 = vpop.f32.mrf.mxu0
      %786 = vmatprep.mubr.f32.mxu0 0.0
      %787 = vmatmul.mubr.f32.gmra.mxu0 %v527
      %v788 = vpop.f32.mrf.mxu0
      %v789 = vadd.f32 0.0, %v788
      %v790 = vpop.f32.mrf.mxu0
      %791 = vmatprep.mubr.f32.mxu0 0.0
      %792 = vmatmul.mubr.f32.gmra.mxu0 %v530
      %v793 = vpop.f32.mrf.mxu0
      %v794 = vadd.f32 0.0, %v793
      %v795 = vpop.f32.mrf.mxu0
      %796 = vmatprep.mubr.f32.mxu0 0.0
      %797 = vmatmul.mubr.f32.gmra.mxu0 %v533
      %v798 = vpop.f32.mrf.mxu0
      %v799 = vadd.f32 0.0, %v798
      %v800 = vpop.f32.mrf.mxu0
      %801 = vmatprep.mubr.f32.mxu0 0.0
      %802 = vmatmul.mubr.f32.gmra.mxu0 %v536
      %v803 = vpop.f32.mrf.mxu0
      %v804 = vadd.f32 0.0, %v803
      %v805 = vpop.f32.mrf.mxu0
      %806 = vmatprep.mubr.f32.mxu0 0.0
      %807 = vmatmul.mubr.f32.gmra.mxu0 %v539
      %v808 = vpop.f32.mrf.mxu0
      %v809 = vadd.f32 0.0, %v808
      %v810 = vpop.f32.mrf.mxu0
      %811 = vmatprep.mubr.f32.mxu0 0.0
      %812 = vmatmul.mubr.f32.gmra.mxu0 %v542
      %v813 = vpop.f32.mrf.mxu0
      %v814 = vadd.f32 0.0, %v813
      %v815 = vpop.f32.mrf.mxu0
      %816 = vmatprep.mubr.f32.mxu0 0.0
      %817 = vmatmul.mubr.f32.gmra.mxu0 %v545
      %v818 = vpop.f32.mrf.mxu0
      %v819 = vadd.f32 0.0, %v818
      %v820 = vpop.f32.mrf.mxu0
      %821 = vmatprep.mubr.f32.mxu0 0.0
      %822 = vmatmul.mubr.f32.gmra.mxu0 %v548
      %v823 = vpop.f32.mrf.mxu0
      %v824 = vadd.f32 0.0, %v823
      %v825 = vpop.f32.mrf.mxu0
      %826 = vmatprep.mubr.f32.mxu0 0.0
      %827 = vmatmul.mubr.f32.gmra.mxu0 %v551
      %v828 = vpop.f32.mrf.mxu0
      %v829 = vadd.f32 0.0, %v828
      %v830 = vpop.f32.mrf.mxu0
      %831 = vmatprep.mubr.f32.mxu0 0.0
      %832 = vmatmul.mubr.f32.gmra.mxu0 %v554
      %v833 = vpop.f32.mrf.mxu0
      %v834 = vadd.f32 0.0, %v833
      %v835 = vpop.f32.mrf.mxu0
      %836 = vmatprep.mubr.f32.mxu0 0.0
      %837 = vmatmul.mubr.f32.gmra.mxu0 %v557
      %v838 = vpop.f32.mrf.mxu0
      %v839 = vadd.f32 0.0, %v838
      %v840 = vpop.f32.mrf.mxu0
      %841 = vmatprep.mubr.f32.mxu0 0.0
      %842 = vmatmul.mubr.f32.gmra.mxu0 %v560
      %v843 = vpop.f32.mrf.mxu0
      %v844 = vadd.f32 0.0, %v843
      %v845 = vpop.f32.mrf.mxu0
      %846 = vmatprep.mubr.f32.mxu0 0.0
      %847 = vmatmul.mubr.f32.gmra.mxu0 %v563
      %v848 = vpop.f32.mrf.mxu0
      %v849 = vadd.f32 0.0, %v848
      %v850 = vpop.f32.mrf.mxu0
      %851 = vmatprep.mubr.f32.mxu0 0.0
      %852 = vmatmul.mubr.f32.gmra.mxu0 %v566
      %v853 = vpop.f32.mrf.mxu0
      %v854 = vadd.f32 0.0, %v853
      %v855 = vpop.f32.mrf.mxu0
      %856 = vmatprep.mubr.f32.mxu0 0.0
      %857 = vmatmul.mubr.f32.gmra.mxu0 %v569
      %v858 = vpop.f32.mrf.mxu0
      %v859 = vadd.f32 0.0, %v858
      %v860 = vpop.f32.mrf.mxu0
      %861 = vmatprep.mubr.f32.mxu0 0.0
      %862 = vmatmul.mubr.f32.gmra.mxu0 %v572
      %v863 = vpop.f32.mrf.mxu0
      %v864 = vadd.f32 0.0, %v863
      %v865 = vpop.f32.mrf.mxu0
      %866 = vmatprep.mubr.f32.mxu0 0.0
      %867 = vmatmul.mubr.f32.gmra.mxu0 %v575
      %v868 = vpop.f32.mrf.mxu0
      %v869 = vadd.f32 0.0, %v868
      %v870 = vpop.f32.mrf.mxu0
      %871 = vmatprep.mubr.f32.mxu0 0.0
      %872 = vmatmul.mubr.f32.gmra.mxu0 %v578
      %v873 = vpop.f32.mrf.mxu0
      %v874 = vadd.f32 0.0, %v873
      %v875 = vpop.f32.mrf.mxu0
      %876 = vmatprep.mubr.f32.mxu0 0.0
      %877 = vmatmul.mubr.f32.gmra.mxu0 %v581
      %v878 = vpop.f32.mrf.mxu0
      %v879 = vadd.f32 0.0, %v878
      %v880 = vpop.f32.mrf.mxu0
      %881 = vmatprep.mubr.f32.mxu0 0.0
      %882 = vmatmul.mubr.f32.gmra.mxu0 %v584
      %v883 = vpop.f32.mrf.mxu0
      %v884 = vadd.f32 0.0, %v883
      %v885 = vpop.f32.mrf.mxu0
      %886 = vmatprep.mubr.f32.mxu0 0.0
      %887 = vmatmul.mubr.f32.gmra.mxu0 %v587
      %v888 = vpop.f32.mrf.mxu0
      %v889 = vadd.f32 0.0, %v888
      %v890 = vpop.f32.mrf.mxu0
      %891 = vmatprep.mubr.f32.mxu0 0.0
      %892 = vmatmul.mubr.f32.gmra.mxu0 %v590
      %v893 = vpop.f32.mrf.mxu0
      %v894 = vadd.f32 0.0, %v893
      %v895 = vpop.f32.mrf.mxu0
      %896 = vdwg.mxu0
      %v898 = vsel %vm279, %v334, 0
      %v901 = vsel %vm279, %v335, 0
      %v904 = vsel %vm279, %v336, 0
      %v907 = vsel %vm279, %v337, 0
      %v910 = vsel %vm279, %v338, 0
      %v913 = vsel %vm279, %v339, 0
      %v916 = vsel %vm279, %v340, 0
      %v919 = vsel %vm279, %v341, 0
      %v922 = vsel %vm279, %v342, 0
      %v925 = vsel %vm279, %v343, 0
      %v928 = vsel %vm279, %v344, 0
      %v931 = vsel %vm279, %v345, 0
      %v934 = vsel %vm279, %v346, 0
      %v937 = vsel %vm279, %v347, 0
      %v940 = vsel %vm279, %v348, 0
      %v943 = vsel %vm279, %v349, 0
      %v946 = vsel %vm279, %v350, 0
      %v949 = vsel %vm279, %v351, 0
      %v952 = vsel %vm279, %v352, 0
      %v955 = vsel %vm279, %v353, 0
      %v958 = vsel %vm279, %v354, 0
      %v961 = vsel %vm279, %v355, 0
      %v964 = vsel %vm279, %v356, 0
      %v967 = vsel %vm279, %v357, 0
      %v970 = vsel %vm279, %v358, 0
      %v973 = vsel %vm279, %v359, 0
      %v976 = vsel %vm279, %v360, 0
      %v979 = vsel %vm279, %v361, 0
      %v982 = vsel %vm279, %v362, 0
      %v985 = vsel %vm279, %v363, 0
      %v988 = vsel %vm279, %v364, 0
      %v991 = vsel %vm279, %v365, 0
      %v994 = vsel %vm279, %v366, 0
      %v997 = vsel %vm279, %v367, 0
      %v1000 = vsel %vm279, %v368, 0
      %v1003 = vsel %vm279, %v369, 0
      %v1006 = vsel %vm279, %v370, 0
      %v1009 = vsel %vm279, %v371, 0
      %v1012 = vsel %vm279, %v372, 0
      %v1015 = vsel %vm279, %v373, 0
      %v1018 = vsel %vm279, %v374, 0
      %v1021 = vsel %vm279, %v375, 0
      %v1024 = vsel %vm279, %v376, 0
      %v1027 = vsel %vm279, %v377, 0
      %v1030 = vsel %vm279, %v378, 0
      %v1033 = vsel %vm279, %v379, 0
      %v1036 = vsel %vm279, %v380, 0
      %v1039 = vsel %vm279, %v381, 0
      %1041 = vmatprep.subr.mxu0 0.0
      %1042 = vmatpush1.msra.mxu0 0.0
      %1043 = vmatprep.subr.mxu0 0.0
      %1044 = vmatpush1.msra.mxu0 0.0
      %1045 = vmatprep.subr.mxu0 0.0
      %1046 = vmatpush1.msra.mxu0 0.0
      %1047 = vmatprep.subr.mxu0 0.0
      %1048 = vmatpush1.msra.mxu0 0.0
      %1049 = vmatprep.subr.mxu0 0.0
      %1050 = vmatpush1.msra.mxu0 0.0
      %1051 = vmatprep.subr.mxu0 0.0
      %1052 = vmatpush1.msra.mxu0 0.0
      %1053 = vmatprep.subr.mxu0 0.0
      %1054 = vmatpush1.msra.mxu0 0.0
      %1055 = vmatprep.subr.mxu0 0.0
      %1056 = vmatpush1.msra.mxu0 0.0
      %1057 = vmatprep.subr.mxu0 0.0
      %1058 = vmatpush1.msra.mxu0 %v389
      %1059 = vmatprep.subr.mxu0 0.0
      %1060 = vmatpush1.msra.mxu0 %v388
      %1061 = vmatprep.subr.mxu0 0.0
      %1062 = vmatpush1.msra.mxu0 %v387
      %1063 = vmatprep.subr.mxu0 0.0
      %1064 = vmatpush1.msra.mxu0 %v386
      %1065 = vmatprep.subr.mxu0 0.0
      %1066 = vmatpush1.msra.mxu0 %v385
      %1067 = vmatprep.subr.mxu0 0.0
      %1068 = vmatpush1.msra.mxu0 %v384
      %1069 = vmatprep.subr.mxu0 0.0
      %1070 = vmatpush1.msra.mxu0 %v383
      %1071 = vmatprep.subr.mxu0 0.0
      %1072 = vmatpush1.msra.mxu0 %v382
      %1073 = vmatprep.subr.mxu0 0.0
      %1074 = vmatpush2.msra.mxu0 0.0
      %1075 = vmatprep.subr.mxu0 0.0
      %1076 = vmatpush2.msra.mxu0 0.0
      %1077 = vmatprep.subr.mxu0 0.0
      %1078 = vmatpush2.msra.mxu0 0.0
      %1079 = vmatprep.subr.mxu0 0.0
      %1080 = vmatpush2.msra.mxu0 0.0
      %1081 = vmatprep.subr.mxu0 0.0
      %1082 = vmatpush2.msra.mxu0 0.0
      %1083 = vmatprep.subr.mxu0 0.0
      %1084 = vmatpush2.msra.mxu0 0.0
      %1085 = vmatprep.subr.mxu0 0.0
      %1086 = vmatpush2.msra.mxu0 0.0
      %1087 = vmatprep.subr.mxu0 0.0
      %1088 = vmatpush2.msra.mxu0 0.0
      %1089 = vmatprep.subr.mxu0 0.0
      %1090 = vmatpush2.msra.mxu0 0.0
      %1091 = vmatprep.subr.mxu0 0.0
      %1092 = vmatpush2.msra.mxu0 0.0
      %1093 = vmatprep.subr.mxu0 0.0
      %1094 = vmatpush2.msra.mxu0 0.0
      %1095 = vmatprep.subr.mxu0 0.0
      %1096 = vmatpush2.msra.mxu0 0.0
      %1097 = vmatprep.subr.mxu0 0.0
      %1098 = vmatpush2.msra.mxu0 0.0
      %1099 = vmatprep.subr.mxu0 0.0
      %1100 = vmatpush2.msra.mxu0 0.0
      %1101 = vmatprep.subr.mxu0 0.0
      %1102 = vmatpush2.msra.mxu0 0.0
      %1103 = vmatprep.subr.mxu0 0.0
      %1104 = vmatpush2.msra.mxu0 0.0
      %1105 = vmatprep.mubr.f32.mxu0 0.0
      %1106 = vmatmul.mubr.f32.gmra.mxu0 %v898
      %v1107 = vpop.f32.mrf.mxu0
      %v1108 = vadd.f32 %v659, %v1107
      %v1109 = vpop.f32.mrf.mxu0
      %1110 = vmatprep.mubr.f32.mxu0 0.0
      %1111 = vmatmul.mubr.f32.gmra.mxu0 %v901
      %v1112 = vpop.f32.mrf.mxu0
      %v1113 = vadd.f32 %v664, %v1112
      %v1114 = vpop.f32.mrf.mxu0
      %1115 = vmatprep.mubr.f32.mxu0 0.0
      %1116 = vmatmul.mubr.f32.gmra.mxu0 %v904
      %v1117 = vpop.f32.mrf.mxu0
      %v1118 = vadd.f32 %v669, %v1117
      %v1119 = vpop.f32.mrf.mxu0
      %1120 = vmatprep.mubr.f32.mxu0 0.0
      %1121 = vmatmul.mubr.f32.gmra.mxu0 %v907
      %v1122 = vpop.f32.mrf.mxu0
      %v1123 = vadd.f32 %v674, %v1122
      %v1124 = vpop.f32.mrf.mxu0
      %1125 = vmatprep.mubr.f32.mxu0 0.0
      %1126 = vmatmul.mubr.f32.gmra.mxu0 %v910
      %v1127 = vpop.f32.mrf.mxu0
      %v1128 = vadd.f32 %v679, %v1127
      %v1129 = vpop.f32.mrf.mxu0
      %1130 = vmatprep.mubr.f32.mxu0 0.0
      %1131 = vmatmul.mubr.f32.gmra.mxu0 %v913
      %v1132 = vpop.f32.mrf.mxu0
      %v1133 = vadd.f32 %v684, %v1132
      %v1134 = vpop.f32.mrf.mxu0
      %1135 = vmatprep.mubr.f32.mxu0 0.0
      %1136 = vmatmul.mubr.f32.gmra.mxu0 %v916
      %v1137 = vpop.f32.mrf.mxu0
      %v1138 = vadd.f32 %v689, %v1137
      %v1139 = vpop.f32.mrf.mxu0
      %1140 = vmatprep.mubr.f32.mxu0 0.0
      %1141 = vmatmul.mubr.f32.gmra.mxu0 %v919
      %v1142 = vpop.f32.mrf.mxu0
      %v1143 = vadd.f32 %v694, %v1142
      %v1144 = vpop.f32.mrf.mxu0
      %1145 = vmatprep.mubr.f32.mxu0 0.0
      %1146 = vmatmul.mubr.f32.gmra.mxu0 %v922
      %v1147 = vpop.f32.mrf.mxu0
      %v1148 = vadd.f32 %v699, %v1147
      %v1149 = vpop.f32.mrf.mxu0
      %1150 = vmatprep.mubr.f32.mxu0 0.0
      %1151 = vmatmul.mubr.f32.gmra.mxu0 %v925
      %v1152 = vpop.f32.mrf.mxu0
      %v1153 = vadd.f32 %v704, %v1152
      %v1154 = vpop.f32.mrf.mxu0
      %1155 = vmatprep.mubr.f32.mxu0 0.0
      %1156 = vmatmul.mubr.f32.gmra.mxu0 %v928
      %v1157 = vpop.f32.mrf.mxu0
      %v1158 = vadd.f32 %v709, %v1157
      %v1159 = vpop.f32.mrf.mxu0
      %1160 = vmatprep.mubr.f32.mxu0 0.0
      %1161 = vmatmul.mubr.f32.gmra.mxu0 %v931
      %v1162 = vpop.f32.mrf.mxu0
      %v1163 = vadd.f32 %v714, %v1162
      %v1164 = vpop.f32.mrf.mxu0
      %1165 = vmatprep.mubr.f32.mxu0 0.0
      %1166 = vmatmul.mubr.f32.gmra.mxu0 %v934
      %v1167 = vpop.f32.mrf.mxu0
      %v1168 = vadd.f32 %v719, %v1167
      %v1169 = vpop.f32.mrf.mxu0
      %1170 = vmatprep.mubr.f32.mxu0 0.0
      %1171 = vmatmul.mubr.f32.gmra.mxu0 %v937
      %v1172 = vpop.f32.mrf.mxu0
      %v1173 = vadd.f32 %v724, %v1172
      %v1174 = vpop.f32.mrf.mxu0
      %1175 = vmatprep.mubr.f32.mxu0 0.0
      %1176 = vmatmul.mubr.f32.gmra.mxu0 %v940
      %v1177 = vpop.f32.mrf.mxu0
      %v1178 = vadd.f32 %v729, %v1177
      %v1179 = vpop.f32.mrf.mxu0
      %1180 = vmatprep.mubr.f32.mxu0 0.0
      %1181 = vmatmul.mubr.f32.gmra.mxu0 %v943
      %v1182 = vpop.f32.mrf.mxu0
      %v1183 = vadd.f32 %v734, %v1182
      %v1184 = vpop.f32.mrf.mxu0
      %1185 = vmatprep.mubr.f32.mxu0 0.0
      %1186 = vmatmul.mubr.f32.gmra.mxu0 %v946
      %v1187 = vpop.f32.mrf.mxu0
      %v1188 = vadd.f32 %v739, %v1187
      %v1189 = vpop.f32.mrf.mxu0
      %1190 = vmatprep.mubr.f32.mxu0 0.0
      %1191 = vmatmul.mubr.f32.gmra.mxu0 %v949
      %v1192 = vpop.f32.mrf.mxu0
      %v1193 = vadd.f32 %v744, %v1192
      %v1194 = vpop.f32.mrf.mxu0
      %1195 = vmatprep.mubr.f32.mxu0 0.0
      %1196 = vmatmul.mubr.f32.gmra.mxu0 %v952
      %v1197 = vpop.f32.mrf.mxu0
      %v1198 = vadd.f32 %v749, %v1197
      %v1199 = vpop.f32.mrf.mxu0
      %1200 = vmatprep.mubr.f32.mxu0 0.0
      %1201 = vmatmul.mubr.f32.gmra.mxu0 %v955
      %v1202 = vpop.f32.mrf.mxu0
      %v1203 = vadd.f32 %v754, %v1202
      %v1204 = vpop.f32.mrf.mxu0
      %1205 = vmatprep.mubr.f32.mxu0 0.0
      %1206 = vmatmul.mubr.f32.gmra.mxu0 %v958
      %v1207 = vpop.f32.mrf.mxu0
      %v1208 = vadd.f32 %v759, %v1207
      %v1209 = vpop.f32.mrf.mxu0
      %1210 = vmatprep.mubr.f32.mxu0 0.0
      %1211 = vmatmul.mubr.f32.gmra.mxu0 %v961
      %v1212 = vpop.f32.mrf.mxu0
      %v1213 = vadd.f32 %v764, %v1212
      %v1214 = vpop.f32.mrf.mxu0
      %1215 = vmatprep.mubr.f32.mxu0 0.0
      %1216 = vmatmul.mubr.f32.gmra.mxu0 %v964
      %v1217 = vpop.f32.mrf.mxu0
      %v1218 = vadd.f32 %v769, %v1217
      %v1219 = vpop.f32.mrf.mxu0
      %1220 = vmatprep.mubr.f32.mxu0 0.0
      %1221 = vmatmul.mubr.f32.gmra.mxu0 %v967
      %v1222 = vpop.f32.mrf.mxu0
      %v1223 = vadd.f32 %v774, %v1222
      %v1224 = vpop.f32.mrf.mxu0
      %1225 = vmatprep.mubr.f32.mxu0 0.0
      %1226 = vmatmul.mubr.f32.gmra.mxu0 %v970
      %v1227 = vpop.f32.mrf.mxu0
      %v1228 = vadd.f32 %v779, %v1227
      %v1229 = vpop.f32.mrf.mxu0
      %1230 = vmatprep.mubr.f32.mxu0 0.0
      %1231 = vmatmul.mubr.f32.gmra.mxu0 %v973
      %v1232 = vpop.f32.mrf.mxu0
      %v1233 = vadd.f32 %v784, %v1232
      %v1234 = vpop.f32.mrf.mxu0
      %1235 = vmatprep.mubr.f32.mxu0 0.0
      %1236 = vmatmul.mubr.f32.gmra.mxu0 %v976
      %v1237 = vpop.f32.mrf.mxu0
      %v1238 = vadd.f32 %v789, %v1237
      %v1239 = vpop.f32.mrf.mxu0
      %1240 = vmatprep.mubr.f32.mxu0 0.0
      %1241 = vmatmul.mubr.f32.gmra.mxu0 %v979
      %v1242 = vpop.f32.mrf.mxu0
      %v1243 = vadd.f32 %v794, %v1242
      %v1244 = vpop.f32.mrf.mxu0
      %1245 = vmatprep.mubr.f32.mxu0 0.0
      %1246 = vmatmul.mubr.f32.gmra.mxu0 %v982
      %v1247 = vpop.f32.mrf.mxu0
      %v1248 = vadd.f32 %v799, %v1247
      %v1249 = vpop.f32.mrf.mxu0
      %1250 = vmatprep.mubr.f32.mxu0 0.0
      %1251 = vmatmul.mubr.f32.gmra.mxu0 %v985
      %v1252 = vpop.f32.mrf.mxu0
      %v1253 = vadd.f32 %v804, %v1252
      %v1254 = vpop.f32.mrf.mxu0
      %1255 = vmatprep.mubr.f32.mxu0 0.0
      %1256 = vmatmul.mubr.f32.gmra.mxu0 %v988
      %v1257 = vpop.f32.mrf.mxu0
      %v1258 = vadd.f32 %v809, %v1257
      %v1259 = vpop.f32.mrf.mxu0
      %1260 = vmatprep.mubr.f32.mxu0 0.0
      %1261 = vmatmul.mubr.f32.gmra.mxu0 %v991
      %v1262 = vpop.f32.mrf.mxu0
      %v1263 = vadd.f32 %v814, %v1262
      %v1264 = vpop.f32.mrf.mxu0
      %1265 = vmatprep.mubr.f32.mxu0 0.0
      %1266 = vmatmul.mubr.f32.gmra.mxu0 %v994
      %v1267 = vpop.f32.mrf.mxu0
      %v1268 = vadd.f32 %v819, %v1267
      %v1269 = vpop.f32.mrf.mxu0
      %1270 = vmatprep.mubr.f32.mxu0 0.0
      %1271 = vmatmul.mubr.f32.gmra.mxu0 %v997
      %v1272 = vpop.f32.mrf.mxu0
      %v1273 = vadd.f32 %v824, %v1272
      %v1274 = vpop.f32.mrf.mxu0
      %1275 = vmatprep.mubr.f32.mxu0 0.0
      %1276 = vmatmul.mubr.f32.gmra.mxu0 %v1000
      %v1277 = vpop.f32.mrf.mxu0
      %v1278 = vadd.f32 %v829, %v1277
      %v1279 = vpop.f32.mrf.mxu0
      %1280 = vmatprep.mubr.f32.mxu0 0.0
      %1281 = vmatmul.mubr.f32.gmra.mxu0 %v1003
      %v1282 = vpop.f32.mrf.mxu0
      %v1283 = vadd.f32 %v834, %v1282
      %v1284 = vpop.f32.mrf.mxu0
      %1285 = vmatprep.mubr.f32.mxu0 0.0
      %1286 = vmatmul.mubr.f32.gmra.mxu0 %v1006
      %v1287 = vpop.f32.mrf.mxu0
      %v1288 = vadd.f32 %v839, %v1287
      %v1289 = vpop.f32.mrf.mxu0
      %1290 = vmatprep.mubr.f32.mxu0 0.0
      %1291 = vmatmul.mubr.f32.gmra.mxu0 %v1009
      %v1292 = vpop.f32.mrf.mxu0
      %v1293 = vadd.f32 %v844, %v1292
      %v1294 = vpop.f32.mrf.mxu0
      %1295 = vmatprep.mubr.f32.mxu0 0.0
      %1296 = vmatmul.mubr.f32.gmra.mxu0 %v1012
      %v1297 = vpop.f32.mrf.mxu0
      %v1298 = vadd.f32 %v849, %v1297
      %v1299 = vpop.f32.mrf.mxu0
      %1300 = vmatprep.mubr.f32.mxu0 0.0
      %1301 = vmatmul.mubr.f32.gmra.mxu0 %v1015
      %v1302 = vpop.f32.mrf.mxu0
      %v1303 = vadd.f32 %v854, %v1302
      %v1304 = vpop.f32.mrf.mxu0
      %1305 = vmatprep.mubr.f32.mxu0 0.0
      %1306 = vmatmul.mubr.f32.gmra.mxu0 %v1018
      %v1307 = vpop.f32.mrf.mxu0
      %v1308 = vadd.f32 %v859, %v1307
      %v1309 = vpop.f32.mrf.mxu0
      %1310 = vmatprep.mubr.f32.mxu0 0.0
      %1311 = vmatmul.mubr.f32.gmra.mxu0 %v1021
      %v1312 = vpop.f32.mrf.mxu0
      %v1313 = vadd.f32 %v864, %v1312
      %v1314 = vpop.f32.mrf.mxu0
      %1315 = vmatprep.mubr.f32.mxu0 0.0
      %1316 = vmatmul.mubr.f32.gmra.mxu0 %v1024
      %v1317 = vpop.f32.mrf.mxu0
      %v1318 = vadd.f32 %v869, %v1317
      %v1319 = vpop.f32.mrf.mxu0
      %1320 = vmatprep.mubr.f32.mxu0 0.0
      %1321 = vmatmul.mubr.f32.gmra.mxu0 %v1027
      %v1322 = vpop.f32.mrf.mxu0
      %v1323 = vadd.f32 %v874, %v1322
      %v1324 = vpop.f32.mrf.mxu0
      %1325 = vmatprep.mubr.f32.mxu0 0.0
      %1326 = vmatmul.mubr.f32.gmra.mxu0 %v1030
      %v1327 = vpop.f32.mrf.mxu0
      %v1328 = vadd.f32 %v879, %v1327
      %v1329 = vpop.f32.mrf.mxu0
      %1330 = vmatprep.mubr.f32.mxu0 0.0
      %1331 = vmatmul.mubr.f32.gmra.mxu0 %v1033
      %v1332 = vpop.f32.mrf.mxu0
      %v1333 = vadd.f32 %v884, %v1332
      %v1334 = vpop.f32.mrf.mxu0
      %1335 = vmatprep.mubr.f32.mxu0 0.0
      %1336 = vmatmul.mubr.f32.gmra.mxu0 %v1036
      %v1337 = vpop.f32.mrf.mxu0
      %v1338 = vadd.f32 %v889, %v1337
      %v1339 = vpop.f32.mrf.mxu0
      %1340 = vmatprep.mubr.f32.mxu0 0.0
      %1341 = vmatmul.mubr.f32.gmra.mxu0 %v1039
      %v1342 = vpop.f32.mrf.mxu0
      %v1343 = vadd.f32 %v894, %v1342
      %v1344 = vpop.f32.mrf.mxu0
      %1345 = vdwg.mxu0
      %s1346 = scalar_lea.vmem [#allocation2], 48
      %v1347 = vld [vmem:[%s1346] sm:$0xff]
      %v1348 = vld [vmem:[%s1346 + $0x8] sm:$0xff]
      %v1349 = vld [vmem:[%s1346 + $0x10] sm:$0xff]
      %v1350 = vld [vmem:[%s1346 + $0x18] sm:$0xff]
      %v1351 = vld [vmem:[%s1346 + $0x20] sm:$0xff]
      %v1352 = vld [vmem:[%s1346 + $0x28] sm:$0xff]
      %v1353 = vld [vmem:[%s1346 + $0x30] sm:$0xff]
      %v1354 = vld [vmem:[%s1346 + $0x38] sm:$0xff]
      %v1355 = vld [vmem:[%s1346 + $0x40] sm:$0xff]
      %v1356 = vld [vmem:[%s1346 + $0x48] sm:$0xff]
      %v1357 = vld [vmem:[%s1346 + $0x50] sm:$0xff]
      %v1358 = vld [vmem:[%s1346 + $0x58] sm:$0xff]
      %v1359 = vld [vmem:[%s1346 + $0x60] sm:$0xff]
      %v1360 = vld [vmem:[%s1346 + $0x68] sm:$0xff]
      %v1361 = vld [vmem:[%s1346 + $0x70] sm:$0xff]
      %v1362 = vld [vmem:[%s1346 + $0x78] sm:$0xff]
      %v1363 = vld [vmem:[%s1346 + $0x80] sm:$0xff]
      %v1364 = vld [vmem:[%s1346 + $0x88] sm:$0xff]
      %v1365 = vld [vmem:[%s1346 + $0x90] sm:$0xff]
      %v1366 = vld [vmem:[%s1346 + $0x98] sm:$0xff]
      %v1367 = vld [vmem:[%s1346 + $0xa0] sm:$0xff]
      %v1368 = vld [vmem:[%s1346 + $0xa8] sm:$0xff]
      %v1369 = vld [vmem:[%s1346 + $0xb0] sm:$0xff]
      %v1370 = vld [vmem:[%s1346 + $0xb8] sm:$0xff]
      %v1371 = vld [vmem:[%s1346 + $0xc0] sm:$0xff]
      %v1372 = vld [vmem:[%s1346 + $0xc8] sm:$0xff]
      %v1373 = vld [vmem:[%s1346 + $0xd0] sm:$0xff]
      %v1374 = vld [vmem:[%s1346 + $0xd8] sm:$0xff]
      %v1375 = vld [vmem:[%s1346 + $0xe0] sm:$0xff]
      %v1376 = vld [vmem:[%s1346 + $0xe8] sm:$0xff]
      %v1377 = vld [vmem:[%s1346 + $0xf0] sm:$0xff]
      %v1378 = vld [vmem:[%s1346 + $0xf8] sm:$0xff]
      %v1379 = vld [vmem:[%s1346 + $0x100] sm:$0xff]
      %v1380 = vld [vmem:[%s1346 + $0x108] sm:$0xff]
      %v1381 = vld [vmem:[%s1346 + $0x110] sm:$0xff]
      %v1382 = vld [vmem:[%s1346 + $0x118] sm:$0xff]
      %v1383 = vld [vmem:[%s1346 + $0x120] sm:$0xff]
      %v1384 = vld [vmem:[%s1346 + $0x128] sm:$0xff]
      %v1385 = vld [vmem:[%s1346 + $0x130] sm:$0xff]
      %v1386 = vld [vmem:[%s1346 + $0x138] sm:$0xff]
      %v1387 = vld [vmem:[%s1346 + $0x140] sm:$0xff]
      %v1388 = vld [vmem:[%s1346 + $0x148] sm:$0xff]
      %v1389 = vld [vmem:[%s1346 + $0x150] sm:$0xff]
      %v1390 = vld [vmem:[%s1346 + $0x158] sm:$0xff]
      %v1391 = vld [vmem:[%s1346 + $0x160] sm:$0xff]
      %v1392 = vld [vmem:[%s1346 + $0x168] sm:$0xff]
      %v1393 = vld [vmem:[%s1346 + $0x170] sm:$0xff]
      %v1394 = vld [vmem:[%s1346 + $0x178] sm:$0xff]
      %s1395 = scalar_lea.vmem %s1, 128
      %v1396 = vld [vmem:[%s1395] sm:$0xff]
      %v1397 = vld [vmem:[%s1395 + $0x8] sm:$0xff]
      %v1398 = vld [vmem:[%s1395 + $0x10] sm:$0xff]
      %v1399 = vld [vmem:[%s1395 + $0x18] sm:$0xff]
      %v1400 = vld [vmem:[%s1395 + $0x20] sm:$0xff]
      %v1401 = vld [vmem:[%s1395 + $0x28] sm:$0xff]
      %v1402 = vld [vmem:[%s1395 + $0x30] sm:$0xff]
      %v1403 = vld [vmem:[%s1395 + $0x38] sm:$0xff]
      %v1405 = vsel %vm279, %v1347, 0
      %v1408 = vsel %vm279, %v1348, 0
      %v1411 = vsel %vm279, %v1349, 0
      %v1414 = vsel %vm279, %v1350, 0
      %v1417 = vsel %vm279, %v1351, 0
      %v1420 = vsel %vm279, %v1352, 0
      %v1423 = vsel %vm279, %v1353, 0
      %v1426 = vsel %vm279, %v1354, 0
      %v1429 = vsel %vm279, %v1355, 0
      %v1432 = vsel %vm279, %v1356, 0
      %v1435 = vsel %vm279, %v1357, 0
      %v1438 = vsel %vm279, %v1358, 0
      %v1441 = vsel %vm279, %v1359, 0
      %v1444 = vsel %vm279, %v1360, 0
      %v1447 = vsel %vm279, %v1361, 0
      %v1450 = vsel %vm279, %v1362, 0
      %v1453 = vsel %vm279, %v1363, 0
      %v1456 = vsel %vm279, %v1364, 0
      %v1459 = vsel %vm279, %v1365, 0
      %v1462 = vsel %vm279, %v1366, 0
      %v1465 = vsel %vm279, %v1367, 0
      %v1468 = vsel %vm279, %v1368, 0
      %v1471 = vsel %vm279, %v1369, 0
      %v1474 = vsel %vm279, %v1370, 0
      %v1477 = vsel %vm279, %v1371, 0
      %v1480 = vsel %vm279, %v1372, 0
      %v1483 = vsel %vm279, %v1373, 0
      %v1486 = vsel %vm279, %v1374, 0
      %v1489 = vsel %vm279, %v1375, 0
      %v1492 = vsel %vm279, %v1376, 0
      %v1495 = vsel %vm279, %v1377, 0
      %v1498 = vsel %vm279, %v1378, 0
      %v1501 = vsel %vm279, %v1379, 0
      %v1504 = vsel %vm279, %v1380, 0
      %v1507 = vsel %vm279, %v1381, 0
      %v1510 = vsel %vm279, %v1382, 0
      %v1513 = vsel %vm279, %v1383, 0
      %v1516 = vsel %vm279, %v1384, 0
      %v1519 = vsel %vm279, %v1385, 0
      %v1522 = vsel %vm279, %v1386, 0
      %v1525 = vsel %vm279, %v1387, 0
      %v1528 = vsel %vm279, %v1388, 0
      %v1531 = vsel %vm279, %v1389, 0
      %v1534 = vsel %vm279, %v1390, 0
      %v1537 = vsel %vm279, %v1391, 0
      %v1540 = vsel %vm279, %v1392, 0
      %v1543 = vsel %vm279, %v1393, 0
      %v1546 = vsel %vm279, %v1394, 0
      %1548 = vmatprep.subr.mxu0 0.0
      %1549 = vmatpush1.msra.mxu0 0.0
      %1550 = vmatprep.subr.mxu0 0.0
      %1551 = vmatpush1.msra.mxu0 0.0
      %1552 = vmatprep.subr.mxu0 0.0
      %1553 = vmatpush1.msra.mxu0 0.0
      %1554 = vmatprep.subr.mxu0 0.0
      %1555 = vmatpush1.msra.mxu0 0.0
      %1556 = vmatprep.subr.mxu0 0.0
      %1557 = vmatpush1.msra.mxu0 0.0
      %1558 = vmatprep.subr.mxu0 0.0
      %1559 = vmatpush1.msra.mxu0 0.0
      %1560 = vmatprep.subr.mxu0 0.0
      %1561 = vmatpush1.msra.mxu0 0.0
      %1562 = vmatprep.subr.mxu0 0.0
      %1563 = vmatpush1.msra.mxu0 0.0
      %1564 = vmatprep.subr.mxu0 0.0
      %1565 = vmatpush1.msra.mxu0 %v1403
      %1566 = vmatprep.subr.mxu0 0.0
      %1567 = vmatpush1.msra.mxu0 %v1402
      %1568 = vmatprep.subr.mxu0 0.0
      %1569 = vmatpush1.msra.mxu0 %v1401
      %1570 = vmatprep.subr.mxu0 0.0
      %1571 = vmatpush1.msra.mxu0 %v1400
      %1572 = vmatprep.subr.mxu0 0.0
      %1573 = vmatpush1.msra.mxu0 %v1399
      %1574 = vmatprep.subr.mxu0 0.0
      %1575 = vmatpush1.msra.mxu0 %v1398
      %1576 = vmatprep.subr.mxu0 0.0
      %1577 = vmatpush1.msra.mxu0 %v1397
      %1578 = vmatprep.subr.mxu0 0.0
      %1579 = vmatpush1.msra.mxu0 %v1396
      %1580 = vmatprep.subr.mxu0 0.0
      %1581 = vmatpush2.msra.mxu0 0.0
      %1582 = vmatprep.subr.mxu0 0.0
      %1583 = vmatpush2.msra.mxu0 0.0
      %1584 = vmatprep.subr.mxu0 0.0
      %1585 = vmatpush2.msra.mxu0 0.0
      %1586 = vmatprep.subr.mxu0 0.0
      %1587 = vmatpush2.msra.mxu0 0.0
      %1588 = vmatprep.subr.mxu0 0.0
      %1589 = vmatpush2.msra.mxu0 0.0
      %1590 = vmatprep.subr.mxu0 0.0
      %1591 = vmatpush2.msra.mxu0 0.0
      %1592 = vmatprep.subr.mxu0 0.0
      %1593 = vmatpush2.msra.mxu0 0.0
      %1594 = vmatprep.subr.mxu0 0.0
      %1595 = vmatpush2.msra.mxu0 0.0
      %1596 = vmatprep.subr.mxu0 0.0
      %1597 = vmatpush2.msra.mxu0 0.0
      %1598 = vmatprep.subr.mxu0 0.0
      %1599 = vmatpush2.msra.mxu0 0.0
      %1600 = vmatprep.subr.mxu0 0.0
      %1601 = vmatpush2.msra.mxu0 0.0
      %1602 = vmatprep.subr.mxu0 0.0
      %1603 = vmatpush2.msra.mxu0 0.0
      %1604 = vmatprep.subr.mxu0 0.0
      %1605 = vmatpush2.msra.mxu0 0.0
      %1606 = vmatprep.subr.mxu0 0.0
      %1607 = vmatpush2.msra.mxu0 0.0
      %1608 = vmatprep.subr.mxu0 0.0
      %1609 = vmatpush2.msra.mxu0 0.0
      %1610 = vmatprep.subr.mxu0 0.0
      %1611 = vmatpush2.msra.mxu0 0.0
      %1612 = vmatprep.mubr.f32.mxu0 0.0
      %1613 = vmatmul.mubr.f32.gmra.mxu0 %v1405
      %v1614 = vpop.f32.mrf.mxu0
      %v1615 = vadd.f32 0.0, %v1614
      %v1616 = vpop.f32.mrf.mxu0
      %1617 = vmatprep.mubr.f32.mxu0 0.0
      %1618 = vmatmul.mubr.f32.gmra.mxu0 %v1408
      %v1619 = vpop.f32.mrf.mxu0
      %v1620 = vadd.f32 0.0, %v1619
      %v1621 = vpop.f32.mrf.mxu0
      %1622 = vmatprep.mubr.f32.mxu0 0.0
      %1623 = vmatmul.mubr.f32.gmra.mxu0 %v1411
      %v1624 = vpop.f32.mrf.mxu0
      %v1625 = vadd.f32 0.0, %v1624
      %v1626 = vpop.f32.mrf.mxu0
      %1627 = vmatprep.mubr.f32.mxu0 0.0
      %1628 = vmatmul.mubr.f32.gmra.mxu0 %v1414
      %v1629 = vpop.f32.mrf.mxu0
      %v1630 = vadd.f32 0.0, %v1629
      %v1631 = vpop.f32.mrf.mxu0
      %1632 = vmatprep.mubr.f32.mxu0 0.0
      %1633 = vmatmul.mubr.f32.gmra.mxu0 %v1417
      %v1634 = vpop.f32.mrf.mxu0
      %v1635 = vadd.f32 0.0, %v1634
      %v1636 = vpop.f32.mrf.mxu0
      %1637 = vmatprep.mubr.f32.mxu0 0.0
      %1638 = vmatmul.mubr.f32.gmra.mxu0 %v1420
      %v1639 = vpop.f32.mrf.mxu0
      %v1640 = vadd.f32 0.0, %v1639
      %v1641 = vpop.f32.mrf.mxu0
      %1642 = vmatprep.mubr.f32.mxu0 0.0
      %1643 = vmatmul.mubr.f32.gmra.mxu0 %v1423
      %v1644 = vpop.f32.mrf.mxu0
      %v1645 = vadd.f32 0.0, %v1644
      %v1646 = vpop.f32.mrf.mxu0
      %1647 = vmatprep.mubr.f32.mxu0 0.0
      %1648 = vmatmul.mubr.f32.gmra.mxu0 %v1426
      %v1649 = vpop.f32.mrf.mxu0
      %v1650 = vadd.f32 0.0, %v1649
      %v1651 = vpop.f32.mrf.mxu0
      %1652 = vmatprep.mubr.f32.mxu0 0.0
      %1653 = vmatmul.mubr.f32.gmra.mxu0 %v1429
      %v1654 = vpop.f32.mrf.mxu0
      %v1655 = vadd.f32 0.0, %v1654
      %v1656 = vpop.f32.mrf.mxu0
      %1657 = vmatprep.mubr.f32.mxu0 0.0
      %1658 = vmatmul.mubr.f32.gmra.mxu0 %v1432
      %v1659 = vpop.f32.mrf.mxu0
      %v1660 = vadd.f32 0.0, %v1659
      %v1661 = vpop.f32.mrf.mxu0
      %1662 = vmatprep.mubr.f32.mxu0 0.0
      %1663 = vmatmul.mubr.f32.gmra.mxu0 %v1435
      %v1664 = vpop.f32.mrf.mxu0
      %v1665 = vadd.f32 0.0, %v1664
      %v1666 = vpop.f32.mrf.mxu0
      %1667 = vmatprep.mubr.f32.mxu0 0.0
      %1668 = vmatmul.mubr.f32.gmra.mxu0 %v1438
      %v1669 = vpop.f32.mrf.mxu0
      %v1670 = vadd.f32 0.0, %v1669
      %v1671 = vpop.f32.mrf.mxu0
      %1672 = vmatprep.mubr.f32.mxu0 0.0
      %1673 = vmatmul.mubr.f32.gmra.mxu0 %v1441
      %v1674 = vpop.f32.mrf.mxu0
      %v1675 = vadd.f32 0.0, %v1674
      %v1676 = vpop.f32.mrf.mxu0
      %1677 = vmatprep.mubr.f32.mxu0 0.0
      %1678 = vmatmul.mubr.f32.gmra.mxu0 %v1444
      %v1679 = vpop.f32.mrf.mxu0
      %v1680 = vadd.f32 0.0, %v1679
      %v1681 = vpop.f32.mrf.mxu0
      %1682 = vmatprep.mubr.f32.mxu0 0.0
      %1683 = vmatmul.mubr.f32.gmra.mxu0 %v1447
      %v1684 = vpop.f32.mrf.mxu0
      %v1685 = vadd.f32 0.0, %v1684
      %v1686 = vpop.f32.mrf.mxu0
      %1687 = vmatprep.mubr.f32.mxu0 0.0
      %1688 = vmatmul.mubr.f32.gmra.mxu0 %v1450
      %v1689 = vpop.f32.mrf.mxu0
      %v1690 = vadd.f32 0.0, %v1689
      %v1691 = vpop.f32.mrf.mxu0
      %1692 = vmatprep.mubr.f32.mxu0 0.0
      %1693 = vmatmul.mubr.f32.gmra.mxu0 %v1453
      %v1694 = vpop.f32.mrf.mxu0
      %v1695 = vadd.f32 0.0, %v1694
      %v1696 = vpop.f32.mrf.mxu0
      %1697 = vmatprep.mubr.f32.mxu0 0.0
      %1698 = vmatmul.mubr.f32.gmra.mxu0 %v1456
      %v1699 = vpop.f32.mrf.mxu0
      %v1700 = vadd.f32 0.0, %v1699
      %v1701 = vpop.f32.mrf.mxu0
      %1702 = vmatprep.mubr.f32.mxu0 0.0
      %1703 = vmatmul.mubr.f32.gmra.mxu0 %v1459
      %v1704 = vpop.f32.mrf.mxu0
      %v1705 = vadd.f32 0.0, %v1704
      %v1706 = vpop.f32.mrf.mxu0
      %1707 = vmatprep.mubr.f32.mxu0 0.0
      %1708 = vmatmul.mubr.f32.gmra.mxu0 %v1462
      %v1709 = vpop.f32.mrf.mxu0
      %v1710 = vadd.f32 0.0, %v1709
      %v1711 = vpop.f32.mrf.mxu0
      %1712 = vmatprep.mubr.f32.mxu0 0.0
      %1713 = vmatmul.mubr.f32.gmra.mxu0 %v1465
      %v1714 = vpop.f32.mrf.mxu0
      %v1715 = vadd.f32 0.0, %v1714
      %v1716 = vpop.f32.mrf.mxu0
      %1717 = vmatprep.mubr.f32.mxu0 0.0
      %1718 = vmatmul.mubr.f32.gmra.mxu0 %v1468
      %v1719 = vpop.f32.mrf.mxu0
      %v1720 = vadd.f32 0.0, %v1719
      %v1721 = vpop.f32.mrf.mxu0
      %1722 = vmatprep.mubr.f32.mxu0 0.0
      %1723 = vmatmul.mubr.f32.gmra.mxu0 %v1471
      %v1724 = vpop.f32.mrf.mxu0
      %v1725 = vadd.f32 0.0, %v1724
      %v1726 = vpop.f32.mrf.mxu0
      %1727 = vmatprep.mubr.f32.mxu0 0.0
      %1728 = vmatmul.mubr.f32.gmra.mxu0 %v1474
      %v1729 = vpop.f32.mrf.mxu0
      %v1730 = vadd.f32 0.0, %v1729
      %v1731 = vpop.f32.mrf.mxu0
      %1732 = vmatprep.mubr.f32.mxu0 0.0
      %1733 = vmatmul.mubr.f32.gmra.mxu0 %v1477
      %v1734 = vpop.f32.mrf.mxu0
      %v1735 = vadd.f32 0.0, %v1734
      %v1736 = vpop.f32.mrf.mxu0
      %1737 = vmatprep.mubr.f32.mxu0 0.0
      %1738 = vmatmul.mubr.f32.gmra.mxu0 %v1480
      %v1739 = vpop.f32.mrf.mxu0
      %v1740 = vadd.f32 0.0, %v1739
      %v1741 = vpop.f32.mrf.mxu0
      %1742 = vmatprep.mubr.f32.mxu0 0.0
      %1743 = vmatmul.mubr.f32.gmra.mxu0 %v1483
      %v1744 = vpop.f32.mrf.mxu0
      %v1745 = vadd.f32 0.0, %v1744
      %v1746 = vpop.f32.mrf.mxu0
      %1747 = vmatprep.mubr.f32.mxu0 0.0
      %1748 = vmatmul.mubr.f32.gmra.mxu0 %v1486
      %v1749 = vpop.f32.mrf.mxu0
      %v1750 = vadd.f32 0.0, %v1749
      %v1751 = vpop.f32.mrf.mxu0
      %1752 = vmatprep.mubr.f32.mxu0 0.0
      %1753 = vmatmul.mubr.f32.gmra.mxu0 %v1489
      %v1754 = vpop.f32.mrf.mxu0
      %v1755 = vadd.f32 0.0, %v1754
      %v1756 = vpop.f32.mrf.mxu0
      %1757 = vmatprep.mubr.f32.mxu0 0.0
      %1758 = vmatmul.mubr.f32.gmra.mxu0 %v1492
      %v1759 = vpop.f32.mrf.mxu0
      %v1760 = vadd.f32 0.0, %v1759
      %v1761 = vpop.f32.mrf.mxu0
      %1762 = vmatprep.mubr.f32.mxu0 0.0
      %1763 = vmatmul.mubr.f32.gmra.mxu0 %v1495
      %v1764 = vpop.f32.mrf.mxu0
      %v1765 = vadd.f32 0.0, %v1764
      %v1766 = vpop.f32.mrf.mxu0
      %1767 = vmatprep.mubr.f32.mxu0 0.0
      %1768 = vmatmul.mubr.f32.gmra.mxu0 %v1498
      %v1769 = vpop.f32.mrf.mxu0
      %v1770 = vadd.f32 0.0, %v1769
      %v1771 = vpop.f32.mrf.mxu0
      %1772 = vmatprep.mubr.f32.mxu0 0.0
      %1773 = vmatmul.mubr.f32.gmra.mxu0 %v1501
      %v1774 = vpop.f32.mrf.mxu0
      %v1775 = vadd.f32 0.0, %v1774
      %v1776 = vpop.f32.mrf.mxu0
      %1777 = vmatprep.mubr.f32.mxu0 0.0
      %1778 = vmatmul.mubr.f32.gmra.mxu0 %v1504
      %v1779 = vpop.f32.mrf.mxu0
      %v1780 = vadd.f32 0.0, %v1779
      %v1781 = vpop.f32.mrf.mxu0
      %1782 = vmatprep.mubr.f32.mxu0 0.0
      %1783 = vmatmul.mubr.f32.gmra.mxu0 %v1507
      %v1784 = vpop.f32.mrf.mxu0
      %v1785 = vadd.f32 0.0, %v1784
      %v1786 = vpop.f32.mrf.mxu0
      %1787 = vmatprep.mubr.f32.mxu0 0.0
      %1788 = vmatmul.mubr.f32.gmra.mxu0 %v1510
      %v1789 = vpop.f32.mrf.mxu0
      %v1790 = vadd.f32 0.0, %v1789
      %v1791 = vpop.f32.mrf.mxu0
      %1792 = vmatprep.mubr.f32.mxu0 0.0
      %1793 = vmatmul.mubr.f32.gmra.mxu0 %v1513
      %v1794 = vpop.f32.mrf.mxu0
      %v1795 = vadd.f32 0.0, %v1794
      %v1796 = vpop.f32.mrf.mxu0
      %1797 = vmatprep.mubr.f32.mxu0 0.0
      %1798 = vmatmul.mubr.f32.gmra.mxu0 %v1516
      %v1799 = vpop.f32.mrf.mxu0
      %v1800 = vadd.f32 0.0, %v1799
      %v1801 = vpop.f32.mrf.mxu0
      %1802 = vmatprep.mubr.f32.mxu0 0.0
      %1803 = vmatmul.mubr.f32.gmra.mxu0 %v1519
      %v1804 = vpop.f32.mrf.mxu0
      %v1805 = vadd.f32 0.0, %v1804
      %v1806 = vpop.f32.mrf.mxu0
      %1807 = vmatprep.mubr.f32.mxu0 0.0
      %1808 = vmatmul.mubr.f32.gmra.mxu0 %v1522
      %v1809 = vpop.f32.mrf.mxu0
      %v1810 = vadd.f32 0.0, %v1809
      %v1811 = vpop.f32.mrf.mxu0
      %1812 = vmatprep.mubr.f32.mxu0 0.0
      %1813 = vmatmul.mubr.f32.gmra.mxu0 %v1525
      %v1814 = vpop.f32.mrf.mxu0
      %v1815 = vadd.f32 0.0, %v1814
      %v1816 = vpop.f32.mrf.mxu0
      %1817 = vmatprep.mubr.f32.mxu0 0.0
      %1818 = vmatmul.mubr.f32.gmra.mxu0 %v1528
      %v1819 = vpop.f32.mrf.mxu0
      %v1820 = vadd.f32 0.0, %v1819
      %v1821 = vpop.f32.mrf.mxu0
      %1822 = vmatprep.mubr.f32.mxu0 0.0
      %1823 = vmatmul.mubr.f32.gmra.mxu0 %v1531
      %v1824 = vpop.f32.mrf.mxu0
      %v1825 = vadd.f32 0.0, %v1824
      %v1826 = vpop.f32.mrf.mxu0
      %1827 = vmatprep.mubr.f32.mxu0 0.0
      %1828 = vmatmul.mubr.f32.gmra.mxu0 %v1534
      %v1829 = vpop.f32.mrf.mxu0
      %v1830 = vadd.f32 0.0, %v1829
      %v1831 = vpop.f32.mrf.mxu0
      %1832 = vmatprep.mubr.f32.mxu0 0.0
      %1833 = vmatmul.mubr.f32.gmra.mxu0 %v1537
      %v1834 = vpop.f32.mrf.mxu0
      %v1835 = vadd.f32 0.0, %v1834
      %v1836 = vpop.f32.mrf.mxu0
      %1837 = vmatprep.mubr.f32.mxu0 0.0
      %1838 = vmatmul.mubr.f32.gmra.mxu0 %v1540
      %v1839 = vpop.f32.mrf.mxu0
      %v1840 = vadd.f32 0.0, %v1839
      %v1841 = vpop.f32.mrf.mxu0
      %1842 = vmatprep.mubr.f32.mxu0 0.0
      %1843 = vmatmul.mubr.f32.gmra.mxu0 %v1543
      %v1844 = vpop.f32.mrf.mxu0
      %v1845 = vadd.f32 0.0, %v1844
      %v1846 = vpop.f32.mrf.mxu0
      %1847 = vmatprep.mubr.f32.mxu0 0.0
      %1848 = vmatmul.mubr.f32.gmra.mxu0 %v1546
      %v1849 = vpop.f32.mrf.mxu0
      %v1850 = vadd.f32 0.0, %v1849
      %v1851 = vpop.f32.mrf.mxu0
      %1852 = vdwg.mxu0
      %v1853 = vadd.f32 %v1108, %v1615
      %v1854 = vadd.f32 %v1113, %v1620
      %v1855 = vadd.f32 %v1118, %v1625
      %v1856 = vadd.f32 %v1123, %v1630
      %v1857 = vadd.f32 %v1128, %v1635
      %v1858 = vadd.f32 %v1133, %v1640
      %v1859 = vadd.f32 %v1138, %v1645
      %v1860 = vadd.f32 %v1143, %v1650
      %v1861 = vadd.f32 %v1148, %v1655
      %v1862 = vadd.f32 %v1153, %v1660
      %v1863 = vadd.f32 %v1158, %v1665
      %v1864 = vadd.f32 %v1163, %v1670
      %v1865 = vadd.f32 %v1168, %v1675
      %v1866 = vadd.f32 %v1173, %v1680
      %v1867 = vadd.f32 %v1178, %v1685
      %v1868 = vadd.f32 %v1183, %v1690
      %v1869 = vadd.f32 %v1188, %v1695
      %v1870 = vadd.f32 %v1193, %v1700
      %v1871 = vadd.f32 %v1198, %v1705
      %v1872 = vadd.f32 %v1203, %v1710
      %v1873 = vadd.f32 %v1208, %v1715
      %v1874 = vadd.f32 %v1213, %v1720
      %v1875 = vadd.f32 %v1218, %v1725
      %v1876 = vadd.f32 %v1223, %v1730
      %v1877 = vadd.f32 %v1228, %v1735
      %v1878 = vadd.f32 %v1233, %v1740
      %v1879 = vadd.f32 %v1238, %v1745
      %v1880 = vadd.f32 %v1243, %v1750
      %v1881 = vadd.f32 %v1248, %v1755
      %v1882 = vadd.f32 %v1253, %v1760
      %v1883 = vadd.f32 %v1258, %v1765
      %v1884 = vadd.f32 %v1263, %v1770
      %v1885 = vadd.f32 %v1268, %v1775
      %v1886 = vadd.f32 %v1273, %v1780
      %v1887 = vadd.f32 %v1278, %v1785
      %v1888 = vadd.f32 %v1283, %v1790
      %v1889 = vadd.f32 %v1288, %v1795
      %v1890 = vadd.f32 %v1293, %v1800
      %v1891 = vadd.f32 %v1298, %v1805
      %v1892 = vadd.f32 %v1303, %v1810
      %v1893 = vadd.f32 %v1308, %v1815
      %v1894 = vadd.f32 %v1313, %v1820
      %v1895 = vadd.f32 %v1318, %v1825
      %v1896 = vadd.f32 %v1323, %v1830
      %v1897 = vadd.f32 %v1328, %v1835
      %v1898 = vadd.f32 %v1333, %v1840
      %v1899 = vadd.f32 %v1338, %v1845
      %v1900 = vadd.f32 %v1343, %v1850
      %v1901 = vld [vmem:[%s2] sm:$0x1]
      %v1902 = vlaneseq
      %v1903 = vshrl.u32 %v1902, 7
      %v1904 = vsub.s32 0, %v1903
      %v1905 = vrot.slane %v1901, %v1904
      %v1906 = vadd.f32 %v1853, %v1905
      %v1907 = vadd.f32 %v1854, %v1905
      %v1908 = vadd.f32 %v1855, %v1905
      %v1909 = vadd.f32 %v1856, %v1905
      %v1910 = vadd.f32 %v1857, %v1905
      %v1911 = vadd.f32 %v1858, %v1905
      %v1912 = vadd.f32 %v1859, %v1905
      %v1913 = vadd.f32 %v1860, %v1905
      %v1914 = vadd.f32 %v1861, %v1905
      %v1915 = vadd.f32 %v1862, %v1905
      %v1916 = vadd.f32 %v1863, %v1905
      %v1917 = vadd.f32 %v1864, %v1905
      %v1918 = vadd.f32 %v1865, %v1905
      %v1919 = vadd.f32 %v1866, %v1905
      %v1920 = vadd.f32 %v1867, %v1905
      %v1921 = vadd.f32 %v1868, %v1905
      %v1922 = vadd.f32 %v1869, %v1905
      %v1923 = vadd.f32 %v1870, %v1905
      %v1924 = vadd.f32 %v1871, %v1905
      %v1925 = vadd.f32 %v1872, %v1905
      %v1926 = vadd.f32 %v1873, %v1905
      %v1927 = vadd.f32 %v1874, %v1905
      %v1928 = vadd.f32 %v1875, %v1905
      %v1929 = vadd.f32 %v1876, %v1905
      %v1930 = vadd.f32 %v1877, %v1905
      %v1931 = vadd.f32 %v1878, %v1905
      %v1932 = vadd.f32 %v1879, %v1905
      %v1933 = vadd.f32 %v1880, %v1905
      %v1934 = vadd.f32 %v1881, %v1905
      %v1935 = vadd.f32 %v1882, %v1905
      %v1936 = vadd.f32 %v1883, %v1905
      %v1937 = vadd.f32 %v1884, %v1905
      %v1938 = vadd.f32 %v1885, %v1905
      %v1939 = vadd.f32 %v1886, %v1905
      %v1940 = vadd.f32 %v1887, %v1905
      %v1941 = vadd.f32 %v1888, %v1905
      %v1942 = vadd.f32 %v1889, %v1905
      %v1943 = vadd.f32 %v1890, %v1905
      %v1944 = vadd.f32 %v1891, %v1905
      %v1945 = vadd.f32 %v1892, %v1905
      %v1946 = vadd.f32 %v1893, %v1905
      %v1947 = vadd.f32 %v1894, %v1905
      %v1948 = vadd.f32 %v1895, %v1905
      %v1949 = vadd.f32 %v1896, %v1905
      %v1950 = vadd.f32 %v1897, %v1905
      %v1951 = vadd.f32 %v1898, %v1905
      %v1952 = vadd.f32 %v1899, %v1905
      %v1953 = vadd.f32 %v1900, %v1905
      %v1954 = vmax.f32 %v1906, 0.0
      %v1955 = vmax.f32 %v1907, 0.0
      %v1956 = vmax.f32 %v1908, 0.0
      %v1957 = vmax.f32 %v1909, 0.0
      %v1958 = vmax.f32 %v1910, 0.0
      %v1959 = vmax.f32 %v1911, 0.0
      %v1960 = vmax.f32 %v1912, 0.0
      %v1961 = vmax.f32 %v1913, 0.0
      %v1962 = vmax.f32 %v1914, 0.0
      %v1963 = vmax.f32 %v1915, 0.0
      %v1964 = vmax.f32 %v1916, 0.0
      %v1965 = vmax.f32 %v1917, 0.0
      %v1966 = vmax.f32 %v1918, 0.0
      %v1967 = vmax.f32 %v1919, 0.0
      %v1968 = vmax.f32 %v1920, 0.0
      %v1969 = vmax.f32 %v1921, 0.0
      %v1970 = vmax.f32 %v1922, 0.0
      %v1971 = vmax.f32 %v1923, 0.0
      %v1972 = vmax.f32 %v1924, 0.0
      %v1973 = vmax.f32 %v1925, 0.0
      %v1974 = vmax.f32 %v1926, 0.0
      %v1975 = vmax.f32 %v1927, 0.0
      %v1976 = vmax.f32 %v1928, 0.0
      %v1977 = vmax.f32 %v1929, 0.0
      %v1978 = vmax.f32 %v1930, 0.0
      %v1979 = vmax.f32 %v1931, 0.0
      %v1980 = vmax.f32 %v1932, 0.0
      %v1981 = vmax.f32 %v1933, 0.0
      %v1982 = vmax.f32 %v1934, 0.0
      %v1983 = vmax.f32 %v1935, 0.0
      %v1984 = vmax.f32 %v1936, 0.0
      %v1985 = vmax.f32 %v1937, 0.0
      %v1986 = vmax.f32 %v1938, 0.0
      %v1987 = vmax.f32 %v1939, 0.0
      %v1988 = vmax.f32 %v1940, 0.0
      %v1989 = vmax.f32 %v1941, 0.0
      %v1990 = vmax.f32 %v1942, 0.0
      %v1991 = vmax.f32 %v1943, 0.0
      %v1992 = vmax.f32 %v1944, 0.0
      %v1993 = vmax.f32 %v1945, 0.0
      %v1994 = vmax.f32 %v1946, 0.0
      %v1995 = vmax.f32 %v1947, 0.0
      %v1996 = vmax.f32 %v1948, 0.0
      %v1997 = vmax.f32 %v1949, 0.0
      %v1998 = vmax.f32 %v1950, 0.0
      %v1999 = vmax.f32 %v1951, 0.0
      %v2000 = vmax.f32 %v1952, 0.0
      %v2001 = vmax.f32 %v1953, 0.0
      %v2002 = vld [vmem:[%s2 + $0x1] sm:$0x1]
      %v2003 = vlaneseq
      %v2004 = vshrl.u32 %v2003, 7
      %v2005 = vsub.s32 0, %v2004
      %v2006 = vrot.slane %v2002, %v2005
      %v2007 = vmul.f32 %v1954, %v2006
      %v2008 = vmul.f32 %v1955, %v2006
      %v2009 = vmul.f32 %v1956, %v2006
      %v2010 = vmul.f32 %v1957, %v2006
      %v2011 = vmul.f32 %v1958, %v2006
      %v2012 = vmul.f32 %v1959, %v2006
      %v2013 = vmul.f32 %v1960, %v2006
      %v2014 = vmul.f32 %v1961, %v2006
      %v2015 = vmul.f32 %v1962, %v2006
      %v2016 = vmul.f32 %v1963, %v2006
      %v2017 = vmul.f32 %v1964, %v2006
      %v2018 = vmul.f32 %v1965, %v2006
      %v2019 = vmul.f32 %v1966, %v2006
      %v2020 = vmul.f32 %v1967, %v2006
      %v2021 = vmul.f32 %v1968, %v2006
      %v2022 = vmul.f32 %v1969, %v2006
      %v2023 = vmul.f32 %v1970, %v2006
      %v2024 = vmul.f32 %v1971, %v2006
      %v2025 = vmul.f32 %v1972, %v2006
      %v2026 = vmul.f32 %v1973, %v2006
      %v2027 = vmul.f32 %v1974, %v2006
      %v2028 = vmul.f32 %v1975, %v2006
      %v2029 = vmul.f32 %v1976, %v2006
      %v2030 = vmul.f32 %v1977, %v2006
      %v2031 = vmul.f32 %v1978, %v2006
      %v2032 = vmul.f32 %v1979, %v2006
      %v2033 = vmul.f32 %v1980, %v2006
      %v2034 = vmul.f32 %v1981, %v2006
      %v2035 = vmul.f32 %v1982, %v2006
      %v2036 = vmul.f32 %v1983, %v2006
      %v2037 = vmul.f32 %v1984, %v2006
      %v2038 = vmul.f32 %v1985, %v2006
      %v2039 = vmul.f32 %v1986, %v2006
      %v2040 = vmul.f32 %v1987, %v2006
      %v2041 = vmul.f32 %v1988, %v2006
      %v2042 = vmul.f32 %v1989, %v2006
      %v2043 = vmul.f32 %v1990, %v2006
      %v2044 = vmul.f32 %v1991, %v2006
      %v2045 = vmul.f32 %v1992, %v2006
      %v2046 = vmul.f32 %v1993, %v2006
      %v2047 = vmul.f32 %v1994, %v2006
      %v2048 = vmul.f32 %v1995, %v2006
      %v2049 = vmul.f32 %v1996, %v2006
      %v2050 = vmul.f32 %v1997, %v2006
      %v2051 = vmul.f32 %v1998, %v2006
      %v2052 = vmul.f32 %v1999, %v2006
      %v2053 = vmul.f32 %v2000, %v2006
      %v2054 = vmul.f32 %v2001, %v2006
      %v2055 = vld [vmem:[%s2 + $0x2] sm:$0x1]
      %v2056 = vlaneseq
      %v2057 = vshrl.u32 %v2056, 7
      %v2058 = vsub.s32 0, %v2057
      %v2059 = vrot.slane %v2055, %v2058
      %v2060 = vadd.f32 %v2007, %v2059
      %v2061 = vadd.f32 %v2008, %v2059
      %v2062 = vadd.f32 %v2009, %v2059
      %v2063 = vadd.f32 %v2010, %v2059
      %v2064 = vadd.f32 %v2011, %v2059
      %v2065 = vadd.f32 %v2012, %v2059
      %v2066 = vadd.f32 %v2013, %v2059
      %v2067 = vadd.f32 %v2014, %v2059
      %v2068 = vadd.f32 %v2015, %v2059
      %v2069 = vadd.f32 %v2016, %v2059
      %v2070 = vadd.f32 %v2017, %v2059
      %v2071 = vadd.f32 %v2018, %v2059
      %v2072 = vadd.f32 %v2019, %v2059
      %v2073 = vadd.f32 %v2020, %v2059
      %v2074 = vadd.f32 %v2021, %v2059
      %v2075 = vadd.f32 %v2022, %v2059
      %v2076 = vadd.f32 %v2023, %v2059
      %v2077 = vadd.f32 %v2024, %v2059
      %v2078 = vadd.f32 %v2025, %v2059
      %v2079 = vadd.f32 %v2026, %v2059
      %v2080 = vadd.f32 %v2027, %v2059
      %v2081 = vadd.f32 %v2028, %v2059
      %v2082 = vadd.f32 %v2029, %v2059
      %v2083 = vadd.f32 %v2030, %v2059
      %v2084 = vadd.f32 %v2031, %v2059
      %v2085 = vadd.f32 %v2032, %v2059
      %v2086 = vadd.f32 %v2033, %v2059
      %v2087 = vadd.f32 %v2034, %v2059
      %v2088 = vadd.f32 %v2035, %v2059
      %v2089 = vadd.f32 %v2036, %v2059
      %v2090 = vadd.f32 %v2037, %v2059
      %v2091 = vadd.f32 %v2038, %v2059
      %v2092 = vadd.f32 %v2039, %v2059
      %v2093 = vadd.f32 %v2040, %v2059
      %v2094 = vadd.f32 %v2041, %v2059
      %v2095 = vadd.f32 %v2042, %v2059
      %v2096 = vadd.f32 %v2043, %v2059
      %v2097 = vadd.f32 %v2044, %v2059
      %v2098 = vadd.f32 %v2045, %v2059
      %v2099 = vadd.f32 %v2046, %v2059
      %v2100 = vadd.f32 %v2047, %v2059
      %v2101 = vadd.f32 %v2048, %v2059
      %v2102 = vadd.f32 %v2049, %v2059
      %v2103 = vadd.f32 %v2050, %v2059
      %v2104 = vadd.f32 %v2051, %v2059
      %v2105 = vadd.f32 %v2052, %v2059
      %v2106 = vadd.f32 %v2053, %v2059
      %v2107 = vadd.f32 %v2054, %v2059
      %vm2108 = vcmask 261120
      %2109 = vst.msk [vmem:[#allocation3] sm:$0xff] %vm2108, %v2060
      %2110 = vst.msk [vmem:[#allocation3 + $0x8] sm:$0xff] %vm2108, %v2061
      %2111 = vst.msk [vmem:[#allocation3 + $0x10] sm:$0xff] %vm2108, %v2062
      %2112 = vst.msk [vmem:[#allocation3 + $0x18] sm:$0xff] %vm2108, %v2063
      %2113 = vst.msk [vmem:[#allocation3 + $0x20] sm:$0xff] %vm2108, %v2064
      %2114 = vst.msk [vmem:[#allocation3 + $0x28] sm:$0xff] %vm2108, %v2065
      %2115 = vst.msk [vmem:[#allocation3 + $0x30] sm:$0xff] %vm2108, %v2066
      %2116 = vst.msk [vmem:[#allocation3 + $0x38] sm:$0xff] %vm2108, %v2067
      %2117 = vst.msk [vmem:[#allocation3 + $0x40] sm:$0xff] %vm2108, %v2068
      %2118 = vst.msk [vmem:[#allocation3 + $0x48] sm:$0xff] %vm2108, %v2069
      %2119 = vst.msk [vmem:[#allocation3 + $0x50] sm:$0xff] %vm2108, %v2070
      %2120 = vst.msk [vmem:[#allocation3 + $0x58] sm:$0xff] %vm2108, %v2071
      %2121 = vst.msk [vmem:[#allocation3 + $0x60] sm:$0xff] %vm2108, %v2072
      %2122 = vst.msk [vmem:[#allocation3 + $0x68] sm:$0xff] %vm2108, %v2073
      %2123 = vst.msk [vmem:[#allocation3 + $0x70] sm:$0xff] %vm2108, %v2074
      %2124 = vst.msk [vmem:[#allocation3 + $0x78] sm:$0xff] %vm2108, %v2075
      %2125 = vst.msk [vmem:[#allocation3 + $0x80] sm:$0xff] %vm2108, %v2076
      %2126 = vst.msk [vmem:[#allocation3 + $0x88] sm:$0xff] %vm2108, %v2077
      %2127 = vst.msk [vmem:[#allocation3 + $0x90] sm:$0xff] %vm2108, %v2078
      %2128 = vst.msk [vmem:[#allocation3 + $0x98] sm:$0xff] %vm2108, %v2079
      %2129 = vst.msk [vmem:[#allocation3 + $0xa0] sm:$0xff] %vm2108, %v2080
      %2130 = vst.msk [vmem:[#allocation3 + $0xa8] sm:$0xff] %vm2108, %v2081
      %2131 = vst.msk [vmem:[#allocation3 + $0xb0] sm:$0xff] %vm2108, %v2082
      %2132 = vst.msk [vmem:[#allocation3 + $0xb8] sm:$0xff] %vm2108, %v2083
      %2133 = vst.msk [vmem:[#allocation3 + $0xc0] sm:$0xff] %vm2108, %v2084
      %2134 = vst.msk [vmem:[#allocation3 + $0xc8] sm:$0xff] %vm2108, %v2085
      %2135 = vst.msk [vmem:[#allocation3 + $0xd0] sm:$0xff] %vm2108, %v2086
      %2136 = vst.msk [vmem:[#allocation3 + $0xd8] sm:$0xff] %vm2108, %v2087
      %2137 = vst.msk [vmem:[#allocation3 + $0xe0] sm:$0xff] %vm2108, %v2088
      %2138 = vst.msk [vmem:[#allocation3 + $0xe8] sm:$0xff] %vm2108, %v2089
      %2139 = vst.msk [vmem:[#allocation3 + $0xf0] sm:$0xff] %vm2108, %v2090
      %2140 = vst.msk [vmem:[#allocation3 + $0xf8] sm:$0xff] %vm2108, %v2091
      %2141 = vst.msk [vmem:[#allocation3 + $0x100] sm:$0xff] %vm2108, %v2092
      %2142 = vst.msk [vmem:[#allocation3 + $0x108] sm:$0xff] %vm2108, %v2093
      %2143 = vst.msk [vmem:[#allocation3 + $0x110] sm:$0xff] %vm2108, %v2094
      %2144 = vst.msk [vmem:[#allocation3 + $0x118] sm:$0xff] %vm2108, %v2095
      %2145 = vst.msk [vmem:[#allocation3 + $0x120] sm:$0xff] %vm2108, %v2096
      %2146 = vst.msk [vmem:[#allocation3 + $0x128] sm:$0xff] %vm2108, %v2097
      %2147 = vst.msk [vmem:[#allocation3 + $0x130] sm:$0xff] %vm2108, %v2098
      %2148 = vst.msk [vmem:[#allocation3 + $0x138] sm:$0xff] %vm2108, %v2099
      %2149 = vst.msk [vmem:[#allocation3 + $0x140] sm:$0xff] %vm2108, %v2100
      %2150 = vst.msk [vmem:[#allocation3 + $0x148] sm:$0xff] %vm2108, %v2101
      %2151 = vst.msk [vmem:[#allocation3 + $0x150] sm:$0xff] %vm2108, %v2102
      %2152 = vst.msk [vmem:[#allocation3 + $0x158] sm:$0xff] %vm2108, %v2103
      %2153 = vst.msk [vmem:[#allocation3 + $0x160] sm:$0xff] %vm2108, %v2104
      %2154 = vst.msk [vmem:[#allocation3 + $0x168] sm:$0xff] %vm2108, %v2105
      %2155 = vst.msk [vmem:[#allocation3 + $0x170] sm:$0xff] %vm2108, %v2106
      %2156 = vst.msk [vmem:[#allocation3 + $0x178] sm:$0xff] %vm2108, %v2107
      %vm2157 = vcmask 253952
      %2158 = vst.msk [vmem:[#allocation3] sm:$0x1] %vm2157, -inf
      %2159 = vst.msk [vmem:[#allocation3 + $0x18] sm:$0x1] %vm2157, -inf
      %2160 = vst.msk [vmem:[#allocation3 + $0x30] sm:$0x1] %vm2157, -inf
      %2161 = vst.msk [vmem:[#allocation3 + $0x48] sm:$0x1] %vm2157, -inf
      %2162 = vst.msk [vmem:[#allocation3 + $0x60] sm:$0x1] %vm2157, -inf
      %2163 = vst.msk [vmem:[#allocation3 + $0x78] sm:$0x1] %vm2157, -inf
      %2164 = vst.msk [vmem:[#allocation3 + $0x90] sm:$0x1] %vm2157, -inf
      %2165 = vst.msk [vmem:[#allocation3 + $0xa8] sm:$0x1] %vm2157, -inf
      %2166 = vst.msk [vmem:[#allocation3 + $0xc0] sm:$0x1] %vm2157, -inf
      %2167 = vst.msk [vmem:[#allocation3 + $0xd8] sm:$0x1] %vm2157, -inf
      %2168 = vst.msk [vmem:[#allocation3 + $0xf0] sm:$0x1] %vm2157, -inf
      %2169 = vst.msk [vmem:[#allocation3 + $0x108] sm:$0x1] %vm2157, -inf
      %2170 = vst.msk [vmem:[#allocation3 + $0x120] sm:$0x1] %vm2157, -inf
      %2171 = vst.msk [vmem:[#allocation3 + $0x138] sm:$0x1] %vm2157, -inf
      %2172 = vst.msk [vmem:[#allocation3 + $0x150] sm:$0x1] %vm2157, -inf
      %2173 = vst.msk [vmem:[#allocation3 + $0x168] sm:$0x1] %vm2157, -inf
      %v2174 = vld [vmem:[#allocation3] ss:$2 sm:$0xff]
      %s2175 = scalar_lea.vmem [#allocation3], 24
      %v2176 = vld [vmem:[%s2175] ss:$2 sm:$0xff]
      %s2177 = scalar_lea.vmem [#allocation3], 48
      %v2178 = vld [vmem:[%s2177] ss:$2 sm:$0xff]
      %s2179 = scalar_lea.vmem [#allocation3], 72
      %v2180 = vld [vmem:[%s2179] ss:$2 sm:$0xff]
      %s2181 = scalar_lea.vmem [#allocation3], 96
      %v2182 = vld [vmem:[%s2181] ss:$2 sm:$0xff]
      %s2183 = scalar_lea.vmem [#allocation3], 120
      %v2184 = vld [vmem:[%s2183] ss:$2 sm:$0xff]
      %s2185 = scalar_lea.vmem [#allocation3], 144
      %v2186 = vld [vmem:[%s2185] ss:$2 sm:$0xff]
      %s2187 = scalar_lea.vmem [#allocation3], 168
      %v2188 = vld [vmem:[%s2187] ss:$2 sm:$0xff]
      %s2189 = scalar_lea.vmem [#allocation3], 192
      %v2190 = vld [vmem:[%s2189] ss:$2 sm:$0xff]
      %s2191 = scalar_lea.vmem [#allocation3], 216
      %v2192 = vld [vmem:[%s2191] ss:$2 sm:$0xff]
      %s2193 = scalar_lea.vmem [#allocation3], 240
      %v2194 = vld [vmem:[%s2193] ss:$2 sm:$0xff]
      %s2195 = scalar_lea.vmem [#allocation3], 264
      %v2196 = vld [vmem:[%s2195] ss:$2 sm:$0xff]
      %s2197 = scalar_lea.vmem [#allocation3], 288
      %v2198 = vld [vmem:[%s2197] ss:$2 sm:$0xff]
      %s2199 = scalar_lea.vmem [#allocation3], 312
      %v2200 = vld [vmem:[%s2199] ss:$2 sm:$0xff]
      %s2201 = scalar_lea.vmem [#allocation3], 336
      %v2202 = vld [vmem:[%s2201] ss:$2 sm:$0xff]
      %s2203 = scalar_lea.vmem [#allocation3], 360
      %v2204 = vld [vmem:[%s2203] ss:$2 sm:$0xff]
      %s2205 = scalar_lea.vmem [#allocation3], 1
      %v2206 = vld [vmem:[%s2205] ss:$2 sm:$0xff]
      %s2207 = scalar_lea.vmem [#allocation3], 25
      %v2208 = vld [vmem:[%s2207] ss:$2 sm:$0xff]
      %s2209 = scalar_lea.vmem [#allocation3], 49
      %v2210 = vld [vmem:[%s2209] ss:$2 sm:$0xff]
      %s2211 = scalar_lea.vmem [#allocation3], 73
      %v2212 = vld [vmem:[%s2211] ss:$2 sm:$0xff]
      %s2213 = scalar_lea.vmem [#allocation3], 97
      %v2214 = vld [vmem:[%s2213] ss:$2 sm:$0xff]
      %s2215 = scalar_lea.vmem [#allocation3], 121
      %v2216 = vld [vmem:[%s2215] ss:$2 sm:$0xff]
      %s2217 = scalar_lea.vmem [#allocation3], 145
      %v2218 = vld [vmem:[%s2217] ss:$2 sm:$0xff]
      %s2219 = scalar_lea.vmem [#allocation3], 169
      %v2220 = vld [vmem:[%s2219] ss:$2 sm:$0xff]
      %s2221 = scalar_lea.vmem [#allocation3], 193
      %v2222 = vld [vmem:[%s2221] ss:$2 sm:$0xff]
      %s2223 = scalar_lea.vmem [#allocation3], 217
      %v2224 = vld [vmem:[%s2223] ss:$2 sm:$0xff]
      %s2225 = scalar_lea.vmem [#allocation3], 241
      %v2226 = vld [vmem:[%s2225] ss:$2 sm:$0xff]
      %s2227 = scalar_lea.vmem [#allocation3], 265
      %v2228 = vld [vmem:[%s2227] ss:$2 sm:$0xff]
      %s2229 = scalar_lea.vmem [#allocation3], 289
      %v2230 = vld [vmem:[%s2229] ss:$2 sm:$0xff]
      %s2231 = scalar_lea.vmem [#allocation3], 313
      %v2232 = vld [vmem:[%s2231] ss:$2 sm:$0xff]
      %s2233 = scalar_lea.vmem [#allocation3], 337
      %v2234 = vld [vmem:[%s2233] ss:$2 sm:$0xff]
      %s2235 = scalar_lea.vmem [#allocation3], 361
      %v2236 = vld [vmem:[%s2235] ss:$2 sm:$0xff]
      %s2237 = scalar_lea.vmem [#allocation3], 2
      %v2238 = vld [vmem:[%s2237] ss:$2 sm:$0xff]
      %s2239 = scalar_lea.vmem [#allocation3], 26
      %v2240 = vld [vmem:[%s2239] ss:$2 sm:$0xff]
      %s2241 = scalar_lea.vmem [#allocation3], 50
      %v2242 = vld [vmem:[%s2241] ss:$2 sm:$0xff]
      %s2243 = scalar_lea.vmem [#allocation3], 74
      %v2244 = vld [vmem:[%s2243] ss:$2 sm:$0xff]
      %s2245 = scalar_lea.vmem [#allocation3], 98
      %v2246 = vld [vmem:[%s2245] ss:$2 sm:$0xff]
      %s2247 = scalar_lea.vmem [#allocation3], 122
      %v2248 = vld [vmem:[%s2247] ss:$2 sm:$0xff]
      %s2249 = scalar_lea.vmem [#allocation3], 146
      %v2250 = vld [vmem:[%s2249] ss:$2 sm:$0xff]
      %s2251 = scalar_lea.vmem [#allocation3], 170
      %v2252 = vld [vmem:[%s2251] ss:$2 sm:$0xff]
      %s2253 = scalar_lea.vmem [#allocation3], 194
      %v2254 = vld [vmem:[%s2253] ss:$2 sm:$0xff]
      %s2255 = scalar_lea.vmem [#allocation3], 218
      %v2256 = vld [vmem:[%s2255] ss:$2 sm:$0xff]
      %s2257 = scalar_lea.vmem [#allocation3], 242
      %v2258 = vld [vmem:[%s2257] ss:$2 sm:$0xff]
      %s2259 = scalar_lea.vmem [#allocation3], 266
      %v2260 = vld [vmem:[%s2259] ss:$2 sm:$0xff]
      %s2261 = scalar_lea.vmem [#allocation3], 290
      %v2262 = vld [vmem:[%s2261] ss:$2 sm:$0xff]
      %s2263 = scalar_lea.vmem [#allocation3], 314
      %v2264 = vld [vmem:[%s2263] ss:$2 sm:$0xff]
      %s2265 = scalar_lea.vmem [#allocation3], 338
      %v2266 = vld [vmem:[%s2265] ss:$2 sm:$0xff]
      %s2267 = scalar_lea.vmem [#allocation3], 362
      %v2268 = vld [vmem:[%s2267] ss:$2 sm:$0xff]
      %v2269 = vmax.f32 %v2174, %v2206
      %v2270 = vmax.f32 %v2176, %v2208
      %v2271 = vmax.f32 %v2178, %v2210
      %v2272 = vmax.f32 %v2180, %v2212
      %v2273 = vmax.f32 %v2182, %v2214
      %v2274 = vmax.f32 %v2184, %v2216
      %v2275 = vmax.f32 %v2186, %v2218
      %v2276 = vmax.f32 %v2188, %v2220
      %v2277 = vmax.f32 %v2190, %v2222
      %v2278 = vmax.f32 %v2192, %v2224
      %v2279 = vmax.f32 %v2194, %v2226
      %v2280 = vmax.f32 %v2196, %v2228
      %v2281 = vmax.f32 %v2198, %v2230
      %v2282 = vmax.f32 %v2200, %v2232
      %v2283 = vmax.f32 %v2202, %v2234
      %v2284 = vmax.f32 %v2204, %v2236
      %v2285 = vmax.f32 %v2269, %v2238
      %v2286 = vmax.f32 %v2270, %v2240
      %v2287 = vmax.f32 %v2271, %v2242
      %v2288 = vmax.f32 %v2272, %v2244
      %v2289 = vmax.f32 %v2273, %v2246
      %v2290 = vmax.f32 %v2274, %v2248
      %v2291 = vmax.f32 %v2275, %v2250
      %v2292 = vmax.f32 %v2276, %v2252
      %v2293 = vmax.f32 %v2277, %v2254
      %v2294 = vmax.f32 %v2278, %v2256
      %v2295 = vmax.f32 %v2279, %v2258
      %v2296 = vmax.f32 %v2280, %v2260
      %v2297 = vmax.f32 %v2281, %v2262
      %v2298 = vmax.f32 %v2282, %v2264
      %v2299 = vmax.f32 %v2283, %v2266
      %v2300 = vmax.f32 %v2284, %v2268
      %v2301 = vld [vmem:[%s390] ss:$2 sm:$0xff]
      %s2302 = scalar_lea.vmem %s390, 24 [#allocation2]
      %v2303 = vld [vmem:[%s2302] ss:$2 sm:$0xff]
      %s2304 = scalar_lea.vmem %s390, 48 [#allocation2]
      %v2305 = vld [vmem:[%s2304] ss:$2 sm:$0xff]
      %s2306 = scalar_lea.vmem %s390, 72 [#allocation2]
      %v2307 = vld [vmem:[%s2306] ss:$2 sm:$0xff]
      %s2308 = scalar_lea.vmem %s390, 96 [#allocation2]
      %v2309 = vld [vmem:[%s2308] ss:$2 sm:$0xff]
      %s2310 = scalar_lea.vmem %s390, 120 [#allocation2]
      %v2311 = vld [vmem:[%s2310] ss:$2 sm:$0xff]
      %s2312 = scalar_lea.vmem %s390, 144 [#allocation2]
      %v2313 = vld [vmem:[%s2312] ss:$2 sm:$0xff]
      %s2314 = scalar_lea.vmem %s390, 168 [#allocation2]
      %v2315 = vld [vmem:[%s2314] ss:$2 sm:$0xff]
      %s2316 = scalar_lea.vmem %s390, 192 [#allocation2]
      %v2317 = vld [vmem:[%s2316] ss:$2 sm:$0xff]
      %s2318 = scalar_lea.vmem %s390, 216 [#allocation2]
      %v2319 = vld [vmem:[%s2318] ss:$2 sm:$0xff]
      %s2320 = scalar_lea.vmem %s390, 240 [#allocation2]
      %v2321 = vld [vmem:[%s2320] ss:$2 sm:$0xff]
      %s2322 = scalar_lea.vmem %s390, 264 [#allocation2]
      %v2323 = vld [vmem:[%s2322] ss:$2 sm:$0xff]
      %s2324 = scalar_lea.vmem %s390, 288 [#allocation2]
      %v2325 = vld [vmem:[%s2324] ss:$2 sm:$0xff]
      %s2326 = scalar_lea.vmem %s390, 312 [#allocation2]
      %v2327 = vld [vmem:[%s2326] ss:$2 sm:$0xff]
      %s2328 = scalar_lea.vmem %s390, 336 [#allocation2]
      %v2329 = vld [vmem:[%s2328] ss:$2 sm:$0xff]
      %s2330 = scalar_lea.vmem %s390, 360 [#allocation2]
      %v2331 = vld [vmem:[%s2330] ss:$2 sm:$0xff]
      %s2332 = scalar_lea.vmem %s1, 192
      %v2333 = vld [vmem:[%s2332] sm:$0xff]
      %v2334 = vld [vmem:[%s2332 + $0x8] sm:$0xff]
      %v2335 = vld [vmem:[%s2332 + $0x10] sm:$0xff]
      %v2336 = vld [vmem:[%s2332 + $0x18] sm:$0xff]
      %v2337 = vld [vmem:[%s2332 + $0x20] sm:$0xff]
      %v2338 = vld [vmem:[%s2332 + $0x28] sm:$0xff]
      %v2339 = vld [vmem:[%s2332 + $0x30] sm:$0xff]
      %v2340 = vld [vmem:[%s2332 + $0x38] sm:$0xff]
      %s2341 = scalar_lea.vmem %s390, 1 [#allocation2]
      %v2342 = vld [vmem:[%s2341] ss:$2 sm:$0xff]
      %s2343 = scalar_lea.vmem %s390, 25 [#allocation2]
      %v2344 = vld [vmem:[%s2343] ss:$2 sm:$0xff]
      %s2345 = scalar_lea.vmem %s390, 49 [#allocation2]
      %v2346 = vld [vmem:[%s2345] ss:$2 sm:$0xff]
      %s2347 = scalar_lea.vmem %s390, 73 [#allocation2]
      %v2348 = vld [vmem:[%s2347] ss:$2 sm:$0xff]
      %s2349 = scalar_lea.vmem %s390, 97 [#allocation2]
      %v2350 = vld [vmem:[%s2349] ss:$2 sm:$0xff]
      %s2351 = scalar_lea.vmem %s390, 121 [#allocation2]
      %v2352 = vld [vmem:[%s2351] ss:$2 sm:$0xff]
      %s2353 = scalar_lea.vmem %s390, 145 [#allocation2]
      %v2354 = vld [vmem:[%s2353] ss:$2 sm:$0xff]
      %s2355 = scalar_lea.vmem %s390, 169 [#allocation2]
      %v2356 = vld [vmem:[%s2355] ss:$2 sm:$0xff]
      %s2357 = scalar_lea.vmem %s390, 193 [#allocation2]
      %v2358 = vld [vmem:[%s2357] ss:$2 sm:$0xff]
      %s2359 = scalar_lea.vmem %s390, 217 [#allocation2]
      %v2360 = vld [vmem:[%s2359] ss:$2 sm:$0xff]
      %s2361 = scalar_lea.vmem %s390, 241 [#allocation2]
      %v2362 = vld [vmem:[%s2361] ss:$2 sm:$0xff]
      %s2363 = scalar_lea.vmem %s390, 265 [#allocation2]
      %v2364 = vld [vmem:[%s2363] ss:$2 sm:$0xff]
      %s2365 = scalar_lea.vmem %s390, 289 [#allocation2]
      %v2366 = vld [vmem:[%s2365] ss:$2 sm:$0xff]
      %s2367 = scalar_lea.vmem %s390, 313 [#allocation2]
      %v2368 = vld [vmem:[%s2367] ss:$2 sm:$0xff]
      %s2369 = scalar_lea.vmem %s390, 337 [#allocation2]
      %v2370 = vld [vmem:[%s2369] ss:$2 sm:$0xff]
      %s2371 = scalar_lea.vmem %s390, 361 [#allocation2]
      %v2372 = vld [vmem:[%s2371] ss:$2 sm:$0xff]
      %s2373 = scalar_lea.vmem %s1, 256
      %v2374 = vld [vmem:[%s2373] sm:$0xff]
      %v2375 = vld [vmem:[%s2373 + $0x8] sm:$0xff]
      %v2376 = vld [vmem:[%s2373 + $0x10] sm:$0xff]
      %v2377 = vld [vmem:[%s2373 + $0x18] sm:$0xff]
      %v2378 = vld [vmem:[%s2373 + $0x20] sm:$0xff]
      %v2379 = vld [vmem:[%s2373 + $0x28] sm:$0xff]
      %v2380 = vld [vmem:[%s2373 + $0x30] sm:$0xff]
      %v2381 = vld [vmem:[%s2373 + $0x38] sm:$0xff]
      %v2383 = vsel %vm279, %v2342, 0
      %v2386 = vsel %vm279, %v2344, 0
      %v2389 = vsel %vm279, %v2346, 0
      %v2392 = vsel %vm279, %v2348, 0
      %v2395 = vsel %vm279, %v2350, 0
      %v2398 = vsel %vm279, %v2352, 0
      %v2401 = vsel %vm279, %v2354, 0
      %v2404 = vsel %vm279, %v2356, 0
      %v2407 = vsel %vm279, %v2358, 0
      %v2410 = vsel %vm279, %v2360, 0
      %v2413 = vsel %vm279, %v2362, 0
      %v2416 = vsel %vm279, %v2364, 0
      %v2419 = vsel %vm279, %v2366, 0
      %v2422 = vsel %vm279, %v2368, 0
      %v2425 = vsel %vm279, %v2370, 0
      %v2428 = vsel %vm279, %v2372, 0
      %2430 = vmatprep.subr.mxu0 0.0
      %2431 = vmatpush1.msra.mxu0 0.0
      %2432 = vmatprep.subr.mxu0 0.0
      %2433 = vmatpush1.msra.mxu0 0.0
      %2434 = vmatprep.subr.mxu0 0.0
      %2435 = vmatpush1.msra.mxu0 0.0
      %2436 = vmatprep.subr.mxu0 0.0
      %2437 = vmatpush1.msra.mxu0 0.0
      %2438 = vmatprep.subr.mxu0 0.0
      %2439 = vmatpush1.msra.mxu0 0.0
      %2440 = vmatprep.subr.mxu0 0.0
      %2441 = vmatpush1.msra.mxu0 0.0
      %2442 = vmatprep.subr.mxu0 0.0
      %2443 = vmatpush1.msra.mxu0 0.0
      %2444 = vmatprep.subr.mxu0 0.0
      %2445 = vmatpush1.msra.mxu0 0.0
      %2446 = vmatprep.subr.mxu0 0.0
      %2447 = vmatpush1.msra.mxu0 %v2381
      %2448 = vmatprep.subr.mxu0 0.0
      %2449 = vmatpush1.msra.mxu0 %v2380
      %2450 = vmatprep.subr.mxu0 0.0
      %2451 = vmatpush1.msra.mxu0 %v2379
      %2452 = vmatprep.subr.mxu0 0.0
      %2453 = vmatpush1.msra.mxu0 %v2378
      %2454 = vmatprep.subr.mxu0 0.0
      %2455 = vmatpush1.msra.mxu0 %v2377
      %2456 = vmatprep.subr.mxu0 0.0
      %2457 = vmatpush1.msra.mxu0 %v2376
      %2458 = vmatprep.subr.mxu0 0.0
      %2459 = vmatpush1.msra.mxu0 %v2375
      %2460 = vmatprep.subr.mxu0 0.0
      %2461 = vmatpush1.msra.mxu0 %v2374
      %2462 = vmatprep.subr.mxu0 0.0
      %2463 = vmatpush2.msra.mxu0 0.0
      %2464 = vmatprep.subr.mxu0 0.0
      %2465 = vmatpush2.msra.mxu0 0.0
      %2466 = vmatprep.subr.mxu0 0.0
      %2467 = vmatpush2.msra.mxu0 0.0
      %2468 = vmatprep.subr.mxu0 0.0
      %2469 = vmatpush2.msra.mxu0 0.0
      %2470 = vmatprep.subr.mxu0 0.0
      %2471 = vmatpush2.msra.mxu0 0.0
      %2472 = vmatprep.subr.mxu0 0.0
      %2473 = vmatpush2.msra.mxu0 0.0
      %2474 = vmatprep.subr.mxu0 0.0
      %2475 = vmatpush2.msra.mxu0 0.0
      %2476 = vmatprep.subr.mxu0 0.0
      %2477 = vmatpush2.msra.mxu0 0.0
      %2478 = vmatprep.subr.mxu0 0.0
      %2479 = vmatpush2.msra.mxu0 0.0
      %2480 = vmatprep.subr.mxu0 0.0
      %2481 = vmatpush2.msra.mxu0 0.0
      %2482 = vmatprep.subr.mxu0 0.0
      %2483 = vmatpush2.msra.mxu0 0.0
      %2484 = vmatprep.subr.mxu0 0.0
      %2485 = vmatpush2.msra.mxu0 0.0
      %2486 = vmatprep.subr.mxu0 0.0
      %2487 = vmatpush2.msra.mxu0 0.0
      %2488 = vmatprep.subr.mxu0 0.0
      %2489 = vmatpush2.msra.mxu0 0.0
      %2490 = vmatprep.subr.mxu0 0.0
      %2491 = vmatpush2.msra.mxu0 0.0
      %2492 = vmatprep.subr.mxu0 0.0
      %2493 = vmatpush2.msra.mxu0 0.0
      %2494 = vmatprep.mubr.f32.mxu0 0.0
      %2495 = vmatmul.mubr.f32.gmra.mxu0 %v2383
      %v2496 = vpop.f32.mrf.mxu0
      %v2497 = vadd.f32 0.0, %v2496
      %v2498 = vpop.f32.mrf.mxu0
      %2499 = vmatprep.mubr.f32.mxu0 0.0
      %2500 = vmatmul.mubr.f32.gmra.mxu0 %v2386
      %v2501 = vpop.f32.mrf.mxu0
      %v2502 = vadd.f32 0.0, %v2501
      %v2503 = vpop.f32.mrf.mxu0
      %2504 = vmatprep.mubr.f32.mxu0 0.0
      %2505 = vmatmul.mubr.f32.gmra.mxu0 %v2389
      %v2506 = vpop.f32.mrf.mxu0
      %v2507 = vadd.f32 0.0, %v2506
      %v2508 = vpop.f32.mrf.mxu0
      %2509 = vmatprep.mubr.f32.mxu0 0.0
      %2510 = vmatmul.mubr.f32.gmra.mxu0 %v2392
      %v2511 = vpop.f32.mrf.mxu0
      %v2512 = vadd.f32 0.0, %v2511
      %v2513 = vpop.f32.mrf.mxu0
      %2514 = vmatprep.mubr.f32.mxu0 0.0
      %2515 = vmatmul.mubr.f32.gmra.mxu0 %v2395
      %v2516 = vpop.f32.mrf.mxu0
      %v2517 = vadd.f32 0.0, %v2516
      %v2518 = vpop.f32.mrf.mxu0
      %2519 = vmatprep.mubr.f32.mxu0 0.0
      %2520 = vmatmul.mubr.f32.gmra.mxu0 %v2398
      %v2521 = vpop.f32.mrf.mxu0
      %v2522 = vadd.f32 0.0, %v2521
      %v2523 = vpop.f32.mrf.mxu0
      %2524 = vmatprep.mubr.f32.mxu0 0.0
      %2525 = vmatmul.mubr.f32.gmra.mxu0 %v2401
      %v2526 = vpop.f32.mrf.mxu0
      %v2527 = vadd.f32 0.0, %v2526
      %v2528 = vpop.f32.mrf.mxu0
      %2529 = vmatprep.mubr.f32.mxu0 0.0
      %2530 = vmatmul.mubr.f32.gmra.mxu0 %v2404
      %v2531 = vpop.f32.mrf.mxu0
      %v2532 = vadd.f32 0.0, %v2531
      %v2533 = vpop.f32.mrf.mxu0
      %2534 = vmatprep.mubr.f32.mxu0 0.0
      %2535 = vmatmul.mubr.f32.gmra.mxu0 %v2407
      %v2536 = vpop.f32.mrf.mxu0
      %v2537 = vadd.f32 0.0, %v2536
      %v2538 = vpop.f32.mrf.mxu0
      %2539 = vmatprep.mubr.f32.mxu0 0.0
      %2540 = vmatmul.mubr.f32.gmra.mxu0 %v2410
      %v2541 = vpop.f32.mrf.mxu0
      %v2542 = vadd.f32 0.0, %v2541
      %v2543 = vpop.f32.mrf.mxu0
      %2544 = vmatprep.mubr.f32.mxu0 0.0
      %2545 = vmatmul.mubr.f32.gmra.mxu0 %v2413
      %v2546 = vpop.f32.mrf.mxu0
      %v2547 = vadd.f32 0.0, %v2546
      %v2548 = vpop.f32.mrf.mxu0
      %2549 = vmatprep.mubr.f32.mxu0 0.0
      %2550 = vmatmul.mubr.f32.gmra.mxu0 %v2416
      %v2551 = vpop.f32.mrf.mxu0
      %v2552 = vadd.f32 0.0, %v2551
      %v2553 = vpop.f32.mrf.mxu0
      %2554 = vmatprep.mubr.f32.mxu0 0.0
      %2555 = vmatmul.mubr.f32.gmra.mxu0 %v2419
      %v2556 = vpop.f32.mrf.mxu0
      %v2557 = vadd.f32 0.0, %v2556
      %v2558 = vpop.f32.mrf.mxu0
      %2559 = vmatprep.mubr.f32.mxu0 0.0
      %2560 = vmatmul.mubr.f32.gmra.mxu0 %v2422
      %v2561 = vpop.f32.mrf.mxu0
      %v2562 = vadd.f32 0.0, %v2561
      %v2563 = vpop.f32.mrf.mxu0
      %2564 = vmatprep.mubr.f32.mxu0 0.0
      %2565 = vmatmul.mubr.f32.gmra.mxu0 %v2425
      %v2566 = vpop.f32.mrf.mxu0
      %v2567 = vadd.f32 0.0, %v2566
      %v2568 = vpop.f32.mrf.mxu0
      %2569 = vmatprep.mubr.f32.mxu0 0.0
      %2570 = vmatmul.mubr.f32.gmra.mxu0 %v2428
      %v2571 = vpop.f32.mrf.mxu0
      %v2572 = vadd.f32 0.0, %v2571
      %v2573 = vpop.f32.mrf.mxu0
      %2574 = vdwg.mxu0
      %v2576 = vsel %vm279, %v2301, 0
      %v2579 = vsel %vm279, %v2303, 0
      %v2582 = vsel %vm279, %v2305, 0
      %v2585 = vsel %vm279, %v2307, 0
      %v2588 = vsel %vm279, %v2309, 0
      %v2591 = vsel %vm279, %v2311, 0
      %v2594 = vsel %vm279, %v2313, 0
      %v2597 = vsel %vm279, %v2315, 0
      %v2600 = vsel %vm279, %v2317, 0
      %v2603 = vsel %vm279, %v2319, 0
      %v2606 = vsel %vm279, %v2321, 0
      %v2609 = vsel %vm279, %v2323, 0
      %v2612 = vsel %vm279, %v2325, 0
      %v2615 = vsel %vm279, %v2327, 0
      %v2618 = vsel %vm279, %v2329, 0
      %v2621 = vsel %vm279, %v2331, 0
      %2623 = vmatprep.subr.mxu0 0.0
      %2624 = vmatpush1.msra.mxu0 0.0
      %2625 = vmatprep.subr.mxu0 0.0
      %2626 = vmatpush1.msra.mxu0 0.0
      %2627 = vmatprep.subr.mxu0 0.0
      %2628 = vmatpush1.msra.mxu0 0.0
      %2629 = vmatprep.subr.mxu0 0.0
      %2630 = vmatpush1.msra.mxu0 0.0
      %2631 = vmatprep.subr.mxu0 0.0
      %2632 = vmatpush1.msra.mxu0 0.0
      %2633 = vmatprep.subr.mxu0 0.0
      %2634 = vmatpush1.msra.mxu0 0.0
      %2635 = vmatprep.subr.mxu0 0.0
      %2636 = vmatpush1.msra.mxu0 0.0
      %2637 = vmatprep.subr.mxu0 0.0
      %2638 = vmatpush1.msra.mxu0 0.0
      %2639 = vmatprep.subr.mxu0 0.0
      %2640 = vmatpush1.msra.mxu0 %v2340
      %2641 = vmatprep.subr.mxu0 0.0
      %2642 = vmatpush1.msra.mxu0 %v2339
      %2643 = vmatprep.subr.mxu0 0.0
      %2644 = vmatpush1.msra.mxu0 %v2338
      %2645 = vmatprep.subr.mxu0 0.0
      %2646 = vmatpush1.msra.mxu0 %v2337
      %2647 = vmatprep.subr.mxu0 0.0
      %2648 = vmatpush1.msra.mxu0 %v2336
      %2649 = vmatprep.subr.mxu0 0.0
      %2650 = vmatpush1.msra.mxu0 %v2335
      %2651 = vmatprep.subr.mxu0 0.0
      %2652 = vmatpush1.msra.mxu0 %v2334
      %2653 = vmatprep.subr.mxu0 0.0
      %2654 = vmatpush1.msra.mxu0 %v2333
      %2655 = vmatprep.subr.mxu0 0.0
      %2656 = vmatpush2.msra.mxu0 0.0
      %2657 = vmatprep.subr.mxu0 0.0
      %2658 = vmatpush2.msra.mxu0 0.0
      %2659 = vmatprep.subr.mxu0 0.0
      %2660 = vmatpush2.msra.mxu0 0.0
      %2661 = vmatprep.subr.mxu0 0.0
      %2662 = vmatpush2.msra.mxu0 0.0
      %2663 = vmatprep.subr.mxu0 0.0
      %2664 = vmatpush2.msra.mxu0 0.0
      %2665 = vmatprep.subr.mxu0 0.0
      %2666 = vmatpush2.msra.mxu0 0.0
      %2667 = vmatprep.subr.mxu0 0.0
      %2668 = vmatpush2.msra.mxu0 0.0
      %2669 = vmatprep.subr.mxu0 0.0
      %2670 = vmatpush2.msra.mxu0 0.0
      %2671 = vmatprep.subr.mxu0 0.0
      %2672 = vmatpush2.msra.mxu0 0.0
      %2673 = vmatprep.subr.mxu0 0.0
      %2674 = vmatpush2.msra.mxu0 0.0
      %2675 = vmatprep.subr.mxu0 0.0
      %2676 = vmatpush2.msra.mxu0 0.0
      %2677 = vmatprep.subr.mxu0 0.0
      %2678 = vmatpush2.msra.mxu0 0.0
      %2679 = vmatprep.subr.mxu0 0.0
      %2680 = vmatpush2.msra.mxu0 0.0
      %2681 = vmatprep.subr.mxu0 0.0
      %2682 = vmatpush2.msra.mxu0 0.0
      %2683 = vmatprep.subr.mxu0 0.0
      %2684 = vmatpush2.msra.mxu0 0.0
      %2685 = vmatprep.subr.mxu0 0.0
      %2686 = vmatpush2.msra.mxu0 0.0
      %2687 = vmatprep.mubr.f32.mxu0 0.0
      %2688 = vmatmul.mubr.f32.gmra.mxu0 %v2576
      %v2689 = vpop.f32.mrf.mxu0
      %v2690 = vadd.f32 %v2497, %v2689
      %v2691 = vpop.f32.mrf.mxu0
      %2692 = vmatprep.mubr.f32.mxu0 0.0
      %2693 = vmatmul.mubr.f32.gmra.mxu0 %v2579
      %v2694 = vpop.f32.mrf.mxu0
      %v2695 = vadd.f32 %v2502, %v2694
      %v2696 = vpop.f32.mrf.mxu0
      %2697 = vmatprep.mubr.f32.mxu0 0.0
      %2698 = vmatmul.mubr.f32.gmra.mxu0 %v2582
      %v2699 = vpop.f32.mrf.mxu0
      %v2700 = vadd.f32 %v2507, %v2699
      %v2701 = vpop.f32.mrf.mxu0
      %2702 = vmatprep.mubr.f32.mxu0 0.0
      %2703 = vmatmul.mubr.f32.gmra.mxu0 %v2585
      %v2704 = vpop.f32.mrf.mxu0
      %v2705 = vadd.f32 %v2512, %v2704
      %v2706 = vpop.f32.mrf.mxu0
      %2707 = vmatprep.mubr.f32.mxu0 0.0
      %2708 = vmatmul.mubr.f32.gmra.mxu0 %v2588
      %v2709 = vpop.f32.mrf.mxu0
      %v2710 = vadd.f32 %v2517, %v2709
      %v2711 = vpop.f32.mrf.mxu0
      %2712 = vmatprep.mubr.f32.mxu0 0.0
      %2713 = vmatmul.mubr.f32.gmra.mxu0 %v2591
      %v2714 = vpop.f32.mrf.mxu0
      %v2715 = vadd.f32 %v2522, %v2714
      %v2716 = vpop.f32.mrf.mxu0
      %2717 = vmatprep.mubr.f32.mxu0 0.0
      %2718 = vmatmul.mubr.f32.gmra.mxu0 %v2594
      %v2719 = vpop.f32.mrf.mxu0
      %v2720 = vadd.f32 %v2527, %v2719
      %v2721 = vpop.f32.mrf.mxu0
      %2722 = vmatprep.mubr.f32.mxu0 0.0
      %2723 = vmatmul.mubr.f32.gmra.mxu0 %v2597
      %v2724 = vpop.f32.mrf.mxu0
      %v2725 = vadd.f32 %v2532, %v2724
      %v2726 = vpop.f32.mrf.mxu0
      %2727 = vmatprep.mubr.f32.mxu0 0.0
      %2728 = vmatmul.mubr.f32.gmra.mxu0 %v2600
      %v2729 = vpop.f32.mrf.mxu0
      %v2730 = vadd.f32 %v2537, %v2729
      %v2731 = vpop.f32.mrf.mxu0
      %2732 = vmatprep.mubr.f32.mxu0 0.0
      %2733 = vmatmul.mubr.f32.gmra.mxu0 %v2603
      %v2734 = vpop.f32.mrf.mxu0
      %v2735 = vadd.f32 %v2542, %v2734
      %v2736 = vpop.f32.mrf.mxu0
      %2737 = vmatprep.mubr.f32.mxu0 0.0
      %2738 = vmatmul.mubr.f32.gmra.mxu0 %v2606
      %v2739 = vpop.f32.mrf.mxu0
      %v2740 = vadd.f32 %v2547, %v2739
      %v2741 = vpop.f32.mrf.mxu0
      %2742 = vmatprep.mubr.f32.mxu0 0.0
      %2743 = vmatmul.mubr.f32.gmra.mxu0 %v2609
      %v2744 = vpop.f32.mrf.mxu0
      %v2745 = vadd.f32 %v2552, %v2744
      %v2746 = vpop.f32.mrf.mxu0
      %2747 = vmatprep.mubr.f32.mxu0 0.0
      %2748 = vmatmul.mubr.f32.gmra.mxu0 %v2612
      %v2749 = vpop.f32.mrf.mxu0
      %v2750 = vadd.f32 %v2557, %v2749
      %v2751 = vpop.f32.mrf.mxu0
      %2752 = vmatprep.mubr.f32.mxu0 0.0
      %2753 = vmatmul.mubr.f32.gmra.mxu0 %v2615
      %v2754 = vpop.f32.mrf.mxu0
      %v2755 = vadd.f32 %v2562, %v2754
      %v2756 = vpop.f32.mrf.mxu0
      %2757 = vmatprep.mubr.f32.mxu0 0.0
      %2758 = vmatmul.mubr.f32.gmra.mxu0 %v2618
      %v2759 = vpop.f32.mrf.mxu0
      %v2760 = vadd.f32 %v2567, %v2759
      %v2761 = vpop.f32.mrf.mxu0
      %2762 = vmatprep.mubr.f32.mxu0 0.0
      %2763 = vmatmul.mubr.f32.gmra.mxu0 %v2621
      %v2764 = vpop.f32.mrf.mxu0
      %v2765 = vadd.f32 %v2572, %v2764
      %v2766 = vpop.f32.mrf.mxu0
      %2767 = vdwg.mxu0
      %s2768 = scalar_lea.vmem %s390, 2 [#allocation2]
      %v2769 = vld [vmem:[%s2768] ss:$2 sm:$0xff]
      %s2770 = scalar_lea.vmem %s390, 26 [#allocation2]
      %v2771 = vld [vmem:[%s2770] ss:$2 sm:$0xff]
      %s2772 = scalar_lea.vmem %s390, 50 [#allocation2]
      %v2773 = vld [vmem:[%s2772] ss:$2 sm:$0xff]
      %s2774 = scalar_lea.vmem %s390, 74 [#allocation2]
      %v2775 = vld [vmem:[%s2774] ss:$2 sm:$0xff]
      %s2776 = scalar_lea.vmem %s390, 98 [#allocation2]
      %v2777 = vld [vmem:[%s2776] ss:$2 sm:$0xff]
      %s2778 = scalar_lea.vmem %s390, 122 [#allocation2]
      %v2779 = vld [vmem:[%s2778] ss:$2 sm:$0xff]
      %s2780 = scalar_lea.vmem %s390, 146 [#allocation2]
      %v2781 = vld [vmem:[%s2780] ss:$2 sm:$0xff]
      %s2782 = scalar_lea.vmem %s390, 170 [#allocation2]
      %v2783 = vld [vmem:[%s2782] ss:$2 sm:$0xff]
      %s2784 = scalar_lea.vmem %s390, 194 [#allocation2]
      %v2785 = vld [vmem:[%s2784] ss:$2 sm:$0xff]
      %s2786 = scalar_lea.vmem %s390, 218 [#allocation2]
      %v2787 = vld [vmem:[%s2786] ss:$2 sm:$0xff]
      %s2788 = scalar_lea.vmem %s390, 242 [#allocation2]
      %v2789 = vld [vmem:[%s2788] ss:$2 sm:$0xff]
      %s2790 = scalar_lea.vmem %s390, 266 [#allocation2]
      %v2791 = vld [vmem:[%s2790] ss:$2 sm:$0xff]
      %s2792 = scalar_lea.vmem %s390, 290 [#allocation2]
      %v2793 = vld [vmem:[%s2792] ss:$2 sm:$0xff]
      %s2794 = scalar_lea.vmem %s390, 314 [#allocation2]
      %v2795 = vld [vmem:[%s2794] ss:$2 sm:$0xff]
      %s2796 = scalar_lea.vmem %s390, 338 [#allocation2]
      %v2797 = vld [vmem:[%s2796] ss:$2 sm:$0xff]
      %s2798 = scalar_lea.vmem %s390, 362 [#allocation2]
      %v2799 = vld [vmem:[%s2798] ss:$2 sm:$0xff]
      %s2800 = scalar_lea.vmem %s1, 320
      %v2801 = vld [vmem:[%s2800] sm:$0xff]
      %v2802 = vld [vmem:[%s2800 + $0x8] sm:$0xff]
      %v2803 = vld [vmem:[%s2800 + $0x10] sm:$0xff]
      %v2804 = vld [vmem:[%s2800 + $0x18] sm:$0xff]
      %v2805 = vld [vmem:[%s2800 + $0x20] sm:$0xff]
      %v2806 = vld [vmem:[%s2800 + $0x28] sm:$0xff]
      %v2807 = vld [vmem:[%s2800 + $0x30] sm:$0xff]
      %v2808 = vld [vmem:[%s2800 + $0x38] sm:$0xff]
      %v2810 = vsel %vm279, %v2769, 0
      %v2813 = vsel %vm279, %v2771, 0
      %v2816 = vsel %vm279, %v2773, 0
      %v2819 = vsel %vm279, %v2775, 0
      %v2822 = vsel %vm279, %v2777, 0
      %v2825 = vsel %vm279, %v2779, 0
      %v2828 = vsel %vm279, %v2781, 0
      %v2831 = vsel %vm279, %v2783, 0
      %v2834 = vsel %vm279, %v2785, 0
      %v2837 = vsel %vm279, %v2787, 0
      %v2840 = vsel %vm279, %v2789, 0
      %v2843 = vsel %vm279, %v2791, 0
      %v2846 = vsel %vm279, %v2793, 0
      %v2849 = vsel %vm279, %v2795, 0
      %v2852 = vsel %vm279, %v2797, 0
      %v2855 = vsel %vm279, %v2799, 0
      %2857 = vmatprep.subr.mxu0 0.0
      %2858 = vmatpush1.msra.mxu0 0.0
      %2859 = vmatprep.subr.mxu0 0.0
      %2860 = vmatpush1.msra.mxu0 0.0
      %2861 = vmatprep.subr.mxu0 0.0
      %2862 = vmatpush1.msra.mxu0 0.0
      %2863 = vmatprep.subr.mxu0 0.0
      %2864 = vmatpush1.msra.mxu0 0.0
      %2865 = vmatprep.subr.mxu0 0.0
      %2866 = vmatpush1.msra.mxu0 0.0
      %2867 = vmatprep.subr.mxu0 0.0
      %2868 = vmatpush1.msra.mxu0 0.0
      %2869 = vmatprep.subr.mxu0 0.0
      %2870 = vmatpush1.msra.mxu0 0.0
      %2871 = vmatprep.subr.mxu0 0.0
      %2872 = vmatpush1.msra.mxu0 0.0
      %2873 = vmatprep.subr.mxu0 0.0
      %2874 = vmatpush1.msra.mxu0 %v2808
      %2875 = vmatprep.subr.mxu0 0.0
      %2876 = vmatpush1.msra.mxu0 %v2807
      %2877 = vmatprep.subr.mxu0 0.0
      %2878 = vmatpush1.msra.mxu0 %v2806
      %2879 = vmatprep.subr.mxu0 0.0
      %2880 = vmatpush1.msra.mxu0 %v2805
      %2881 = vmatprep.subr.mxu0 0.0
      %2882 = vmatpush1.msra.mxu0 %v2804
      %2883 = vmatprep.subr.mxu0 0.0
      %2884 = vmatpush1.msra.mxu0 %v2803
      %2885 = vmatprep.subr.mxu0 0.0
      %2886 = vmatpush1.msra.mxu0 %v2802
      %2887 = vmatprep.subr.mxu0 0.0
      %2888 = vmatpush1.msra.mxu0 %v2801
      %2889 = vmatprep.subr.mxu0 0.0
      %2890 = vmatpush2.msra.mxu0 0.0
      %2891 = vmatprep.subr.mxu0 0.0
      %2892 = vmatpush2.msra.mxu0 0.0
      %2893 = vmatprep.subr.mxu0 0.0
      %2894 = vmatpush2.msra.mxu0 0.0
      %2895 = vmatprep.subr.mxu0 0.0
      %2896 = vmatpush2.msra.mxu0 0.0
      %2897 = vmatprep.subr.mxu0 0.0
      %2898 = vmatpush2.msra.mxu0 0.0
      %2899 = vmatprep.subr.mxu0 0.0
      %2900 = vmatpush2.msra.mxu0 0.0
      %2901 = vmatprep.subr.mxu0 0.0
      %2902 = vmatpush2.msra.mxu0 0.0
      %2903 = vmatprep.subr.mxu0 0.0
      %2904 = vmatpush2.msra.mxu0 0.0
      %2905 = vmatprep.subr.mxu0 0.0
      %2906 = vmatpush2.msra.mxu0 0.0
      %2907 = vmatprep.subr.mxu0 0.0
      %2908 = vmatpush2.msra.mxu0 0.0
      %2909 = vmatprep.subr.mxu0 0.0
      %2910 = vmatpush2.msra.mxu0 0.0
      %2911 = vmatprep.subr.mxu0 0.0
      %2912 = vmatpush2.msra.mxu0 0.0
      %2913 = vmatprep.subr.mxu0 0.0
      %2914 = vmatpush2.msra.mxu0 0.0
      %2915 = vmatprep.subr.mxu0 0.0
      %2916 = vmatpush2.msra.mxu0 0.0
      %2917 = vmatprep.subr.mxu0 0.0
      %2918 = vmatpush2.msra.mxu0 0.0
      %2919 = vmatprep.subr.mxu0 0.0
      %2920 = vmatpush2.msra.mxu0 0.0
      %2921 = vmatprep.mubr.f32.mxu0 0.0
      %2922 = vmatmul.mubr.f32.gmra.mxu0 %v2810
      %v2923 = vpop.f32.mrf.mxu0
      %v2924 = vadd.f32 0.0, %v2923
      %v2925 = vpop.f32.mrf.mxu0
      %2926 = vmatprep.mubr.f32.mxu0 0.0
      %2927 = vmatmul.mubr.f32.gmra.mxu0 %v2813
      %v2928 = vpop.f32.mrf.mxu0
      %v2929 = vadd.f32 0.0, %v2928
      %v2930 = vpop.f32.mrf.mxu0
      %2931 = vmatprep.mubr.f32.mxu0 0.0
      %2932 = vmatmul.mubr.f32.gmra.mxu0 %v2816
      %v2933 = vpop.f32.mrf.mxu0
      %v2934 = vadd.f32 0.0, %v2933
      %v2935 = vpop.f32.mrf.mxu0
      %2936 = vmatprep.mubr.f32.mxu0 0.0
      %2937 = vmatmul.mubr.f32.gmra.mxu0 %v2819
      %v2938 = vpop.f32.mrf.mxu0
      %v2939 = vadd.f32 0.0, %v2938
      %v2940 = vpop.f32.mrf.mxu0
      %2941 = vmatprep.mubr.f32.mxu0 0.0
      %2942 = vmatmul.mubr.f32.gmra.mxu0 %v2822
      %v2943 = vpop.f32.mrf.mxu0
      %v2944 = vadd.f32 0.0, %v2943
      %v2945 = vpop.f32.mrf.mxu0
      %2946 = vmatprep.mubr.f32.mxu0 0.0
      %2947 = vmatmul.mubr.f32.gmra.mxu0 %v2825
      %v2948 = vpop.f32.mrf.mxu0
      %v2949 = vadd.f32 0.0, %v2948
      %v2950 = vpop.f32.mrf.mxu0
      %2951 = vmatprep.mubr.f32.mxu0 0.0
      %2952 = vmatmul.mubr.f32.gmra.mxu0 %v2828
      %v2953 = vpop.f32.mrf.mxu0
      %v2954 = vadd.f32 0.0, %v2953
      %v2955 = vpop.f32.mrf.mxu0
      %2956 = vmatprep.mubr.f32.mxu0 0.0
      %2957 = vmatmul.mubr.f32.gmra.mxu0 %v2831
      %v2958 = vpop.f32.mrf.mxu0
      %v2959 = vadd.f32 0.0, %v2958
      %v2960 = vpop.f32.mrf.mxu0
      %2961 = vmatprep.mubr.f32.mxu0 0.0
      %2962 = vmatmul.mubr.f32.gmra.mxu0 %v2834
      %v2963 = vpop.f32.mrf.mxu0
      %v2964 = vadd.f32 0.0, %v2963
      %v2965 = vpop.f32.mrf.mxu0
      %2966 = vmatprep.mubr.f32.mxu0 0.0
      %2967 = vmatmul.mubr.f32.gmra.mxu0 %v2837
      %v2968 = vpop.f32.mrf.mxu0
      %v2969 = vadd.f32 0.0, %v2968
      %v2970 = vpop.f32.mrf.mxu0
      %2971 = vmatprep.mubr.f32.mxu0 0.0
      %2972 = vmatmul.mubr.f32.gmra.mxu0 %v2840
      %v2973 = vpop.f32.mrf.mxu0
      %v2974 = vadd.f32 0.0, %v2973
      %v2975 = vpop.f32.mrf.mxu0
      %2976 = vmatprep.mubr.f32.mxu0 0.0
      %2977 = vmatmul.mubr.f32.gmra.mxu0 %v2843
      %v2978 = vpop.f32.mrf.mxu0
      %v2979 = vadd.f32 0.0, %v2978
      %v2980 = vpop.f32.mrf.mxu0
      %2981 = vmatprep.mubr.f32.mxu0 0.0
      %2982 = vmatmul.mubr.f32.gmra.mxu0 %v2846
      %v2983 = vpop.f32.mrf.mxu0
      %v2984 = vadd.f32 0.0, %v2983
      %v2985 = vpop.f32.mrf.mxu0
      %2986 = vmatprep.mubr.f32.mxu0 0.0
      %2987 = vmatmul.mubr.f32.gmra.mxu0 %v2849
      %v2988 = vpop.f32.mrf.mxu0
      %v2989 = vadd.f32 0.0, %v2988
      %v2990 = vpop.f32.mrf.mxu0
      %2991 = vmatprep.mubr.f32.mxu0 0.0
      %2992 = vmatmul.mubr.f32.gmra.mxu0 %v2852
      %v2993 = vpop.f32.mrf.mxu0
      %v2994 = vadd.f32 0.0, %v2993
      %v2995 = vpop.f32.mrf.mxu0
      %2996 = vmatprep.mubr.f32.mxu0 0.0
      %2997 = vmatmul.mubr.f32.gmra.mxu0 %v2855
      %v2998 = vpop.f32.mrf.mxu0
      %v2999 = vadd.f32 0.0, %v2998
      %v3000 = vpop.f32.mrf.mxu0
      %3001 = vdwg.mxu0
      %v3002 = vadd.f32 %v2690, %v2924
      %v3003 = vadd.f32 %v2695, %v2929
      %v3004 = vadd.f32 %v2700, %v2934
      %v3005 = vadd.f32 %v2705, %v2939
      %v3006 = vadd.f32 %v2710, %v2944
      %v3007 = vadd.f32 %v2715, %v2949
      %v3008 = vadd.f32 %v2720, %v2954
      %v3009 = vadd.f32 %v2725, %v2959
      %v3010 = vadd.f32 %v2730, %v2964
      %v3011 = vadd.f32 %v2735, %v2969
      %v3012 = vadd.f32 %v2740, %v2974
      %v3013 = vadd.f32 %v2745, %v2979
      %v3014 = vadd.f32 %v2750, %v2984
      %v3015 = vadd.f32 %v2755, %v2989
      %v3016 = vadd.f32 %v2760, %v2994
      %v3017 = vadd.f32 %v2765, %v2999
      %v3018 = vld [vmem:[%s2 + $0x3] sm:$0x1]
      %v3019 = vlaneseq
      %v3020 = vshrl.u32 %v3019, 7
      %v3021 = vsub.s32 0, %v3020
      %v3022 = vrot.slane %v3018, %v3021
      %v3023 = vadd.f32 %v3002, %v3022
      %v3024 = vadd.f32 %v3003, %v3022
      %v3025 = vadd.f32 %v3004, %v3022
      %v3026 = vadd.f32 %v3005, %v3022
      %v3027 = vadd.f32 %v3006, %v3022
      %v3028 = vadd.f32 %v3007, %v3022
      %v3029 = vadd.f32 %v3008, %v3022
      %v3030 = vadd.f32 %v3009, %v3022
      %v3031 = vadd.f32 %v3010, %v3022
      %v3032 = vadd.f32 %v3011, %v3022
      %v3033 = vadd.f32 %v3012, %v3022
      %v3034 = vadd.f32 %v3013, %v3022
      %v3035 = vadd.f32 %v3014, %v3022
      %v3036 = vadd.f32 %v3015, %v3022
      %v3037 = vadd.f32 %v3016, %v3022
      %v3038 = vadd.f32 %v3017, %v3022
      %v3039 = vmax.f32 %v3023, 0.0
      %v3040 = vmax.f32 %v3024, 0.0
      %v3041 = vmax.f32 %v3025, 0.0
      %v3042 = vmax.f32 %v3026, 0.0
      %v3043 = vmax.f32 %v3027, 0.0
      %v3044 = vmax.f32 %v3028, 0.0
      %v3045 = vmax.f32 %v3029, 0.0
      %v3046 = vmax.f32 %v3030, 0.0
      %v3047 = vmax.f32 %v3031, 0.0
      %v3048 = vmax.f32 %v3032, 0.0
      %v3049 = vmax.f32 %v3033, 0.0
      %v3050 = vmax.f32 %v3034, 0.0
      %v3051 = vmax.f32 %v3035, 0.0
      %v3052 = vmax.f32 %v3036, 0.0
      %v3053 = vmax.f32 %v3037, 0.0
      %v3054 = vmax.f32 %v3038, 0.0
      %3071 = vrot.lane.b32.xlu0 %v3039, 32
      %v3072 = vpop.permute.xlu0 %3071
      %3073 = vrot.lane.b32.xlu0 %v3040, 32
      %v3074 = vpop.permute.xlu0 %3073
      %3075 = vrot.lane.b32.xlu0 %v3041, 32
      %v3076 = vpop.permute.xlu0 %3075
      %3077 = vrot.lane.b32.xlu0 %v3042, 32
      %v3078 = vpop.permute.xlu0 %3077
      %3079 = vrot.lane.b32.xlu0 %v3043, 32
      %v3080 = vpop.permute.xlu0 %3079
      %3081 = vrot.lane.b32.xlu0 %v3044, 32
      %v3082 = vpop.permute.xlu0 %3081
      %3083 = vrot.lane.b32.xlu0 %v3045, 32
      %v3084 = vpop.permute.xlu0 %3083
      %3085 = vrot.lane.b32.xlu0 %v3046, 32
      %v3086 = vpop.permute.xlu0 %3085
      %3087 = vrot.lane.b32.xlu0 %v3047, 32
      %v3088 = vpop.permute.xlu0 %3087
      %3089 = vrot.lane.b32.xlu0 %v3048, 32
      %v3090 = vpop.permute.xlu0 %3089
      %3091 = vrot.lane.b32.xlu0 %v3049, 32
      %v3092 = vpop.permute.xlu0 %3091
      %3093 = vrot.lane.b32.xlu0 %v3050, 32
      %v3094 = vpop.permute.xlu0 %3093
      %3095 = vrot.lane.b32.xlu0 %v3051, 32
      %v3096 = vpop.permute.xlu0 %3095
      %3097 = vrot.lane.b32.xlu0 %v3052, 32
      %v3098 = vpop.permute.xlu0 %3097
      %3099 = vrot.lane.b32.xlu0 %v3053, 32
      %v3100 = vpop.permute.xlu0 %3099
      %3101 = vrot.lane.b32.xlu0 %v3054, 32
      %v3102 = vpop.permute.xlu0 %3101
      %v3119 = vsel %vm2108, %v2285, %v3072
      %v3120 = vsel %vm2108, %v2286, %v3074
      %v3121 = vsel %vm2108, %v2287, %v3076
      %v3122 = vsel %vm2108, %v2288, %v3078
      %v3123 = vsel %vm2108, %v2289, %v3080
      %v3124 = vsel %vm2108, %v2290, %v3082
      %v3125 = vsel %vm2108, %v2291, %v3084
      %v3126 = vsel %vm2108, %v2292, %v3086
      %v3127 = vsel %vm2108, %v2293, %v3088
      %v3128 = vsel %vm2108, %v2294, %v3090
      %v3129 = vsel %vm2108, %v2295, %v3092
      %v3130 = vsel %vm2108, %v2296, %v3094
      %v3131 = vsel %vm2108, %v2297, %v3096
      %v3132 = vsel %vm2108, %v2298, %v3098
      %v3133 = vsel %vm2108, %v2299, %v3100
      %v3134 = vsel %vm2108, %v2300, %v3102
      %3135 = vst.msk [vmem:[%s170] sm:$0xff] %vm279, %v3119
      %3136 = vst.msk [vmem:[%s170 + $0x8] sm:$0xff] %vm279, %v3120
      %3137 = vst.msk [vmem:[%s170 + $0x10] sm:$0xff] %vm279, %v3121
      %3138 = vst.msk [vmem:[%s170 + $0x18] sm:$0xff] %vm279, %v3122
      %3139 = vst.msk [vmem:[%s170 + $0x20] sm:$0xff] %vm279, %v3123
      %3140 = vst.msk [vmem:[%s170 + $0x28] sm:$0xff] %vm279, %v3124
      %3141 = vst.msk [vmem:[%s170 + $0x30] sm:$0xff] %vm279, %v3125
      %3142 = vst.msk [vmem:[%s170 + $0x38] sm:$0xff] %vm279, %v3126
      %3143 = vst.msk [vmem:[%s170 + $0x40] sm:$0xff] %vm279, %v3127
      %3144 = vst.msk [vmem:[%s170 + $0x48] sm:$0xff] %vm279, %v3128
      %3145 = vst.msk [vmem:[%s170 + $0x50] sm:$0xff] %vm279, %v3129
      %3146 = vst.msk [vmem:[%s170 + $0x58] sm:$0xff] %vm279, %v3130
      %3147 = vst.msk [vmem:[%s170 + $0x60] sm:$0xff] %vm279, %v3131
      %3148 = vst.msk [vmem:[%s170 + $0x68] sm:$0xff] %vm279, %v3132
      %3149 = vst.msk [vmem:[%s170 + $0x70] sm:$0xff] %vm279, %v3133
      %3150 = vst.msk [vmem:[%s170 + $0x78] sm:$0xff] %vm279, %v3134
      %p3151 = scmp.lt.s32.totalorder %s14, 1
      %s3152 = scalar_select %p3151, %s14, 1
      %s3153 = smul.addr %s3152, 16
      %s3154 = smul.addr %s3153, 8
      %s3155 = scalar_lea.vmem %s3, %s3154
      // Predicated region
      $region33: #{tpu_custom_call.1} parent=31 // pred_check
        %p3156 = pneg %p100
      $region34: #{tpu_custom_call.1} parent=31 // pred_check_branch
        %3158 = sbr.rel (%p3156) target = $region36
      $region35: #{tpu_custom_call.1} parent=31 // pred_region
        _
      $region36: #{tpu_custom_call.1} parent=31 // pred_fallthru
        _
    $region32: #{tpu_custom_call.1} parent=5 // pred_fallthru
      _
    %p3159 = scmp.le.s32.totalorder 2, %s9
    // Predicated region
    $region37: #{tpu_custom_call.1} parent=5 // pred_check
      %p3160 = pneg %p3159
    $region38: #{tpu_custom_call.1} parent=5 // pred_check_branch
      %3162 = sbr.rel (%p3160) target = $region40
    $region39: #{tpu_custom_call.1} parent=5 // pred_region
      %s3163 = ssub.s32 %s9, 2
      // Predicated region
      $region41: #{tpu_custom_call.1} parent=39 // pred_check
        %p3164 = pneg %p106
      $region42: #{tpu_custom_call.1} parent=39 // pred_check_branch
        %3166 = sbr.rel (%p3164) target = $region44
      $region43: #{tpu_custom_call.1} parent=39 // pred_region
        %p3167 = scmp.lt.s32.totalorder %s15, 1
        %s3168 = scalar_select %p3167, %s15, 1
        %s3169 = smul.addr %s3168, 16
        %s3170 = smul.addr %s3169, 8
        %s3171 = scalar_lea.vmem %s3, %s3170
      $region44: #{tpu_custom_call.1} parent=39 // pred_fallthru
        _
    $region40: #{tpu_custom_call.1} parent=5 // pred_fallthru
      _
  $region6: #{tpu_custom_call.1} parent=0 // loop_footer
    %s13 = sadd.s32 1, %s9
  $region7: #{tpu_custom_call.1} parent=0 // loop_footer_branch
    %8 = sbr.rel target = $region3
  $region8: #{tpu_custom_call.1} parent=0 // loop_exit
    _

</llo_original>
